<compile_context>
chip_gen: v7x
topology: tpu7x:2x2x1
jax: 0.10.0
libtpu: 0.0.40
codegen_flags: <defaults>
</compile_context>

<pallas_src>
import jax
import jax.numpy as jnp
from jax.experimental import pallas as pl
from jax.experimental.pallas import tpu as pltpu

FEAT_DIM = 512  # fixed by the module: nn.Linear(512, num_classes)


def _round_up(x: int, m: int) -> int:
    return ((x + m - 1) // m) * m


def _vmem_physical_bytes() -> int:
    """Best-effort physical VMEM per TensorCore for the current backend."""
    try:
        return int(pltpu.get_tpu_info().vmem_capacity_bytes)
    except Exception:
        pass
    try:
        kind = jax.devices()[0].device_kind.lower()
        if "v7" in kind:
            return 64 * 1024 * 1024
        if "v5" in kind or "v6" in kind:
            return 128 * 1024 * 1024
    except Exception:
        pass
    return 64 * 1024 * 1024  # conservative default (v7x = 64 MiB / TC)


def _num_cores_hint() -> int:
    try:
        if "v7" in jax.devices()[0].device_kind.lower():
            return 2
    except Exception:
        pass
    return 1


def _footprint(tm: int, tk: int, nc_pad: int, single_buffer_residents: bool = True) -> int:
    """Approximate VMEM bytes used by the kernel's buffers."""
    resid = 1 if single_buffer_residents else 2
    return (tm * tk * 2 * 2                      # x tile, bf16, double buffered
            + tk * FEAT_DIM * 2 * 2              # w_base tile, bf16, double buffered
            + FEAT_DIM * nc_pad * 2 * resid      # classifier weight (resident)
            + 8 * nc_pad * 4 * resid             # folded bias (sublane-padded)
            + tm * nc_pad * 4 * 2                # output tile, f32
            + tm * FEAT_DIM * 4)                 # f32 feature accumulator


# --------------------------------------------------------------------------
# Kernel
# --------------------------------------------------------------------------
def facenet_kernel(x_ref, wb_ref, wc_ref, bc_ref, out_ref, acc_ref):
    """One (M-tile, K-tile) grid step of the fused forward pass."""
    k = pl.program_id(1)

    @pl.when(k == 0)
    def _():
        acc_ref[...] = jnp.zeros_like(acc_ref)

    # Partial base projection: (tm, tk) bf16 @ (tk, 512) bf16 -> f32 accumulate.
    acc_ref[...] += jnp.dot(x_ref[...], wb_ref[...],
                            preferred_element_type=jnp.float32)

    # Finalize: classifier matmul + folded bias, only on the last K step.
    @pl.when(k == pl.num_programs(1) - 1)
    def _():
        feats = acc_ref[...].astype(wc_ref.dtype)                 # (tm, 512) bf16
        logits = jnp.dot(feats, wc_ref[...],
                         preferred_element_type=jnp.float32)      # (tm, nc_pad) f32
        out_ref[...] = logits + bc_ref[...]


# --------------------------------------------------------------------------
# One-time parameter preparation (padding / casts / bias folding)
# --------------------------------------------------------------------------
def prepare_facenet_params(w_base, b_base, w_cls, b_cls, *, vmem_budget=None):
    k_dim, feat_dim = w_base.shape
    assert feat_dim == FEAT_DIM
    num_classes = w_cls.shape[1]

    if vmem_budget is None:
        vmem_budget = int(_vmem_physical_bytes() * 0.75)   # 48 MiB v7x / 96 MiB v5e-v6e
    tile_budget = int(vmem_budget * 0.85)

    nc_pad = _round_up(num_classes, 128)

    # Pick the K tile once (it fixes the weight padding); assume worst-case tm.
    tm_max = 512
    tk = min(_round_up(k_dim, 128), 8192)
    while tk > 512 and _footprint(tm_max, tk, nc_pad) > tile_budget:
        tk = max(512, _round_up(tk // 2, 128))
    k_pad = _round_up(k_dim, tk)

    wb_p = jnp.zeros((k_pad, FEAT_DIM), jnp.bfloat16)
    wb_p = wb_p.at[:k_dim, :].set(w_base.astype(jnp.bfloat16))

    wc_p = jnp.zeros((FEAT_DIM, nc_pad), jnp.bfloat16)
    wc_p = wc_p.at[:, :num_classes].set(w_cls.astype(jnp.bfloat16))

    # Fold the base-projection bias into the classifier bias (f32, once):
    #   (x@wb + bb)@wc + bc == (x@wb)@wc + (bb@wc + bc)
    bc_eff = (b_base.reshape(1, FEAT_DIM).astype(jnp.float32)
              @ w_cls.astype(jnp.float32)
              + b_cls.reshape(1, num_classes).astype(jnp.float32))
    bc_p = jnp.zeros((1, nc_pad), jnp.float32).at[:, :num_classes].set(bc_eff)

    return dict(wb=wb_p, wc=wc_p, bc=bc_p,
                k_dim=k_dim, k_pad=k_pad, tk=tk,
                nc_pad=nc_pad, num_classes=num_classes,
                vmem_budget=vmem_budget, tile_budget=tile_budget)


# --------------------------------------------------------------------------
# pallas_call construction + per-call wrapper
# --------------------------------------------------------------------------
def _build_call(tm, tk, m_pad, k_pad, nc_pad, vmem_limit, single_buffer):
    resid_kw = dict(pipeline_mode=pl.Buffered(1)) if single_buffer else {}
    grid = (m_pad // tm, k_pad // tk)
    return pl.pallas_call(
        facenet_kernel,
        out_shape=jax.ShapeDtypeStruct((m_pad, nc_pad), jnp.float32),
        grid_spec=pltpu.PrefetchScalarGridSpec(
            num_scalar_prefetch=0,
            grid=grid,
            in_specs=[
                # x tile: varies over both grid axes (streamed).
                pl.BlockSpec((tm, tk), lambda i, k: (i, k)),
                # w_base tile: streamed over K (dominant HBM traffic).
                pl.BlockSpec((tk, FEAT_DIM), lambda i, k: (k, 0)),
                # constant-index residents: single-buffered when supported.
                pl.BlockSpec((FEAT_DIM, nc_pad), lambda i, k: (0, 0), **resid_kw),
                pl.BlockSpec((1, nc_pad), lambda i, k: (0, 0), **resid_kw),
            ],
            out_specs=pl.BlockSpec((tm, nc_pad), lambda i, k: (i, 0)),
            scratch_shapes=[pltpu.VMEM((tm, FEAT_DIM), jnp.float32)],
        ),
        compiler_params=pltpu.CompilerParams(
            dimension_semantics=("parallel", "arbitrary"),
            vmem_limit_bytes=vmem_limit,
        ),
    )


def facenet_classifier_apply(params, x, *, tm=None):
    n = x.shape[0]
    k_dim, k_pad, tk = params["k_dim"], params["k_pad"], params["tk"]
    nc_pad, num_classes = params["nc_pad"], params["num_classes"]

    if tm is None:
        # Largest M tile that fits the VMEM budget; for small batches the whole
        # batch sits in one M block so w_base is streamed from HBM exactly once.
        tm = min(_round_up(max(n, 1), 8), 512)
        while tm > 8 and _footprint(tm, tk, nc_pad) > params["tile_budget"]:
            tm = max(8, _round_up(tm // 2, 8))
    m_pad = _round_up(n, tm)

    # v7x megacore: make sure both TensorCores get an M block when batch allows.
    if _num_cores_hint() == 2 and m_pad // tm == 1 and tm >= 256:
        tm //= 2
        m_pad = _round_up(n, tm)

    x_flat = x.reshape(n, k_dim).astype(jnp.bfloat16)
    x_p = jnp.pad(x_flat, ((0, m_pad - n), (0, k_pad - k_dim)))

    def _run(single_buffer):
        call = _build_call(tm, tk, m_pad, k_pad, nc_pad,
                           params["vmem_budget"], single_buffer)
        out = call(x_p, params["wb"], params["wc"], params["bc"])
        return jax.block_until_ready(out)

    try:
        out = _run(True)
    except Exception:
        # Fallback if Buffered(1) is rejected by this jax/libtpu version.
        out = _run(False)

    # Strip batch / class padding.
    return out[:n, :num_classes]


# --------------------------------------------------------------------------
if __name__ == "__main__":
    key = jax.random.PRNGKey(0)
    k1, k2, k3, k4, k5 = jax.random.split(key, 5)

    # Small stand-in shapes (real model uses (batch, 3, 160, 160) face crops).
    batch, C, H, W = 2, 3, 16, 16
    num_classes = 10
    k_dim = C * H * W

    x = jax.random.normal(k1, (batch, C, H, W), dtype=jnp.float32)

    # Deterministic synthetic parameters (no checkpoint load).
    w_base = jax.random.normal(k2, (k_dim, FEAT_DIM), dtype=jnp.float32) * 0.02
    b_base = jax.random.normal(k3, (FEAT_DIM,), dtype=jnp.float32) * 0.02
    w_cls = jax.random.normal(k4, (FEAT_DIM, num_classes), dtype=jnp.float32) * 0.02
    b_cls = jax.random.normal(k5, (num_classes,), dtype=jnp.float32) * 0.02

    params = prepare_facenet_params(w_base, b_base, w_cls, b_cls)
    logits = facenet_classifier_apply(params, x)
    jax.block_until_ready(logits)

    # Pure-JAX reference with the same bf16 matmul-input casts and folded bias.
    xb = x.reshape(batch, -1).astype(jnp.bfloat16).astype(jnp.float32)
    wbb = w_base.astype(jnp.bfloat16).astype(jnp.float32)
    wcb = w_cls.astype(jnp.bfloat16).astype(jnp.float32)
    acc = xb @ wbb
    bc_eff = b_base.reshape(1, -1) @ w_cls + b_cls.reshape(1, -1)
    logits_ref = acc.astype(jnp.bfloat16).astype(jnp.float32) @ wcb + bc_eff

    assert logits.shape == (batch, num_classes)
    max_err = float(jnp.max(jnp.abs(logits - logits_ref)))
    assert jnp.allclose(logits, logits_ref, atol=5e-3, rtol=5e-3), max_err

    print("KERNEL_OK")
</pallas_src>

<mosaic_0001>
module attributes {stable_mosaic.version = 11 : i64} {
  func.func @facenet_kernel(%arg0: i32, %arg1: i32, %arg2: memref<8x768xbf16, #tpu.memory_space<vmem>>, %arg3: memref<768x512xbf16, #tpu.memory_space<vmem>>, %arg4: memref<512x128xbf16, #tpu.memory_space<vmem>>, %arg5: memref<1x128xf32, #tpu.memory_space<vmem>>, %arg6: memref<8x128xf32, #tpu.memory_space<vmem>>, %arg7: memref<8x512xf32, #tpu.memory_space<vmem>>) attributes {dimension_semantics = [#tpu.dimension_semantics<parallel>, #tpu.dimension_semantics<arbitrary>], iteration_bounds = array<i64: 1, 1>, scalar_prefetch = 0 : i64, scratch_operands = 1 : i64, tpu.core_type = #tpu.core_type<tc>, window_params = [{transform_indices = @transform_0, window_bounds = array<i64: 8, 768>}, {transform_indices = @transform_1, window_bounds = array<i64: 768, 512>}, {pipeline_mode = #tpu.pipeline_mode<synchronous>, transform_indices = @transform_2, window_bounds = array<i64: 512, 128>}, {pipeline_mode = #tpu.pipeline_mode<synchronous>, transform_indices = @transform_3, window_bounds = array<i64: 1, 128>}, {transform_indices = @transform_4, window_bounds = array<i64: 8, 128>}]} {
    %c0_i32 = arith.constant 0 : i32
    %0 = arith.cmpi eq, %arg1, %c0_i32 : i32
    %1 = arith.extui %0 : i1 to i32
    %c0_i32_0 = arith.constant 0 : i32
    %2 = arith.cmpi ne, %1, %c0_i32_0 : i32
    scf.if %2 {
      %cst_10 = arith.constant 0.000000e+00 : f32
      %12 = vector.broadcast %cst_10 : f32 to vector<8x512xf32>
      %c0_11 = arith.constant 0 : index
      %c0_12 = arith.constant 0 : index
      %13 = vector.load %arg7[%c0_11, %c0_12] : memref<8x512xf32, #tpu.memory_space<vmem>>, vector<8x512xf32>
      tpu.vector_store %arg7[%c0_11, %c0_12], %12 {strides = array<i32>} : memref<8x512xf32, #tpu.memory_space<vmem>>, vector<8x512xf32>,
    } else {
    }
    %c0 = arith.constant 0 : index
    %c0_1 = arith.constant 0 : index
    %3 = vector.load %arg7[%c0, %c0_1] : memref<8x512xf32, #tpu.memory_space<vmem>>, vector<8x512xf32>
    %c0_2 = arith.constant 0 : index
    %c0_3 = arith.constant 0 : index
    %4 = vector.load %arg2[%c0_2, %c0_3] : memref<8x768xbf16, #tpu.memory_space<vmem>>, vector<8x768xbf16>
    %c0_4 = arith.constant 0 : index
    %c0_5 = arith.constant 0 : index
    %5 = vector.load %arg3[%c0_4, %c0_5] : memref<768x512xbf16, #tpu.memory_space<vmem>>, vector<768x512xbf16>
    %cst = arith.constant dense<0.000000e+00> : vector<8x512xf32>
    %6 = tpu.matmul %4, %5, %cst {dimension_numbers = #tpu.dot_dimension_numbers<[1], [0], [0], [1], [0, 0, 1, 1], [], []>} : vector<8x768xbf16>, vector<768x512xbf16>, vector<8x512xf32> -> vector<8x512xf32>
    %7 = arith.addf %3, %6 : vector<8x512xf32>
    %c0_6 = arith.constant 0 : index
    %c0_7 = arith.constant 0 : index
    %8 = vector.load %arg7[%c0_6, %c0_7] : memref<8x512xf32, #tpu.memory_space<vmem>>, vector<8x512xf32>
    tpu.vector_store %arg7[%c0_6, %c0_7], %7 {strides = array<i32>} : memref<8x512xf32, #tpu.memory_space<vmem>>, vector<8x512xf32>,
    %c0_i32_8 = arith.constant 0 : i32
    %9 = arith.cmpi eq, %arg1, %c0_i32_8 : i32
    %10 = arith.extui %9 : i1 to i32
    %c0_i32_9 = arith.constant 0 : i32
    %11 = arith.cmpi ne, %10, %c0_i32_9 : i32
    scf.if %11 {
      %c0_10 = arith.constant 0 : index
      %c0_11 = arith.constant 0 : index
      %12 = vector.load %arg7[%c0_10, %c0_11] : memref<8x512xf32, #tpu.memory_space<vmem>>, vector<8x512xf32>
      %13 = arith.truncf %12 : vector<8x512xf32> to vector<8x512xbf16>
      %c0_12 = arith.constant 0 : index
      %c0_13 = arith.constant 0 : index
      %14 = vector.load %arg4[%c0_12, %c0_13] : memref<512x128xbf16, #tpu.memory_space<vmem>>, vector<512x128xbf16>
      %cst_14 = arith.constant dense<0.000000e+00> : vector<8x128xf32>
      %15 = tpu.matmul %13, %14, %cst_14 {dimension_numbers = #tpu.dot_dimension_numbers<[1], [0], [0], [1], [0, 0, 1, 1], [], []>} : vector<8x512xbf16>, vector<512x128xbf16>, vector<8x128xf32> -> vector<8x128xf32>
      %c0_15 = arith.constant 0 : index
      %c0_16 = arith.constant 0 : index
      %16 = vector.load %arg5[%c0_15, %c0_16] : memref<1x128xf32, #tpu.memory_space<vmem>>, vector<1x128xf32>
      %17 = vector.broadcast %16 : vector<1x128xf32> to vector<8x128xf32>
      %18 = arith.addf %15, %17 : vector<8x128xf32>
      %c0_17 = arith.constant 0 : index
      %c0_18 = arith.constant 0 : index
      %19 = vector.load %arg6[%c0_17, %c0_18] : memref<8x128xf32, #tpu.memory_space<vmem>>, vector<8x128xf32>
      tpu.vector_store %arg6[%c0_17, %c0_18], %18 {strides = array<i32>} : memref<8x128xf32, #tpu.memory_space<vmem>>, vector<8x128xf32>,
    } else {
    }
    return
  }
  func.func @transform_0(%arg0: i32, %arg1: i32) -> (i32, i32) {
    %c0_i32 = arith.constant 0 : i32
    return %arg0, %arg1 : i32, i32
  }
  func.func @transform_1(%arg0: i32, %arg1: i32) -> (i32, i32) {
    %c0_i32 = arith.constant 0 : i32
    %c0_i32_0 = arith.constant 0 : i32
    return %arg1, %c0_i32 : i32, i32
  }
  func.func @transform_2(%arg0: i32, %arg1: i32) -> (i32, i32) {
    %c0_i32 = arith.constant 0 : i32
    %c0_i32_0 = arith.constant 0 : i32
    %c0_i32_1 = arith.constant 0 : i32
    return %c0_i32, %c0_i32_0 : i32, i32
  }
  func.func @transform_3(%arg0: i32, %arg1: i32) -> (i32, i32) {
    %c0_i32 = arith.constant 0 : i32
    %c0_i32_0 = arith.constant 0 : i32
    %c0_i32_1 = arith.constant 0 : i32
    return %c0_i32, %c0_i32_0 : i32, i32
  }
  func.func @transform_4(%arg0: i32, %arg1: i32) -> (i32, i32) {
    %c0_i32 = arith.constant 0 : i32
    %c0_i32_0 = arith.constant 0 : i32
    return %arg0, %c0_i32 : i32, i32
  }
}

module attributes {stable_mosaic.version = 11 : i64} {
  func.func @facenet_kernel(%arg0: i32, %arg1: i32, %arg2: memref<8x768xbf16, #tpu.memory_space<vmem>>, %arg3: memref<768x512xbf16, #tpu.memory_space<vmem>>, %arg4: memref<512x128xbf16, #tpu.memory_space<vmem>>, %arg5: memref<1x128xf32, #tpu.memory_space<vmem>>, %arg6: memref<8x128xf32, #tpu.memory_space<vmem>>, %arg7: memref<8x512xf32, #tpu.memory_space<vmem>>) attributes {dimension_semantics = [#tpu.dimension_semantics<parallel>, #tpu.dimension_semantics<arbitrary>], iteration_bounds = array<i64: 1, 1>, scalar_prefetch = 0 : i64, scratch_operands = 1 : i64, tpu.core_type = #tpu.core_type<tc>, window_params = [{transform_indices = @transform_0, window_bounds = array<i64: 8, 768>}, {transform_indices = @transform_1, window_bounds = array<i64: 768, 512>}, {pipeline_mode = #tpu.pipeline_mode<synchronous>, transform_indices = @transform_2, window_bounds = array<i64: 512, 128>}, {pipeline_mode = #tpu.pipeline_mode<synchronous>, transform_indices = @transform_3, window_bounds = array<i64: 1, 128>}, {transform_indices = @transform_4, window_bounds = array<i64: 8, 128>}]} {
    %c0_i32 = arith.constant 0 : i32
    %0 = arith.cmpi eq, %arg1, %c0_i32 : i32
    %1 = arith.extui %0 : i1 to i32
    %c0_i32_0 = arith.constant 0 : i32
    %2 = arith.cmpi ne, %1, %c0_i32_0 : i32
    scf.if %2 {
      %cst_10 = arith.constant 0.000000e+00 : f32
      %12 = vector.broadcast %cst_10 : f32 to vector<8x512xf32>
      %c0_11 = arith.constant 0 : index
      %c0_12 = arith.constant 0 : index
      %13 = vector.load %arg7[%c0_11, %c0_12] : memref<8x512xf32, #tpu.memory_space<vmem>>, vector<8x512xf32>
      tpu.vector_store %arg7[%c0_11, %c0_12], %12 {strides = array<i32>} : memref<8x512xf32, #tpu.memory_space<vmem>>, vector<8x512xf32>,
    } else {
    }
    %c0 = arith.constant 0 : index
    %c0_1 = arith.constant 0 : index
    %3 = vector.load %arg7[%c0, %c0_1] : memref<8x512xf32, #tpu.memory_space<vmem>>, vector<8x512xf32>
    %c0_2 = arith.constant 0 : index
    %c0_3 = arith.constant 0 : index
    %4 = vector.load %arg2[%c0_2, %c0_3] : memref<8x768xbf16, #tpu.memory_space<vmem>>, vector<8x768xbf16>
    %c0_4 = arith.constant 0 : index
    %c0_5 = arith.constant 0 : index
    %5 = vector.load %arg3[%c0_4, %c0_5] : memref<768x512xbf16, #tpu.memory_space<vmem>>, vector<768x512xbf16>
    %cst = arith.constant dense<0.000000e+00> : vector<8x512xf32>
    %6 = tpu.matmul %4, %5, %cst {dimension_numbers = #tpu.dot_dimension_numbers<[1], [0], [0], [1], [0, 0, 1, 1], [], []>} : vector<8x768xbf16>, vector<768x512xbf16>, vector<8x512xf32> -> vector<8x512xf32>
    %7 = arith.addf %3, %6 : vector<8x512xf32>
    %c0_6 = arith.constant 0 : index
    %c0_7 = arith.constant 0 : index
    %8 = vector.load %arg7[%c0_6, %c0_7] : memref<8x512xf32, #tpu.memory_space<vmem>>, vector<8x512xf32>
    tpu.vector_store %arg7[%c0_6, %c0_7], %7 {strides = array<i32>} : memref<8x512xf32, #tpu.memory_space<vmem>>, vector<8x512xf32>,
    %c0_i32_8 = arith.constant 0 : i32
    %9 = arith.cmpi eq, %arg1, %c0_i32_8 : i32
    %10 = arith.extui %9 : i1 to i32
    %c0_i32_9 = arith.constant 0 : i32
    %11 = arith.cmpi ne, %10, %c0_i32_9 : i32
    scf.if %11 {
      %c0_10 = arith.constant 0 : index
      %c0_11 = arith.constant 0 : index
      %12 = vector.load %arg7[%c0_10, %c0_11] : memref<8x512xf32, #tpu.memory_space<vmem>>, vector<8x512xf32>
      %13 = arith.truncf %12 : vector<8x512xf32> to vector<8x512xbf16>
      %c0_12 = arith.constant 0 : index
      %c0_13 = arith.constant 0 : index
      %14 = vector.load %arg4[%c0_12, %c0_13] : memref<512x128xbf16, #tpu.memory_space<vmem>>, vector<512x128xbf16>
      %cst_14 = arith.constant dense<0.000000e+00> : vector<8x128xf32>
      %15 = tpu.matmul %13, %14, %cst_14 {dimension_numbers = #tpu.dot_dimension_numbers<[1], [0], [0], [1], [0, 0, 1, 1], [], []>} : vector<8x512xbf16>, vector<512x128xbf16>, vector<8x128xf32> -> vector<8x128xf32>
      %c0_15 = arith.constant 0 : index
      %c0_16 = arith.constant 0 : index
      %16 = vector.load %arg5[%c0_15, %c0_16] : memref<1x128xf32, #tpu.memory_space<vmem>>, vector<1x128xf32>
      %17 = vector.broadcast %16 : vector<1x128xf32> to vector<8x128xf32>
      %18 = arith.addf %15, %17 : vector<8x128xf32>
      %c0_17 = arith.constant 0 : index
      %c0_18 = arith.constant 0 : index
      %19 = vector.load %arg6[%c0_17, %c0_18] : memref<8x128xf32, #tpu.memory_space<vmem>>, vector<8x128xf32>
      tpu.vector_store %arg6[%c0_17, %c0_18], %18 {strides = array<i32>} : memref<8x128xf32, #tpu.memory_space<vmem>>, vector<8x128xf32>,
    } else {
    }
    return
  }
  func.func @transform_0(%arg0: i32, %arg1: i32) -> (i32, i32) {
    %c0_i32 = arith.constant 0 : i32
    return %arg0, %arg1 : i32, i32
  }
  func.func @transform_1(%arg0: i32, %arg1: i32) -> (i32, i32) {
    %c0_i32 = arith.constant 0 : i32
    %c0_i32_0 = arith.constant 0 : i32
    return %arg1, %c0_i32 : i32, i32
  }
  func.func @transform_2(%arg0: i32, %arg1: i32) -> (i32, i32) {
    %c0_i32 = arith.constant 0 : i32
    %c0_i32_0 = arith.constant 0 : i32
    %c0_i32_1 = arith.constant 0 : i32
    return %c0_i32, %c0_i32_0 : i32, i32
  }
  func.func @transform_3(%arg0: i32, %arg1: i32) -> (i32, i32) {
    %c0_i32 = arith.constant 0 : i32
    %c0_i32_0 = arith.constant 0 : i32
    %c0_i32_1 = arith.constant 0 : i32
    return %c0_i32, %c0_i32_0 : i32, i32
  }
  func.func @transform_4(%arg0: i32, %arg1: i32) -> (i32, i32) {
    %c0_i32 = arith.constant 0 : i32
    %c0_i32_0 = arith.constant 0 : i32
    return %arg0, %c0_i32 : i32, i32
  }
}

</mosaic_0001>

<llo_original>
// kernel: tpu_custom_call.1
$region0: #{tpu_custom_call.1}
  #allocation0 [shape = 'u32[]', space=smem, size = 0x4, offset = 0x4, fixed_abs, tag = 'smem constant byte address 0x4 - core index']
  #allocation1 [shape = 'u32[144,128]{1,0:T(1,128)}', space=vmem, size = 0x12000, scoped, tag = 'internal scratch']
  #allocation2 [shape = 'f32[8,512]{1,0:T(8,128)}', space=vmem, size = 0x4000, scoped, tag = 'scratch operand']
  %s0 = inlined_call_operand.hbm [shape: bf16[8,768], index: 0, kind: input, shape index: {}]
  %s1 = inlined_call_operand.hbm [shape: bf16[768,512], index: 1, kind: input, shape index: {}]
  %s2 = inlined_call_operand.hbm [shape: bf16[512,128], index: 2, kind: input, shape index: {}]
  %s3 = inlined_call_operand.vmem [shape: f32[1,128], index: 3, kind: input, shape index: {}]
  %s4 = inlined_call_operand.hbm [shape: f32[8,128], index: 4, kind: output, shape index: {}]
  %s5 = sld [smem:[#allocation0]]
  $region46: #{tpu_custom_call.1} parent=0
    _
  %s7 = ssub.s32 1, %s5
  %s8 = scalar_select 0, %s7, %s5
  $region1: #{tpu_custom_call.1} parent=0
    #allocation3 [shape = 'u8[12288]{0}', space=vmem, size = 0x3000, scoped, tag = 'input window, operand 0, single buffered']
    #allocation4 [shape = 's32[1]{0}', space=sflag, size = 0x4, scoped, tag = 'scoped memory for tpu_custom_call.1']
    #allocation5 [shape = 's32[1]{0}', space=sflag, size = 0x4, scoped, tag = 'scoped memory for tpu_custom_call.1']
    #allocation6 [shape = 'u8[786432]{0}', space=vmem, size = 0xc0000, scoped, tag = 'input window, operand 1, single buffered']
    #allocation7 [shape = 's32[1]{0}', space=sflag, size = 0x4, scoped, tag = 'scoped memory for tpu_custom_call.1']
    #allocation8 [shape = 'u8[131072]{0}', space=vmem, size = 0x20000, scoped, tag = 'input window, operand 2, single buffered']
    #allocation9 [shape = 'u8[4096]{0}', space=vmem, size = 0x1000, scoped, tag = 'output window, operand 0, single buffered']
    %9 = vsyncpa [#allocation4], 0
    %10 = vsyncpa [#allocation7], 0
    %11 = vsyncpa [#allocation5], 0
    // Predicated region
    $region2: #{tpu_custom_call.1} parent=1 // pred_check
      _
    $region3: #{tpu_custom_call.1} parent=1 // pred_check_branch
      %13 = sbr.rel (0) target = $region5
    $region4: #{tpu_custom_call.1} parent=1 // pred_region
      %s15 = ssub.s32 384, 384
      %16 = vsyncadd [#allocation4], %s15
      %s18 = sshll.u32 [#allocation3], 4
      %s19 = int_to_ptr.vmem [resolvable:$true] %s18
      %21 = dma.hbm_to_vmem [thread:$0]  %s0, 384, %s19, [#allocation4]
    $region5: #{tpu_custom_call.1} parent=1 // pred_fallthru
      _
    // Predicated region
    $region6: #{tpu_custom_call.1} parent=1 // pred_check
      _
    $region7: #{tpu_custom_call.1} parent=1 // pred_check_branch
      %23 = sbr.rel (0) target = $region9
    $region8: #{tpu_custom_call.1} parent=1 // pred_region
      %s25 = ssub.s32 24576, 24576
      %26 = vsyncadd [#allocation7], %s25
      %s27 = sshll.u32 [#allocation6], 4
      %s28 = int_to_ptr.vmem [resolvable:$true] %s27
      %33 = dma.hbm_to_vmem [thread:$0]  %s1, 24576, %s28, [#allocation7], 256, 256, 16
    $region9: #{tpu_custom_call.1} parent=1 // pred_fallthru
      _
    // Predicated region
    $region10: #{tpu_custom_call.1} parent=1 // pred_check
      _
    $region11: #{tpu_custom_call.1} parent=1 // pred_check_branch
      %35 = sbr.rel (0) target = $region13
    $region12: #{tpu_custom_call.1} parent=1 // pred_region
      %s37 = ssub.s32 4096, 4096
      %38 = vsyncadd [#allocation7], %s37
      %s39 = sshll.u32 [#allocation8], 4
      %s40 = int_to_ptr.vmem [resolvable:$true] %s39
      %45 = dma.hbm_to_vmem [thread:$0]  %s2, 4096, %s40, [#allocation7], 64, 64, 4
    $region13: #{tpu_custom_call.1} parent=1 // pred_fallthru
      _
    // Predicated region
    $region14: #{tpu_custom_call.1} parent=1 // pred_check
      _
    $region15: #{tpu_custom_call.1} parent=1 // pred_check_branch
      %47 = sbr.rel (0) target = $region17
    $region16: #{tpu_custom_call.1} parent=1 // pred_region
      _
    $region17: #{tpu_custom_call.1} parent=1 // pred_fallthru
      _
    // Predicated region
    $region18: #{tpu_custom_call.1} parent=1 // pred_check
      _
    $region19: #{tpu_custom_call.1} parent=1 // pred_check_branch
      %49 = sbr.rel (0) target = $region21
    $region20: #{tpu_custom_call.1} parent=1 // pred_region
      %50 = dma.done [#allocation4], 384
    $region21: #{tpu_custom_call.1} parent=1 // pred_fallthru
      _
    // Predicated region
    $region22: #{tpu_custom_call.1} parent=1 // pred_check
      _
    $region23: #{tpu_custom_call.1} parent=1 // pred_check_branch
      %52 = sbr.rel (0) target = $region25
    $region24: #{tpu_custom_call.1} parent=1 // pred_region
      %53 = dma.done [#allocation7], 24576
    $region25: #{tpu_custom_call.1} parent=1 // pred_fallthru
      _
    // Predicated region
    $region26: #{tpu_custom_call.1} parent=1 // pred_check
      _
    $region27: #{tpu_custom_call.1} parent=1 // pred_check_branch
      %55 = sbr.rel (0) target = $region29
    $region28: #{tpu_custom_call.1} parent=1 // pred_region
      %56 = dma.done [#allocation7], 4096
    $region29: #{tpu_custom_call.1} parent=1 // pred_fallthru
      _
    %p58 = scmp.eq.s32.totalorder 0, 0
    // Predicated region
    $region30: #{tpu_custom_call.1} parent=1 // pred_check
      %p59 = pneg %p58
    $region31: #{tpu_custom_call.1} parent=1 // pred_check_branch
      %61 = sbr.rel (%p59) target = $region33
    $region32: #{tpu_custom_call.1} parent=1 // pred_region
      %62 = vst [vmem:[#allocation2] sm:$0xff] 0.0
      %63 = vst [vmem:[#allocation2 + $0x8] sm:$0xff] 0.0
      %64 = vst [vmem:[#allocation2 + $0x10] sm:$0xff] 0.0
      %65 = vst [vmem:[#allocation2 + $0x18] sm:$0xff] 0.0
    $region33: #{tpu_custom_call.1} parent=1 // pred_fallthru
      _
    %v66 = vld [vmem:[#allocation2] sm:$0xff]
    %v67 = vld [vmem:[#allocation2 + $0x8] sm:$0xff]
    %v68 = vld [vmem:[#allocation2 + $0x10] sm:$0xff]
    %v69 = vld [vmem:[#allocation2 + $0x18] sm:$0xff]
    %v70 = vld [vmem:[#allocation3] sm:$0xff]
    %v71 = vld [vmem:[#allocation3 + $0x8] sm:$0xff]
    %v72 = vld [vmem:[#allocation3 + $0x10] sm:$0xff]
    %v73 = vld [vmem:[#allocation6] sm:$0xff]
    %v74 = vld [vmem:[#allocation6 + $0x8] sm:$0xff]
    %v75 = vld [vmem:[#allocation6 + $0x10] sm:$0xff]
    %v76 = vld [vmem:[#allocation6 + $0x18] sm:$0xff]
    %v77 = vld [vmem:[#allocation6 + $0x20] sm:$0xff]
    %v78 = vld [vmem:[#allocation6 + $0x28] sm:$0xff]
    %v79 = vld [vmem:[#allocation6 + $0x30] sm:$0xff]
    %v80 = vld [vmem:[#allocation6 + $0x38] sm:$0xff]
    %v81 = vld [vmem:[#allocation6 + $0x40] sm:$0xff]
    %v82 = vld [vmem:[#allocation6 + $0x48] sm:$0xff]
    %v83 = vld [vmem:[#allocation6 + $0x50] sm:$0xff]
    %v84 = vld [vmem:[#allocation6 + $0x58] sm:$0xff]
    %v85 = vld [vmem:[#allocation6 + $0x60] sm:$0xff]
    %v86 = vld [vmem:[#allocation6 + $0x68] sm:$0xff]
    %v87 = vld [vmem:[#allocation6 + $0x70] sm:$0xff]
    %v88 = vld [vmem:[#allocation6 + $0x78] sm:$0xff]
    %v89 = vld [vmem:[#allocation6 + $0x80] sm:$0xff]
    %v90 = vld [vmem:[#allocation6 + $0x88] sm:$0xff]
    %v91 = vld [vmem:[#allocation6 + $0x90] sm:$0xff]
    %v92 = vld [vmem:[#allocation6 + $0x98] sm:$0xff]
    %v93 = vld [vmem:[#allocation6 + $0xa0] sm:$0xff]
    %v94 = vld [vmem:[#allocation6 + $0xa8] sm:$0xff]
    %v95 = vld [vmem:[#allocation6 + $0xb0] sm:$0xff]
    %v96 = vld [vmem:[#allocation6 + $0xb8] sm:$0xff]
    %v97 = vld [vmem:[#allocation6 + $0xc0] sm:$0xff]
    %v98 = vld [vmem:[#allocation6 + $0xc8] sm:$0xff]
    %v99 = vld [vmem:[#allocation6 + $0xd0] sm:$0xff]
    %v100 = vld [vmem:[#allocation6 + $0xd8] sm:$0xff]
    %v101 = vld [vmem:[#allocation6 + $0xe0] sm:$0xff]
    %v102 = vld [vmem:[#allocation6 + $0xe8] sm:$0xff]
    %v103 = vld [vmem:[#allocation6 + $0xf0] sm:$0xff]
    %v104 = vld [vmem:[#allocation6 + $0xf8] sm:$0xff]
    %v105 = vld [vmem:[#allocation6 + $0x100] sm:$0xff]
    %v106 = vld [vmem:[#allocation6 + $0x108] sm:$0xff]
    %v107 = vld [vmem:[#allocation6 + $0x110] sm:$0xff]
    %v108 = vld [vmem:[#allocation6 + $0x118] sm:$0xff]
    %v109 = vld [vmem:[#allocation6 + $0x120] sm:$0xff]
    %v110 = vld [vmem:[#allocation6 + $0x128] sm:$0xff]
    %v111 = vld [vmem:[#allocation6 + $0x130] sm:$0xff]
    %v112 = vld [vmem:[#allocation6 + $0x138] sm:$0xff]
    %v113 = vld [vmem:[#allocation6 + $0x140] sm:$0xff]
    %v114 = vld [vmem:[#allocation6 + $0x148] sm:$0xff]
    %v115 = vld [vmem:[#allocation6 + $0x150] sm:$0xff]
    %v116 = vld [vmem:[#allocation6 + $0x158] sm:$0xff]
    %v117 = vld [vmem:[#allocation6 + $0x160] sm:$0xff]
    %v118 = vld [vmem:[#allocation6 + $0x168] sm:$0xff]
    %v119 = vld [vmem:[#allocation6 + $0x170] sm:$0xff]
    %v120 = vld [vmem:[#allocation6 + $0x178] sm:$0xff]
    %v121 = vld [vmem:[#allocation6 + $0x180] sm:$0xff]
    %v122 = vld [vmem:[#allocation6 + $0x188] sm:$0xff]
    %v123 = vld [vmem:[#allocation6 + $0x190] sm:$0xff]
    %v124 = vld [vmem:[#allocation6 + $0x198] sm:$0xff]
    %v125 = vld [vmem:[#allocation6 + $0x1a0] sm:$0xff]
    %v126 = vld [vmem:[#allocation6 + $0x1a8] sm:$0xff]
    %v127 = vld [vmem:[#allocation6 + $0x1b0] sm:$0xff]
    %v128 = vld [vmem:[#allocation6 + $0x1b8] sm:$0xff]
    %v129 = vld [vmem:[#allocation6 + $0x1c0] sm:$0xff]
    %v130 = vld [vmem:[#allocation6 + $0x1c8] sm:$0xff]
    %v131 = vld [vmem:[#allocation6 + $0x1d0] sm:$0xff]
    %v132 = vld [vmem:[#allocation6 + $0x1d8] sm:$0xff]
    %v133 = vld [vmem:[#allocation6 + $0x1e0] sm:$0xff]
    %v134 = vld [vmem:[#allocation6 + $0x1e8] sm:$0xff]
    %v135 = vld [vmem:[#allocation6 + $0x1f0] sm:$0xff]
    %v136 = vld [vmem:[#allocation6 + $0x1f8] sm:$0xff]
    %v137 = vld [vmem:[#allocation6 + $0x200] sm:$0xff]
    %v138 = vld [vmem:[#allocation6 + $0x208] sm:$0xff]
    %v139 = vld [vmem:[#allocation6 + $0x210] sm:$0xff]
    %v140 = vld [vmem:[#allocation6 + $0x218] sm:$0xff]
    %v141 = vld [vmem:[#allocation6 + $0x220] sm:$0xff]
    %v142 = vld [vmem:[#allocation6 + $0x228] sm:$0xff]
    %v143 = vld [vmem:[#allocation6 + $0x230] sm:$0xff]
    %v144 = vld [vmem:[#allocation6 + $0x238] sm:$0xff]
    %v145 = vld [vmem:[#allocation6 + $0x240] sm:$0xff]
    %v146 = vld [vmem:[#allocation6 + $0x248] sm:$0xff]
    %v147 = vld [vmem:[#allocation6 + $0x250] sm:$0xff]
    %v148 = vld [vmem:[#allocation6 + $0x258] sm:$0xff]
    %v149 = vld [vmem:[#allocation6 + $0x260] sm:$0xff]
    %v150 = vld [vmem:[#allocation6 + $0x268] sm:$0xff]
    %v151 = vld [vmem:[#allocation6 + $0x270] sm:$0xff]
    %v152 = vld [vmem:[#allocation6 + $0x278] sm:$0xff]
    %v153 = vld [vmem:[#allocation6 + $0x280] sm:$0xff]
    %v154 = vld [vmem:[#allocation6 + $0x288] sm:$0xff]
    %v155 = vld [vmem:[#allocation6 + $0x290] sm:$0xff]
    %v156 = vld [vmem:[#allocation6 + $0x298] sm:$0xff]
    %v157 = vld [vmem:[#allocation6 + $0x2a0] sm:$0xff]
    %v158 = vld [vmem:[#allocation6 + $0x2a8] sm:$0xff]
    %v159 = vld [vmem:[#allocation6 + $0x2b0] sm:$0xff]
    %v160 = vld [vmem:[#allocation6 + $0x2b8] sm:$0xff]
    %v161 = vld [vmem:[#allocation6 + $0x2c0] sm:$0xff]
    %v162 = vld [vmem:[#allocation6 + $0x2c8] sm:$0xff]
    %v163 = vld [vmem:[#allocation6 + $0x2d0] sm:$0xff]
    %v164 = vld [vmem:[#allocation6 + $0x2d8] sm:$0xff]
    %v165 = vld [vmem:[#allocation6 + $0x2e0] sm:$0xff]
    %v166 = vld [vmem:[#allocation6 + $0x2e8] sm:$0xff]
    %v167 = vld [vmem:[#allocation6 + $0x2f0] sm:$0xff]
    %v168 = vld [vmem:[#allocation6 + $0x2f8] sm:$0xff]
    %v169 = vld [vmem:[#allocation6 + $0x300] sm:$0xff]
    %v170 = vld [vmem:[#allocation6 + $0x308] sm:$0xff]
    %v171 = vld [vmem:[#allocation6 + $0x310] sm:$0xff]
    %v172 = vld [vmem:[#allocation6 + $0x318] sm:$0xff]
    %v173 = vld [vmem:[#allocation6 + $0x320] sm:$0xff]
    %v174 = vld [vmem:[#allocation6 + $0x328] sm:$0xff]
    %v175 = vld [vmem:[#allocation6 + $0x330] sm:$0xff]
    %v176 = vld [vmem:[#allocation6 + $0x338] sm:$0xff]
    %v177 = vld [vmem:[#allocation6 + $0x340] sm:$0xff]
    %v178 = vld [vmem:[#allocation6 + $0x348] sm:$0xff]
    %v179 = vld [vmem:[#allocation6 + $0x350] sm:$0xff]
    %v180 = vld [vmem:[#allocation6 + $0x358] sm:$0xff]
    %v181 = vld [vmem:[#allocation6 + $0x360] sm:$0xff]
    %v182 = vld [vmem:[#allocation6 + $0x368] sm:$0xff]
    %v183 = vld [vmem:[#allocation6 + $0x370] sm:$0xff]
    %v184 = vld [vmem:[#allocation6 + $0x378] sm:$0xff]
    %v185 = vld [vmem:[#allocation6 + $0x380] sm:$0xff]
    %v186 = vld [vmem:[#allocation6 + $0x388] sm:$0xff]
    %v187 = vld [vmem:[#allocation6 + $0x390] sm:$0xff]
    %v188 = vld [vmem:[#allocation6 + $0x398] sm:$0xff]
    %v189 = vld [vmem:[#allocation6 + $0x3a0] sm:$0xff]
    %v190 = vld [vmem:[#allocation6 + $0x3a8] sm:$0xff]
    %v191 = vld [vmem:[#allocation6 + $0x3b0] sm:$0xff]
    %v192 = vld [vmem:[#allocation6 + $0x3b8] sm:$0xff]
    %v193 = vld [vmem:[#allocation6 + $0x3c0] sm:$0xff]
    %v194 = vld [vmem:[#allocation6 + $0x3c8] sm:$0xff]
    %v195 = vld [vmem:[#allocation6 + $0x3d0] sm:$0xff]
    %v196 = vld [vmem:[#allocation6 + $0x3d8] sm:$0xff]
    %v197 = vld [vmem:[#allocation6 + $0x3e0] sm:$0xff]
    %v198 = vld [vmem:[#allocation6 + $0x3e8] sm:$0xff]
    %v199 = vld [vmem:[#allocation6 + $0x3f0] sm:$0xff]
    %v200 = vld [vmem:[#allocation6 + $0x3f8] sm:$0xff]
    %v201 = vld [vmem:[#allocation6 + $0x400] sm:$0xff]
    %v202 = vld [vmem:[#allocation6 + $0x408] sm:$0xff]
    %v203 = vld [vmem:[#allocation6 + $0x410] sm:$0xff]
    %v204 = vld [vmem:[#allocation6 + $0x418] sm:$0xff]
    %v205 = vld [vmem:[#allocation6 + $0x420] sm:$0xff]
    %v206 = vld [vmem:[#allocation6 + $0x428] sm:$0xff]
    %v207 = vld [vmem:[#allocation6 + $0x430] sm:$0xff]
    %v208 = vld [vmem:[#allocation6 + $0x438] sm:$0xff]
    %v209 = vld [vmem:[#allocation6 + $0x440] sm:$0xff]
    %v210 = vld [vmem:[#allocation6 + $0x448] sm:$0xff]
    %v211 = vld [vmem:[#allocation6 + $0x450] sm:$0xff]
    %v212 = vld [vmem:[#allocation6 + $0x458] sm:$0xff]
    %v213 = vld [vmem:[#allocation6 + $0x460] sm:$0xff]
    %v214 = vld [vmem:[#allocation6 + $0x468] sm:$0xff]
    %v215 = vld [vmem:[#allocation6 + $0x470] sm:$0xff]
    %v216 = vld [vmem:[#allocation6 + $0x478] sm:$0xff]
    %v217 = vld [vmem:[#allocation6 + $0x480] sm:$0xff]
    %v218 = vld [vmem:[#allocation6 + $0x488] sm:$0xff]
    %v219 = vld [vmem:[#allocation6 + $0x490] sm:$0xff]
    %v220 = vld [vmem:[#allocation6 + $0x498] sm:$0xff]
    %v221 = vld [vmem:[#allocation6 + $0x4a0] sm:$0xff]
    %v222 = vld [vmem:[#allocation6 + $0x4a8] sm:$0xff]
    %v223 = vld [vmem:[#allocation6 + $0x4b0] sm:$0xff]
    %v224 = vld [vmem:[#allocation6 + $0x4b8] sm:$0xff]
    %v225 = vld [vmem:[#allocation6 + $0x4c0] sm:$0xff]
    %v226 = vld [vmem:[#allocation6 + $0x4c8] sm:$0xff]
    %v227 = vld [vmem:[#allocation6 + $0x4d0] sm:$0xff]
    %v228 = vld [vmem:[#allocation6 + $0x4d8] sm:$0xff]
    %v229 = vld [vmem:[#allocation6 + $0x4e0] sm:$0xff]
    %v230 = vld [vmem:[#allocation6 + $0x4e8] sm:$0xff]
    %v231 = vld [vmem:[#allocation6 + $0x4f0] sm:$0xff]
    %v232 = vld [vmem:[#allocation6 + $0x4f8] sm:$0xff]
    %v233 = vld [vmem:[#allocation6 + $0x500] sm:$0xff]
    %v234 = vld [vmem:[#allocation6 + $0x508] sm:$0xff]
    %v235 = vld [vmem:[#allocation6 + $0x510] sm:$0xff]
    %v236 = vld [vmem:[#allocation6 + $0x518] sm:$0xff]
    %v237 = vld [vmem:[#allocation6 + $0x520] sm:$0xff]
    %v238 = vld [vmem:[#allocation6 + $0x528] sm:$0xff]
    %v239 = vld [vmem:[#allocation6 + $0x530] sm:$0xff]
    %v240 = vld [vmem:[#allocation6 + $0x538] sm:$0xff]
    %v241 = vld [vmem:[#allocation6 + $0x540] sm:$0xff]
    %v242 = vld [vmem:[#allocation6 + $0x548] sm:$0xff]
    %v243 = vld [vmem:[#allocation6 + $0x550] sm:$0xff]
    %v244 = vld [vmem:[#allocation6 + $0x558] sm:$0xff]
    %v245 = vld [vmem:[#allocation6 + $0x560] sm:$0xff]
    %v246 = vld [vmem:[#allocation6 + $0x568] sm:$0xff]
    %v247 = vld [vmem:[#allocation6 + $0x570] sm:$0xff]
    %v248 = vld [vmem:[#allocation6 + $0x578] sm:$0xff]
    %v249 = vld [vmem:[#allocation6 + $0x580] sm:$0xff]
    %v250 = vld [vmem:[#allocation6 + $0x588] sm:$0xff]
    %v251 = vld [vmem:[#allocation6 + $0x590] sm:$0xff]
    %v252 = vld [vmem:[#allocation6 + $0x598] sm:$0xff]
    %v253 = vld [vmem:[#allocation6 + $0x5a0] sm:$0xff]
    %v254 = vld [vmem:[#allocation6 + $0x5a8] sm:$0xff]
    %v255 = vld [vmem:[#allocation6 + $0x5b0] sm:$0xff]
    %v256 = vld [vmem:[#allocation6 + $0x5b8] sm:$0xff]
    %v257 = vld [vmem:[#allocation6 + $0x5c0] sm:$0xff]
    %v258 = vld [vmem:[#allocation6 + $0x5c8] sm:$0xff]
    %v259 = vld [vmem:[#allocation6 + $0x5d0] sm:$0xff]
    %v260 = vld [vmem:[#allocation6 + $0x5d8] sm:$0xff]
    %v261 = vld [vmem:[#allocation6 + $0x5e0] sm:$0xff]
    %v262 = vld [vmem:[#allocation6 + $0x5e8] sm:$0xff]
    %v263 = vld [vmem:[#allocation6 + $0x5f0] sm:$0xff]
    %v264 = vld [vmem:[#allocation6 + $0x5f8] sm:$0xff]
    %v268 = vunpack.c.l.b16 %v70
    %v269 = vunpack.c.h.b16 %v70
    %v270 = vunpack.c.l.b16 %v71
    %v271 = vunpack.c.h.b16 %v71
    %v272 = vunpack.c.l.b16 %v72
    %v273 = vunpack.c.h.b16 %v72
    %v274 = vpack.c.b16 %v268, %v268
    %v275 = vpack.c.b16 %v269, %v269
    %v276 = vpack.c.b16 %v270, %v270
    %v277 = vpack.c.b16 %v271, %v271
    %v278 = vpack.c.b16 %v272, %v272
    %v279 = vpack.c.b16 %v273, %v273
    %v478 = vunpack.c.l.b16 %v73
    %v479 = vunpack.c.h.b16 %v73
    %v480 = vunpack.c.l.b16 %v74
    %v481 = vunpack.c.h.b16 %v74
    %v482 = vunpack.c.l.b16 %v75
    %v483 = vunpack.c.h.b16 %v75
    %v484 = vunpack.c.l.b16 %v76
    %v485 = vunpack.c.h.b16 %v76
    %v486 = vunpack.c.l.b16 %v77
    %v487 = vunpack.c.h.b16 %v77
    %v488 = vunpack.c.l.b16 %v78
    %v489 = vunpack.c.h.b16 %v78
    %v490 = vunpack.c.l.b16 %v79
    %v491 = vunpack.c.h.b16 %v79
    %v492 = vunpack.c.l.b16 %v80
    %v493 = vunpack.c.h.b16 %v80
    %v494 = vunpack.c.l.b16 %v81
    %v495 = vunpack.c.h.b16 %v81
    %v496 = vunpack.c.l.b16 %v82
    %v497 = vunpack.c.h.b16 %v82
    %v498 = vunpack.c.l.b16 %v83
    %v499 = vunpack.c.h.b16 %v83
    %v500 = vunpack.c.l.b16 %v84
    %v501 = vunpack.c.h.b16 %v84
    %v502 = vunpack.c.l.b16 %v85
    %v503 = vunpack.c.h.b16 %v85
    %v504 = vunpack.c.l.b16 %v86
    %v505 = vunpack.c.h.b16 %v86
    %v506 = vunpack.c.l.b16 %v87
    %v507 = vunpack.c.h.b16 %v87
    %v508 = vunpack.c.l.b16 %v88
    %v509 = vunpack.c.h.b16 %v88
    %v510 = vunpack.c.l.b16 %v89
    %v511 = vunpack.c.h.b16 %v89
    %v512 = vunpack.c.l.b16 %v90
    %v513 = vunpack.c.h.b16 %v90
    %v514 = vunpack.c.l.b16 %v91
    %v515 = vunpack.c.h.b16 %v91
    %v516 = vunpack.c.l.b16 %v92
    %v517 = vunpack.c.h.b16 %v92
    %v518 = vunpack.c.l.b16 %v93
    %v519 = vunpack.c.h.b16 %v93
    %v520 = vunpack.c.l.b16 %v94
    %v521 = vunpack.c.h.b16 %v94
    %v522 = vunpack.c.l.b16 %v95
    %v523 = vunpack.c.h.b16 %v95
    %v524 = vunpack.c.l.b16 %v96
    %v525 = vunpack.c.h.b16 %v96
    %v526 = vunpack.c.l.b16 %v97
    %v527 = vunpack.c.h.b16 %v97
    %v528 = vunpack.c.l.b16 %v98
    %v529 = vunpack.c.h.b16 %v98
    %v530 = vunpack.c.l.b16 %v99
    %v531 = vunpack.c.h.b16 %v99
    %v532 = vunpack.c.l.b16 %v100
    %v533 = vunpack.c.h.b16 %v100
    %v534 = vunpack.c.l.b16 %v101
    %v535 = vunpack.c.h.b16 %v101
    %v536 = vunpack.c.l.b16 %v102
    %v537 = vunpack.c.h.b16 %v102
    %v538 = vunpack.c.l.b16 %v103
    %v539 = vunpack.c.h.b16 %v103
    %v540 = vunpack.c.l.b16 %v104
    %v541 = vunpack.c.h.b16 %v104
    %v542 = vunpack.c.l.b16 %v105
    %v543 = vunpack.c.h.b16 %v105
    %v544 = vunpack.c.l.b16 %v106
    %v545 = vunpack.c.h.b16 %v106
    %v546 = vunpack.c.l.b16 %v107
    %v547 = vunpack.c.h.b16 %v107
    %v548 = vunpack.c.l.b16 %v108
    %v549 = vunpack.c.h.b16 %v108
    %v550 = vunpack.c.l.b16 %v109
    %v551 = vunpack.c.h.b16 %v109
    %v552 = vunpack.c.l.b16 %v110
    %v553 = vunpack.c.h.b16 %v110
    %v554 = vunpack.c.l.b16 %v111
    %v555 = vunpack.c.h.b16 %v111
    %v556 = vunpack.c.l.b16 %v112
    %v557 = vunpack.c.h.b16 %v112
    %v558 = vunpack.c.l.b16 %v113
    %v559 = vunpack.c.h.b16 %v113
    %v560 = vunpack.c.l.b16 %v114
    %v561 = vunpack.c.h.b16 %v114
    %v562 = vunpack.c.l.b16 %v115
    %v563 = vunpack.c.h.b16 %v115
    %v564 = vunpack.c.l.b16 %v116
    %v565 = vunpack.c.h.b16 %v116
    %v566 = vunpack.c.l.b16 %v117
    %v567 = vunpack.c.h.b16 %v117
    %v568 = vunpack.c.l.b16 %v118
    %v569 = vunpack.c.h.b16 %v118
    %v570 = vunpack.c.l.b16 %v119
    %v571 = vunpack.c.h.b16 %v119
    %v572 = vunpack.c.l.b16 %v120
    %v573 = vunpack.c.h.b16 %v120
    %v574 = vunpack.c.l.b16 %v121
    %v575 = vunpack.c.h.b16 %v121
    %v576 = vunpack.c.l.b16 %v122
    %v577 = vunpack.c.h.b16 %v122
    %v578 = vunpack.c.l.b16 %v123
    %v579 = vunpack.c.h.b16 %v123
    %v580 = vunpack.c.l.b16 %v124
    %v581 = vunpack.c.h.b16 %v124
    %v582 = vunpack.c.l.b16 %v125
    %v583 = vunpack.c.h.b16 %v125
    %v584 = vunpack.c.l.b16 %v126
    %v585 = vunpack.c.h.b16 %v126
    %v586 = vunpack.c.l.b16 %v127
    %v587 = vunpack.c.h.b16 %v127
    %v588 = vunpack.c.l.b16 %v128
    %v589 = vunpack.c.h.b16 %v128
    %v590 = vunpack.c.l.b16 %v129
    %v591 = vunpack.c.h.b16 %v129
    %v592 = vunpack.c.l.b16 %v130
    %v593 = vunpack.c.h.b16 %v130
    %v594 = vunpack.c.l.b16 %v131
    %v595 = vunpack.c.h.b16 %v131
    %v596 = vunpack.c.l.b16 %v132
    %v597 = vunpack.c.h.b16 %v132
    %v598 = vunpack.c.l.b16 %v133
    %v599 = vunpack.c.h.b16 %v133
    %v600 = vunpack.c.l.b16 %v134
    %v601 = vunpack.c.h.b16 %v134
    %v602 = vunpack.c.l.b16 %v135
    %v603 = vunpack.c.h.b16 %v135
    %v604 = vunpack.c.l.b16 %v136
    %v605 = vunpack.c.h.b16 %v136
    %v606 = vunpack.c.l.b16 %v137
    %v607 = vunpack.c.h.b16 %v137
    %v608 = vunpack.c.l.b16 %v138
    %v609 = vunpack.c.h.b16 %v138
    %v610 = vunpack.c.l.b16 %v139
    %v611 = vunpack.c.h.b16 %v139
    %v612 = vunpack.c.l.b16 %v140
    %v613 = vunpack.c.h.b16 %v140
    %v614 = vunpack.c.l.b16 %v141
    %v615 = vunpack.c.h.b16 %v141
    %v616 = vunpack.c.l.b16 %v142
    %v617 = vunpack.c.h.b16 %v142
    %v618 = vunpack.c.l.b16 %v143
    %v619 = vunpack.c.h.b16 %v143
    %v620 = vunpack.c.l.b16 %v144
    %v621 = vunpack.c.h.b16 %v144
    %v622 = vunpack.c.l.b16 %v145
    %v623 = vunpack.c.h.b16 %v145
    %v624 = vunpack.c.l.b16 %v146
    %v625 = vunpack.c.h.b16 %v146
    %v626 = vunpack.c.l.b16 %v147
    %v627 = vunpack.c.h.b16 %v147
    %v628 = vunpack.c.l.b16 %v148
    %v629 = vunpack.c.h.b16 %v148
    %v630 = vunpack.c.l.b16 %v149
    %v631 = vunpack.c.h.b16 %v149
    %v632 = vunpack.c.l.b16 %v150
    %v633 = vunpack.c.h.b16 %v150
    %v634 = vunpack.c.l.b16 %v151
    %v635 = vunpack.c.h.b16 %v151
    %v636 = vunpack.c.l.b16 %v152
    %v637 = vunpack.c.h.b16 %v152
    %v638 = vunpack.c.l.b16 %v153
    %v639 = vunpack.c.h.b16 %v153
    %v640 = vunpack.c.l.b16 %v154
    %v641 = vunpack.c.h.b16 %v154
    %v642 = vunpack.c.l.b16 %v155
    %v643 = vunpack.c.h.b16 %v155
    %v644 = vunpack.c.l.b16 %v156
    %v645 = vunpack.c.h.b16 %v156
    %v646 = vunpack.c.l.b16 %v157
    %v647 = vunpack.c.h.b16 %v157
    %v648 = vunpack.c.l.b16 %v158
    %v649 = vunpack.c.h.b16 %v158
    %v650 = vunpack.c.l.b16 %v159
    %v651 = vunpack.c.h.b16 %v159
    %v652 = vunpack.c.l.b16 %v160
    %v653 = vunpack.c.h.b16 %v160
    %v654 = vunpack.c.l.b16 %v161
    %v655 = vunpack.c.h.b16 %v161
    %v656 = vunpack.c.l.b16 %v162
    %v657 = vunpack.c.h.b16 %v162
    %v658 = vunpack.c.l.b16 %v163
    %v659 = vunpack.c.h.b16 %v163
    %v660 = vunpack.c.l.b16 %v164
    %v661 = vunpack.c.h.b16 %v164
    %v662 = vunpack.c.l.b16 %v165
    %v663 = vunpack.c.h.b16 %v165
    %v664 = vunpack.c.l.b16 %v166
    %v665 = vunpack.c.h.b16 %v166
    %v666 = vunpack.c.l.b16 %v167
    %v667 = vunpack.c.h.b16 %v167
    %v668 = vunpack.c.l.b16 %v168
    %v669 = vunpack.c.h.b16 %v168
    %v670 = vunpack.c.l.b16 %v169
    %v671 = vunpack.c.h.b16 %v169
    %v672 = vunpack.c.l.b16 %v170
    %v673 = vunpack.c.h.b16 %v170
    %v674 = vunpack.c.l.b16 %v171
    %v675 = vunpack.c.h.b16 %v171
    %v676 = vunpack.c.l.b16 %v172
    %v677 = vunpack.c.h.b16 %v172
    %v678 = vunpack.c.l.b16 %v173
    %v679 = vunpack.c.h.b16 %v173
    %v680 = vunpack.c.l.b16 %v174
    %v681 = vunpack.c.h.b16 %v174
    %v682 = vunpack.c.l.b16 %v175
    %v683 = vunpack.c.h.b16 %v175
    %v684 = vunpack.c.l.b16 %v176
    %v685 = vunpack.c.h.b16 %v176
    %v686 = vunpack.c.l.b16 %v177
    %v687 = vunpack.c.h.b16 %v177
    %v688 = vunpack.c.l.b16 %v178
    %v689 = vunpack.c.h.b16 %v178
    %v690 = vunpack.c.l.b16 %v179
    %v691 = vunpack.c.h.b16 %v179
    %v692 = vunpack.c.l.b16 %v180
    %v693 = vunpack.c.h.b16 %v180
    %v694 = vunpack.c.l.b16 %v181
    %v695 = vunpack.c.h.b16 %v181
    %v696 = vunpack.c.l.b16 %v182
    %v697 = vunpack.c.h.b16 %v182
    %v698 = vunpack.c.l.b16 %v183
    %v699 = vunpack.c.h.b16 %v183
    %v700 = vunpack.c.l.b16 %v184
    %v701 = vunpack.c.h.b16 %v184
    %v702 = vunpack.c.l.b16 %v185
    %v703 = vunpack.c.h.b16 %v185
    %v704 = vunpack.c.l.b16 %v186
    %v705 = vunpack.c.h.b16 %v186
    %v706 = vunpack.c.l.b16 %v187
    %v707 = vunpack.c.h.b16 %v187
    %v708 = vunpack.c.l.b16 %v188
    %v709 = vunpack.c.h.b16 %v188
    %v710 = vunpack.c.l.b16 %v189
    %v711 = vunpack.c.h.b16 %v189
    %v712 = vunpack.c.l.b16 %v190
    %v713 = vunpack.c.h.b16 %v190
    %v714 = vunpack.c.l.b16 %v191
    %v715 = vunpack.c.h.b16 %v191
    %v716 = vunpack.c.l.b16 %v192
    %v717 = vunpack.c.h.b16 %v192
    %v718 = vunpack.c.l.b16 %v193
    %v719 = vunpack.c.h.b16 %v193
    %v720 = vunpack.c.l.b16 %v194
    %v721 = vunpack.c.h.b16 %v194
    %v722 = vunpack.c.l.b16 %v195
    %v723 = vunpack.c.h.b16 %v195
    %v724 = vunpack.c.l.b16 %v196
    %v725 = vunpack.c.h.b16 %v196
    %v726 = vunpack.c.l.b16 %v197
    %v727 = vunpack.c.h.b16 %v197
    %v728 = vunpack.c.l.b16 %v198
    %v729 = vunpack.c.h.b16 %v198
    %v730 = vunpack.c.l.b16 %v199
    %v731 = vunpack.c.h.b16 %v199
    %v732 = vunpack.c.l.b16 %v200
    %v733 = vunpack.c.h.b16 %v200
    %v734 = vunpack.c.l.b16 %v201
    %v735 = vunpack.c.h.b16 %v201
    %v736 = vunpack.c.l.b16 %v202
    %v737 = vunpack.c.h.b16 %v202
    %v738 = vunpack.c.l.b16 %v203
    %v739 = vunpack.c.h.b16 %v203
    %v740 = vunpack.c.l.b16 %v204
    %v741 = vunpack.c.h.b16 %v204
    %v742 = vunpack.c.l.b16 %v205
    %v743 = vunpack.c.h.b16 %v205
    %v744 = vunpack.c.l.b16 %v206
    %v745 = vunpack.c.h.b16 %v206
    %v746 = vunpack.c.l.b16 %v207
    %v747 = vunpack.c.h.b16 %v207
    %v748 = vunpack.c.l.b16 %v208
    %v749 = vunpack.c.h.b16 %v208
    %v750 = vunpack.c.l.b16 %v209
    %v751 = vunpack.c.h.b16 %v209
    %v752 = vunpack.c.l.b16 %v210
    %v753 = vunpack.c.h.b16 %v210
    %v754 = vunpack.c.l.b16 %v211
    %v755 = vunpack.c.h.b16 %v211
    %v756 = vunpack.c.l.b16 %v212
    %v757 = vunpack.c.h.b16 %v212
    %v758 = vunpack.c.l.b16 %v213
    %v759 = vunpack.c.h.b16 %v213
    %v760 = vunpack.c.l.b16 %v214
    %v761 = vunpack.c.h.b16 %v214
    %v762 = vunpack.c.l.b16 %v215
    %v763 = vunpack.c.h.b16 %v215
    %v764 = vunpack.c.l.b16 %v216
    %v765 = vunpack.c.h.b16 %v216
    %v766 = vunpack.c.l.b16 %v217
    %v767 = vunpack.c.h.b16 %v217
    %v768 = vunpack.c.l.b16 %v218
    %v769 = vunpack.c.h.b16 %v218
    %v770 = vunpack.c.l.b16 %v219
    %v771 = vunpack.c.h.b16 %v219
    %v772 = vunpack.c.l.b16 %v220
    %v773 = vunpack.c.h.b16 %v220
    %v774 = vunpack.c.l.b16 %v221
    %v775 = vunpack.c.h.b16 %v221
    %v776 = vunpack.c.l.b16 %v222
    %v777 = vunpack.c.h.b16 %v222
    %v778 = vunpack.c.l.b16 %v223
    %v779 = vunpack.c.h.b16 %v223
    %v780 = vunpack.c.l.b16 %v224
    %v781 = vunpack.c.h.b16 %v224
    %v782 = vunpack.c.l.b16 %v225
    %v783 = vunpack.c.h.b16 %v225
    %v784 = vunpack.c.l.b16 %v226
    %v785 = vunpack.c.h.b16 %v226
    %v786 = vunpack.c.l.b16 %v227
    %v787 = vunpack.c.h.b16 %v227
    %v788 = vunpack.c.l.b16 %v228
    %v789 = vunpack.c.h.b16 %v228
    %v790 = vunpack.c.l.b16 %v229
    %v791 = vunpack.c.h.b16 %v229
    %v792 = vunpack.c.l.b16 %v230
    %v793 = vunpack.c.h.b16 %v230
    %v794 = vunpack.c.l.b16 %v231
    %v795 = vunpack.c.h.b16 %v231
    %v796 = vunpack.c.l.b16 %v232
    %v797 = vunpack.c.h.b16 %v232
    %v798 = vunpack.c.l.b16 %v233
    %v799 = vunpack.c.h.b16 %v233
    %v800 = vunpack.c.l.b16 %v234
    %v801 = vunpack.c.h.b16 %v234
    %v802 = vunpack.c.l.b16 %v235
    %v803 = vunpack.c.h.b16 %v235
    %v804 = vunpack.c.l.b16 %v236
    %v805 = vunpack.c.h.b16 %v236
    %v806 = vunpack.c.l.b16 %v237
    %v807 = vunpack.c.h.b16 %v237
    %v808 = vunpack.c.l.b16 %v238
    %v809 = vunpack.c.h.b16 %v238
    %v810 = vunpack.c.l.b16 %v239
    %v811 = vunpack.c.h.b16 %v239
    %v812 = vunpack.c.l.b16 %v240
    %v813 = vunpack.c.h.b16 %v240
    %v814 = vunpack.c.l.b16 %v241
    %v815 = vunpack.c.h.b16 %v241
    %v816 = vunpack.c.l.b16 %v242
    %v817 = vunpack.c.h.b16 %v242
    %v818 = vunpack.c.l.b16 %v243
    %v819 = vunpack.c.h.b16 %v243
    %v820 = vunpack.c.l.b16 %v244
    %v821 = vunpack.c.h.b16 %v244
    %v822 = vunpack.c.l.b16 %v245
    %v823 = vunpack.c.h.b16 %v245
    %v824 = vunpack.c.l.b16 %v246
    %v825 = vunpack.c.h.b16 %v246
    %v826 = vunpack.c.l.b16 %v247
    %v827 = vunpack.c.h.b16 %v247
    %v828 = vunpack.c.l.b16 %v248
    %v829 = vunpack.c.h.b16 %v248
    %v830 = vunpack.c.l.b16 %v249
    %v831 = vunpack.c.h.b16 %v249
    %v832 = vunpack.c.l.b16 %v250
    %v833 = vunpack.c.h.b16 %v250
    %v834 = vunpack.c.l.b16 %v251
    %v835 = vunpack.c.h.b16 %v251
    %v836 = vunpack.c.l.b16 %v252
    %v837 = vunpack.c.h.b16 %v252
    %v838 = vunpack.c.l.b16 %v253
    %v839 = vunpack.c.h.b16 %v253
    %v840 = vunpack.c.l.b16 %v254
    %v841 = vunpack.c.h.b16 %v254
    %v842 = vunpack.c.l.b16 %v255
    %v843 = vunpack.c.h.b16 %v255
    %v844 = vunpack.c.l.b16 %v256
    %v845 = vunpack.c.h.b16 %v256
    %v846 = vunpack.c.l.b16 %v257
    %v847 = vunpack.c.h.b16 %v257
    %v848 = vunpack.c.l.b16 %v258
    %v849 = vunpack.c.h.b16 %v258
    %v850 = vunpack.c.l.b16 %v259
    %v851 = vunpack.c.h.b16 %v259
    %v852 = vunpack.c.l.b16 %v260
    %v853 = vunpack.c.h.b16 %v260
    %v854 = vunpack.c.l.b16 %v261
    %v855 = vunpack.c.h.b16 %v261
    %v856 = vunpack.c.l.b16 %v262
    %v857 = vunpack.c.h.b16 %v262
    %v858 = vunpack.c.l.b16 %v263
    %v859 = vunpack.c.h.b16 %v263
    %v860 = vunpack.c.l.b16 %v264
    %v861 = vunpack.c.h.b16 %v264
    %v862 = vpack.c.b16 %v482, %v478
    %v863 = vpack.c.b16 %v483, %v479
    %v864 = vpack.c.b16 %v484, %v480
    %v865 = vpack.c.b16 %v485, %v481
    %v866 = vpack.c.b16 %v490, %v486
    %v867 = vpack.c.b16 %v491, %v487
    %v868 = vpack.c.b16 %v492, %v488
    %v869 = vpack.c.b16 %v493, %v489
    %v870 = vpack.c.b16 %v498, %v494
    %v871 = vpack.c.b16 %v499, %v495
    %v872 = vpack.c.b16 %v500, %v496
    %v873 = vpack.c.b16 %v501, %v497
    %v874 = vpack.c.b16 %v506, %v502
    %v875 = vpack.c.b16 %v507, %v503
    %v876 = vpack.c.b16 %v508, %v504
    %v877 = vpack.c.b16 %v509, %v505
    %v878 = vpack.c.b16 %v514, %v510
    %v879 = vpack.c.b16 %v515, %v511
    %v880 = vpack.c.b16 %v516, %v512
    %v881 = vpack.c.b16 %v517, %v513
    %v882 = vpack.c.b16 %v522, %v518
    %v883 = vpack.c.b16 %v523, %v519
    %v884 = vpack.c.b16 %v524, %v520
    %v885 = vpack.c.b16 %v525, %v521
    %v886 = vpack.c.b16 %v530, %v526
    %v887 = vpack.c.b16 %v531, %v527
    %v888 = vpack.c.b16 %v532, %v528
    %v889 = vpack.c.b16 %v533, %v529
    %v890 = vpack.c.b16 %v538, %v534
    %v891 = vpack.c.b16 %v539, %v535
    %v892 = vpack.c.b16 %v540, %v536
    %v893 = vpack.c.b16 %v541, %v537
    %v894 = vpack.c.b16 %v546, %v542
    %v895 = vpack.c.b16 %v547, %v543
    %v896 = vpack.c.b16 %v548, %v544
    %v897 = vpack.c.b16 %v549, %v545
    %v898 = vpack.c.b16 %v554, %v550
    %v899 = vpack.c.b16 %v555, %v551
    %v900 = vpack.c.b16 %v556, %v552
    %v901 = vpack.c.b16 %v557, %v553
    %v902 = vpack.c.b16 %v562, %v558
    %v903 = vpack.c.b16 %v563, %v559
    %v904 = vpack.c.b16 %v564, %v560
    %v905 = vpack.c.b16 %v565, %v561
    %v906 = vpack.c.b16 %v570, %v566
    %v907 = vpack.c.b16 %v571, %v567
    %v908 = vpack.c.b16 %v572, %v568
    %v909 = vpack.c.b16 %v573, %v569
    %v910 = vpack.c.b16 %v578, %v574
    %v911 = vpack.c.b16 %v579, %v575
    %v912 = vpack.c.b16 %v580, %v576
    %v913 = vpack.c.b16 %v581, %v577
    %v914 = vpack.c.b16 %v586, %v582
    %v915 = vpack.c.b16 %v587, %v583
    %v916 = vpack.c.b16 %v588, %v584
    %v917 = vpack.c.b16 %v589, %v585
    %v918 = vpack.c.b16 %v594, %v590
    %v919 = vpack.c.b16 %v595, %v591
    %v920 = vpack.c.b16 %v596, %v592
    %v921 = vpack.c.b16 %v597, %v593
    %v922 = vpack.c.b16 %v602, %v598
    %v923 = vpack.c.b16 %v603, %v599
    %v924 = vpack.c.b16 %v604, %v600
    %v925 = vpack.c.b16 %v605, %v601
    %v926 = vpack.c.b16 %v610, %v606
    %v927 = vpack.c.b16 %v611, %v607
    %v928 = vpack.c.b16 %v612, %v608
    %v929 = vpack.c.b16 %v613, %v609
    %v930 = vpack.c.b16 %v618, %v614
    %v931 = vpack.c.b16 %v619, %v615
    %v932 = vpack.c.b16 %v620, %v616
    %v933 = vpack.c.b16 %v621, %v617
    %v934 = vpack.c.b16 %v626, %v622
    %v935 = vpack.c.b16 %v627, %v623
    %v936 = vpack.c.b16 %v628, %v624
    %v937 = vpack.c.b16 %v629, %v625
    %v938 = vpack.c.b16 %v634, %v630
    %v939 = vpack.c.b16 %v635, %v631
    %v940 = vpack.c.b16 %v636, %v632
    %v941 = vpack.c.b16 %v637, %v633
    %v942 = vpack.c.b16 %v642, %v638
    %v943 = vpack.c.b16 %v643, %v639
    %v944 = vpack.c.b16 %v644, %v640
    %v945 = vpack.c.b16 %v645, %v641
    %v946 = vpack.c.b16 %v650, %v646
    %v947 = vpack.c.b16 %v651, %v647
    %v948 = vpack.c.b16 %v652, %v648
    %v949 = vpack.c.b16 %v653, %v649
    %v950 = vpack.c.b16 %v658, %v654
    %v951 = vpack.c.b16 %v659, %v655
    %v952 = vpack.c.b16 %v660, %v656
    %v953 = vpack.c.b16 %v661, %v657
    %v954 = vpack.c.b16 %v666, %v662
    %v955 = vpack.c.b16 %v667, %v663
    %v956 = vpack.c.b16 %v668, %v664
    %v957 = vpack.c.b16 %v669, %v665
    %v958 = vpack.c.b16 %v674, %v670
    %v959 = vpack.c.b16 %v675, %v671
    %v960 = vpack.c.b16 %v676, %v672
    %v961 = vpack.c.b16 %v677, %v673
    %v962 = vpack.c.b16 %v682, %v678
    %v963 = vpack.c.b16 %v683, %v679
    %v964 = vpack.c.b16 %v684, %v680
    %v965 = vpack.c.b16 %v685, %v681
    %v966 = vpack.c.b16 %v690, %v686
    %v967 = vpack.c.b16 %v691, %v687
    %v968 = vpack.c.b16 %v692, %v688
    %v969 = vpack.c.b16 %v693, %v689
    %v970 = vpack.c.b16 %v698, %v694
    %v971 = vpack.c.b16 %v699, %v695
    %v972 = vpack.c.b16 %v700, %v696
    %v973 = vpack.c.b16 %v701, %v697
    %v974 = vpack.c.b16 %v706, %v702
    %v975 = vpack.c.b16 %v707, %v703
    %v976 = vpack.c.b16 %v708, %v704
    %v977 = vpack.c.b16 %v709, %v705
    %v978 = vpack.c.b16 %v714, %v710
    %v979 = vpack.c.b16 %v715, %v711
    %v980 = vpack.c.b16 %v716, %v712
    %v981 = vpack.c.b16 %v717, %v713
    %v982 = vpack.c.b16 %v722, %v718
    %v983 = vpack.c.b16 %v723, %v719
    %v984 = vpack.c.b16 %v724, %v720
    %v985 = vpack.c.b16 %v725, %v721
    %v986 = vpack.c.b16 %v730, %v726
    %v987 = vpack.c.b16 %v731, %v727
    %v988 = vpack.c.b16 %v732, %v728
    %v989 = vpack.c.b16 %v733, %v729
    %v990 = vpack.c.b16 %v738, %v734
    %v991 = vpack.c.b16 %v739, %v735
    %v992 = vpack.c.b16 %v740, %v736
    %v993 = vpack.c.b16 %v741, %v737
    %v994 = vpack.c.b16 %v746, %v742
    %v995 = vpack.c.b16 %v747, %v743
    %v996 = vpack.c.b16 %v748, %v744
    %v997 = vpack.c.b16 %v749, %v745
    %v998 = vpack.c.b16 %v754, %v750
    %v999 = vpack.c.b16 %v755, %v751
    %v1000 = vpack.c.b16 %v756, %v752
    %v1001 = vpack.c.b16 %v757, %v753
    %v1002 = vpack.c.b16 %v762, %v758
    %v1003 = vpack.c.b16 %v763, %v759
    %v1004 = vpack.c.b16 %v764, %v760
    %v1005 = vpack.c.b16 %v765, %v761
    %v1006 = vpack.c.b16 %v770, %v766
    %v1007 = vpack.c.b16 %v771, %v767
    %v1008 = vpack.c.b16 %v772, %v768
    %v1009 = vpack.c.b16 %v773, %v769
    %v1010 = vpack.c.b16 %v778, %v774
    %v1011 = vpack.c.b16 %v779, %v775
    %v1012 = vpack.c.b16 %v780, %v776
    %v1013 = vpack.c.b16 %v781, %v777
    %v1014 = vpack.c.b16 %v786, %v782
    %v1015 = vpack.c.b16 %v787, %v783
    %v1016 = vpack.c.b16 %v788, %v784
    %v1017 = vpack.c.b16 %v789, %v785
    %v1018 = vpack.c.b16 %v794, %v790
    %v1019 = vpack.c.b16 %v795, %v791
    %v1020 = vpack.c.b16 %v796, %v792
    %v1021 = vpack.c.b16 %v797, %v793
    %v1022 = vpack.c.b16 %v802, %v798
    %v1023 = vpack.c.b16 %v803, %v799
    %v1024 = vpack.c.b16 %v804, %v800
    %v1025 = vpack.c.b16 %v805, %v801
    %v1026 = vpack.c.b16 %v810, %v806
    %v1027 = vpack.c.b16 %v811, %v807
    %v1028 = vpack.c.b16 %v812, %v808
    %v1029 = vpack.c.b16 %v813, %v809
    %v1030 = vpack.c.b16 %v818, %v814
    %v1031 = vpack.c.b16 %v819, %v815
    %v1032 = vpack.c.b16 %v820, %v816
    %v1033 = vpack.c.b16 %v821, %v817
    %v1034 = vpack.c.b16 %v826, %v822
    %v1035 = vpack.c.b16 %v827, %v823
    %v1036 = vpack.c.b16 %v828, %v824
    %v1037 = vpack.c.b16 %v829, %v825
    %v1038 = vpack.c.b16 %v834, %v830
    %v1039 = vpack.c.b16 %v835, %v831
    %v1040 = vpack.c.b16 %v836, %v832
    %v1041 = vpack.c.b16 %v837, %v833
    %v1042 = vpack.c.b16 %v842, %v838
    %v1043 = vpack.c.b16 %v843, %v839
    %v1044 = vpack.c.b16 %v844, %v840
    %v1045 = vpack.c.b16 %v845, %v841
    %v1046 = vpack.c.b16 %v850, %v846
    %v1047 = vpack.c.b16 %v851, %v847
    %v1048 = vpack.c.b16 %v852, %v848
    %v1049 = vpack.c.b16 %v853, %v849
    %v1050 = vpack.c.b16 %v858, %v854
    %v1051 = vpack.c.b16 %v859, %v855
    %v1052 = vpack.c.b16 %v860, %v856
    %v1053 = vpack.c.b16 %v861, %v857
    %1246 = vmatprep.subr.bf16.mxu0 %v863
    %1247 = vmatpush1.bf16.msra.mxu0 %v862
    %1248 = vmatprep.subr.bf16.mxu0 %v867
    %1249 = vmatpush1.bf16.msra.mxu0 %v866
    %1250 = vmatprep.subr.bf16.mxu0 %v871
    %1251 = vmatpush1.bf16.msra.mxu0 %v870
    %1252 = vmatprep.subr.bf16.mxu0 %v875
    %1253 = vmatpush1.bf16.msra.mxu0 %v874
    %1254 = vmatprep.subr.bf16.mxu0 %v879
    %1255 = vmatpush1.bf16.msra.mxu0 %v878
    %1256 = vmatprep.subr.bf16.mxu0 %v883
    %1257 = vmatpush1.bf16.msra.mxu0 %v882
    %1258 = vmatprep.subr.bf16.mxu0 %v887
    %1259 = vmatpush1.bf16.msra.mxu0 %v886
    %1260 = vmatprep.subr.bf16.mxu0 %v891
    %1261 = vmatpush1.bf16.msra.mxu0 %v890
    %1262 = vmatprep.subr.bf16.mxu0 %v895
    %1263 = vmatpush1.bf16.msra.mxu0 %v894
    %1264 = vmatprep.subr.bf16.mxu0 %v899
    %1265 = vmatpush1.bf16.msra.mxu0 %v898
    %1266 = vmatprep.subr.bf16.mxu0 %v903
    %1267 = vmatpush1.bf16.msra.mxu0 %v902
    %1268 = vmatprep.subr.bf16.mxu0 %v907
    %1269 = vmatpush1.bf16.msra.mxu0 %v906
    %1270 = vmatprep.subr.bf16.mxu0 %v911
    %1271 = vmatpush1.bf16.msra.mxu0 %v910
    %1272 = vmatprep.subr.bf16.mxu0 %v915
    %1273 = vmatpush1.bf16.msra.mxu0 %v914
    %1274 = vmatprep.subr.bf16.mxu0 %v919
    %1275 = vmatpush1.bf16.msra.mxu0 %v918
    %1276 = vmatprep.subr.bf16.mxu0 %v923
    %1277 = vmatpush1.bf16.msra.mxu0 %v922
    %1278 = vmatprep.mubr.bf16.mxu0 %v275
    %1279 = vmatmul.mubr.bf16.gmra.mrb[0].mxu0 %v274
    %v1280 = vpop.f32.mrb[0].mxu0
    %v1281 = vadd.f32 0.0, %v1280
    %v1282 = vpop.f32.mrb[0].mxu0
    %v1283 = vadd.f32 0.0, %v1282
    %v1284 = vpop.f32.mrb[0].mxu0
    %v1285 = vpop.f32.mrb[0].mxu0
    %1286 = vdwg.mxu0
    %1287 = vmatprep.subr.bf16.mxu0 %v927
    %1288 = vmatpush1.bf16.msra.mxu0 %v926
    %1289 = vmatprep.subr.bf16.mxu0 %v931
    %1290 = vmatpush1.bf16.msra.mxu0 %v930
    %1291 = vmatprep.subr.bf16.mxu0 %v935
    %1292 = vmatpush1.bf16.msra.mxu0 %v934
    %1293 = vmatprep.subr.bf16.mxu0 %v939
    %1294 = vmatpush1.bf16.msra.mxu0 %v938
    %1295 = vmatprep.subr.bf16.mxu0 %v943
    %1296 = vmatpush1.bf16.msra.mxu0 %v942
    %1297 = vmatprep.subr.bf16.mxu0 %v947
    %1298 = vmatpush1.bf16.msra.mxu0 %v946
    %1299 = vmatprep.subr.bf16.mxu0 %v951
    %1300 = vmatpush1.bf16.msra.mxu0 %v950
    %1301 = vmatprep.subr.bf16.mxu0 %v955
    %1302 = vmatpush1.bf16.msra.mxu0 %v954
    %1303 = vmatprep.subr.bf16.mxu0 %v959
    %1304 = vmatpush1.bf16.msra.mxu0 %v958
    %1305 = vmatprep.subr.bf16.mxu0 %v963
    %1306 = vmatpush1.bf16.msra.mxu0 %v962
    %1307 = vmatprep.subr.bf16.mxu0 %v967
    %1308 = vmatpush1.bf16.msra.mxu0 %v966
    %1309 = vmatprep.subr.bf16.mxu0 %v971
    %1310 = vmatpush1.bf16.msra.mxu0 %v970
    %1311 = vmatprep.subr.bf16.mxu0 %v975
    %1312 = vmatpush1.bf16.msra.mxu0 %v974
    %1313 = vmatprep.subr.bf16.mxu0 %v979
    %1314 = vmatpush1.bf16.msra.mxu0 %v978
    %1315 = vmatprep.subr.bf16.mxu0 %v983
    %1316 = vmatpush1.bf16.msra.mxu0 %v982
    %1317 = vmatprep.subr.bf16.mxu0 %v987
    %1318 = vmatpush1.bf16.msra.mxu0 %v986
    %1319 = vmatprep.mubr.bf16.mxu0 %v277
    %1320 = vmatmul.mubr.bf16.gmra.mrb[0].mxu0 %v276
    %v1321 = vpop.f32.mrb[0].mxu0
    %v1322 = vadd.f32 %v1281, %v1321
    %v1323 = vpop.f32.mrb[0].mxu0
    %v1324 = vadd.f32 %v1283, %v1323
    %v1325 = vpop.f32.mrb[0].mxu0
    %v1326 = vpop.f32.mrb[0].mxu0
    %1327 = vdwg.mxu0
    %1328 = vmatprep.subr.bf16.mxu0 %v991
    %1329 = vmatpush1.bf16.msra.mxu0 %v990
    %1330 = vmatprep.subr.bf16.mxu0 %v995
    %1331 = vmatpush1.bf16.msra.mxu0 %v994
    %1332 = vmatprep.subr.bf16.mxu0 %v999
    %1333 = vmatpush1.bf16.msra.mxu0 %v998
    %1334 = vmatprep.subr.bf16.mxu0 %v1003
    %1335 = vmatpush1.bf16.msra.mxu0 %v1002
    %1336 = vmatprep.subr.bf16.mxu0 %v1007
    %1337 = vmatpush1.bf16.msra.mxu0 %v1006
    %1338 = vmatprep.subr.bf16.mxu0 %v1011
    %1339 = vmatpush1.bf16.msra.mxu0 %v1010
    %1340 = vmatprep.subr.bf16.mxu0 %v1015
    %1341 = vmatpush1.bf16.msra.mxu0 %v1014
    %1342 = vmatprep.subr.bf16.mxu0 %v1019
    %1343 = vmatpush1.bf16.msra.mxu0 %v1018
    %1344 = vmatprep.subr.bf16.mxu0 %v1023
    %1345 = vmatpush1.bf16.msra.mxu0 %v1022
    %1346 = vmatprep.subr.bf16.mxu0 %v1027
    %1347 = vmatpush1.bf16.msra.mxu0 %v1026
    %1348 = vmatprep.subr.bf16.mxu0 %v1031
    %1349 = vmatpush1.bf16.msra.mxu0 %v1030
    %1350 = vmatprep.subr.bf16.mxu0 %v1035
    %1351 = vmatpush1.bf16.msra.mxu0 %v1034
    %1352 = vmatprep.subr.bf16.mxu0 %v1039
    %1353 = vmatpush1.bf16.msra.mxu0 %v1038
    %1354 = vmatprep.subr.bf16.mxu0 %v1043
    %1355 = vmatpush1.bf16.msra.mxu0 %v1042
    %1356 = vmatprep.subr.bf16.mxu0 %v1047
    %1357 = vmatpush1.bf16.msra.mxu0 %v1046
    %1358 = vmatprep.subr.bf16.mxu0 %v1051
    %1359 = vmatpush1.bf16.msra.mxu0 %v1050
    %1360 = vmatprep.mubr.bf16.mxu0 %v279
    %1361 = vmatmul.mubr.bf16.gmra.mrb[0].mxu0 %v278
    %v1362 = vpop.f32.mrb[0].mxu0
    %v1363 = vadd.f32 %v1322, %v1362
    %v1364 = vpop.f32.mrb[0].mxu0
    %v1365 = vadd.f32 %v1324, %v1364
    %v1366 = vpop.f32.mrb[0].mxu0
    %v1367 = vpop.f32.mrb[0].mxu0
    %1368 = vdwg.mxu0
    %1369 = vmatprep.subr.bf16.mxu0 %v865
    %1370 = vmatpush1.bf16.msra.mxu0 %v864
    %1371 = vmatprep.subr.bf16.mxu0 %v869
    %1372 = vmatpush1.bf16.msra.mxu0 %v868
    %1373 = vmatprep.subr.bf16.mxu0 %v873
    %1374 = vmatpush1.bf16.msra.mxu0 %v872
    %1375 = vmatprep.subr.bf16.mxu0 %v877
    %1376 = vmatpush1.bf16.msra.mxu0 %v876
    %1377 = vmatprep.subr.bf16.mxu0 %v881
    %1378 = vmatpush1.bf16.msra.mxu0 %v880
    %1379 = vmatprep.subr.bf16.mxu0 %v885
    %1380 = vmatpush1.bf16.msra.mxu0 %v884
    %1381 = vmatprep.subr.bf16.mxu0 %v889
    %1382 = vmatpush1.bf16.msra.mxu0 %v888
    %1383 = vmatprep.subr.bf16.mxu0 %v893
    %1384 = vmatpush1.bf16.msra.mxu0 %v892
    %1385 = vmatprep.subr.bf16.mxu0 %v897
    %1386 = vmatpush1.bf16.msra.mxu0 %v896
    %1387 = vmatprep.subr.bf16.mxu0 %v901
    %1388 = vmatpush1.bf16.msra.mxu0 %v900
    %1389 = vmatprep.subr.bf16.mxu0 %v905
    %1390 = vmatpush1.bf16.msra.mxu0 %v904
    %1391 = vmatprep.subr.bf16.mxu0 %v909
    %1392 = vmatpush1.bf16.msra.mxu0 %v908
    %1393 = vmatprep.subr.bf16.mxu0 %v913
    %1394 = vmatpush1.bf16.msra.mxu0 %v912
    %1395 = vmatprep.subr.bf16.mxu0 %v917
    %1396 = vmatpush1.bf16.msra.mxu0 %v916
    %1397 = vmatprep.subr.bf16.mxu0 %v921
    %1398 = vmatpush1.bf16.msra.mxu0 %v920
    %1399 = vmatprep.subr.bf16.mxu0 %v925
    %1400 = vmatpush1.bf16.msra.mxu0 %v924
    %1401 = vmatprep.mubr.bf16.mxu0 %v275
    %1402 = vmatmul.mubr.bf16.gmra.mrb[0].mxu0 %v274
    %v1403 = vpop.f32.mrb[0].mxu0
    %v1404 = vadd.f32 0.0, %v1403
    %v1405 = vpop.f32.mrb[0].mxu0
    %v1406 = vadd.f32 0.0, %v1405
    %v1407 = vpop.f32.mrb[0].mxu0
    %v1408 = vpop.f32.mrb[0].mxu0
    %1409 = vdwg.mxu0
    %1410 = vmatprep.subr.bf16.mxu0 %v929
    %1411 = vmatpush1.bf16.msra.mxu0 %v928
    %1412 = vmatprep.subr.bf16.mxu0 %v933
    %1413 = vmatpush1.bf16.msra.mxu0 %v932
    %1414 = vmatprep.subr.bf16.mxu0 %v937
    %1415 = vmatpush1.bf16.msra.mxu0 %v936
    %1416 = vmatprep.subr.bf16.mxu0 %v941
    %1417 = vmatpush1.bf16.msra.mxu0 %v940
    %1418 = vmatprep.subr.bf16.mxu0 %v945
    %1419 = vmatpush1.bf16.msra.mxu0 %v944
    %1420 = vmatprep.subr.bf16.mxu0 %v949
    %1421 = vmatpush1.bf16.msra.mxu0 %v948
    %1422 = vmatprep.subr.bf16.mxu0 %v953
    %1423 = vmatpush1.bf16.msra.mxu0 %v952
    %1424 = vmatprep.subr.bf16.mxu0 %v957
    %1425 = vmatpush1.bf16.msra.mxu0 %v956
    %1426 = vmatprep.subr.bf16.mxu0 %v961
    %1427 = vmatpush1.bf16.msra.mxu0 %v960
    %1428 = vmatprep.subr.bf16.mxu0 %v965
    %1429 = vmatpush1.bf16.msra.mxu0 %v964
    %1430 = vmatprep.subr.bf16.mxu0 %v969
    %1431 = vmatpush1.bf16.msra.mxu0 %v968
    %1432 = vmatprep.subr.bf16.mxu0 %v973
    %1433 = vmatpush1.bf16.msra.mxu0 %v972
    %1434 = vmatprep.subr.bf16.mxu0 %v977
    %1435 = vmatpush1.bf16.msra.mxu0 %v976
    %1436 = vmatprep.subr.bf16.mxu0 %v981
    %1437 = vmatpush1.bf16.msra.mxu0 %v980
    %1438 = vmatprep.subr.bf16.mxu0 %v985
    %1439 = vmatpush1.bf16.msra.mxu0 %v984
    %1440 = vmatprep.subr.bf16.mxu0 %v989
    %1441 = vmatpush1.bf16.msra.mxu0 %v988
    %1442 = vmatprep.mubr.bf16.mxu0 %v277
    %1443 = vmatmul.mubr.bf16.gmra.mrb[0].mxu0 %v276
    %v1444 = vpop.f32.mrb[0].mxu0
    %v1445 = vadd.f32 %v1404, %v1444
    %v1446 = vpop.f32.mrb[0].mxu0
    %v1447 = vadd.f32 %v1406, %v1446
    %v1448 = vpop.f32.mrb[0].mxu0
    %v1449 = vpop.f32.mrb[0].mxu0
    %1450 = vdwg.mxu0
    %1451 = vmatprep.subr.bf16.mxu0 %v993
    %1452 = vmatpush1.bf16.msra.mxu0 %v992
    %1453 = vmatprep.subr.bf16.mxu0 %v997
    %1454 = vmatpush1.bf16.msra.mxu0 %v996
    %1455 = vmatprep.subr.bf16.mxu0 %v1001
    %1456 = vmatpush1.bf16.msra.mxu0 %v1000
    %1457 = vmatprep.subr.bf16.mxu0 %v1005
    %1458 = vmatpush1.bf16.msra.mxu0 %v1004
    %1459 = vmatprep.subr.bf16.mxu0 %v1009
    %1460 = vmatpush1.bf16.msra.mxu0 %v1008
    %1461 = vmatprep.subr.bf16.mxu0 %v1013
    %1462 = vmatpush1.bf16.msra.mxu0 %v1012
    %1463 = vmatprep.subr.bf16.mxu0 %v1017
    %1464 = vmatpush1.bf16.msra.mxu0 %v1016
    %1465 = vmatprep.subr.bf16.mxu0 %v1021
    %1466 = vmatpush1.bf16.msra.mxu0 %v1020
    %1467 = vmatprep.subr.bf16.mxu0 %v1025
    %1468 = vmatpush1.bf16.msra.mxu0 %v1024
    %1469 = vmatprep.subr.bf16.mxu0 %v1029
    %1470 = vmatpush1.bf16.msra.mxu0 %v1028
    %1471 = vmatprep.subr.bf16.mxu0 %v1033
    %1472 = vmatpush1.bf16.msra.mxu0 %v1032
    %1473 = vmatprep.subr.bf16.mxu0 %v1037
    %1474 = vmatpush1.bf16.msra.mxu0 %v1036
    %1475 = vmatprep.subr.bf16.mxu0 %v1041
    %1476 = vmatpush1.bf16.msra.mxu0 %v1040
    %1477 = vmatprep.subr.bf16.mxu0 %v1045
    %1478 = vmatpush1.bf16.msra.mxu0 %v1044
    %1479 = vmatprep.subr.bf16.mxu0 %v1049
    %1480 = vmatpush1.bf16.msra.mxu0 %v1048
    %1481 = vmatprep.subr.bf16.mxu0 %v1053
    %1482 = vmatpush1.bf16.msra.mxu0 %v1052
    %1483 = vmatprep.mubr.bf16.mxu0 %v279
    %1484 = vmatmul.mubr.bf16.gmra.mrb[0].mxu0 %v278
    %v1485 = vpop.f32.mrb[0].mxu0
    %v1486 = vadd.f32 %v1445, %v1485
    %v1487 = vpop.f32.mrb[0].mxu0
    %v1488 = vadd.f32 %v1447, %v1487
    %v1489 = vpop.f32.mrb[0].mxu0
    %v1490 = vpop.f32.mrb[0].mxu0
    %1491 = vdwg.mxu0
    %v1492 = vadd.f32 %v66, %v1363
    %v1493 = vadd.f32 %v67, %v1365
    %v1494 = vadd.f32 %v68, %v1486
    %v1495 = vadd.f32 %v69, %v1488
    %1496 = vst [vmem:[#allocation2] sm:$0xff] %v1492
    %1497 = vst [vmem:[#allocation2 + $0x8] sm:$0xff] %v1493
    %1498 = vst [vmem:[#allocation2 + $0x10] sm:$0xff] %v1494
    %1499 = vst [vmem:[#allocation2 + $0x18] sm:$0xff] %v1495
    // Predicated region
    $region34: #{tpu_custom_call.1} parent=1 // pred_check
      %p1500 = pneg %p58
    $region35: #{tpu_custom_call.1} parent=1 // pred_check_branch
      %1502 = sbr.rel (%p1500) target = $region37
    $region36: #{tpu_custom_call.1} parent=1 // pred_region
      %v1503 = vld [vmem:[#allocation2] sm:$0xff]
      %v1504 = vld [vmem:[#allocation2 + $0x8] sm:$0xff]
      %v1505 = vld [vmem:[#allocation2 + $0x10] sm:$0xff]
      %v1506 = vld [vmem:[#allocation2 + $0x18] sm:$0xff]
      %v1507 = vpack.c.bf16 %v1503, %v1503
      %v1508 = vpack.c.bf16 %v1504, %v1504
      %v1509 = vpack.c.bf16 %v1505, %v1505
      %v1510 = vpack.c.bf16 %v1506, %v1506
      %v1511 = vld [vmem:[#allocation8] sm:$0xf]
      %v1512 = vld [vmem:[#allocation8 + $0x4] sm:$0xf]
      %v1513 = vld [vmem:[#allocation8 + $0x8] sm:$0xf]
      %v1514 = vld [vmem:[#allocation8 + $0xc] sm:$0xf]
      %v1515 = vld [vmem:[#allocation8 + $0x10] sm:$0xf]
      %v1516 = vld [vmem:[#allocation8 + $0x14] sm:$0xf]
      %v1517 = vld [vmem:[#allocation8 + $0x18] sm:$0xf]
      %v1518 = vld [vmem:[#allocation8 + $0x1c] sm:$0xf]
      %v1519 = vld [vmem:[#allocation8 + $0x20] sm:$0xf]
      %v1520 = vld [vmem:[#allocation8 + $0x24] sm:$0xf]
      %v1521 = vld [vmem:[#allocation8 + $0x28] sm:$0xf]
      %v1522 = vld [vmem:[#allocation8 + $0x2c] sm:$0xf]
      %v1523 = vld [vmem:[#allocation8 + $0x30] sm:$0xf]
      %v1524 = vld [vmem:[#allocation8 + $0x34] sm:$0xf]
      %v1525 = vld [vmem:[#allocation8 + $0x38] sm:$0xf]
      %v1526 = vld [vmem:[#allocation8 + $0x3c] sm:$0xf]
      %v1527 = vld [vmem:[#allocation8 + $0x40] sm:$0xf]
      %v1528 = vld [vmem:[#allocation8 + $0x44] sm:$0xf]
      %v1529 = vld [vmem:[#allocation8 + $0x48] sm:$0xf]
      %v1530 = vld [vmem:[#allocation8 + $0x4c] sm:$0xf]
      %v1531 = vld [vmem:[#allocation8 + $0x50] sm:$0xf]
      %v1532 = vld [vmem:[#allocation8 + $0x54] sm:$0xf]
      %v1533 = vld [vmem:[#allocation8 + $0x58] sm:$0xf]
      %v1534 = vld [vmem:[#allocation8 + $0x5c] sm:$0xf]
      %v1535 = vld [vmem:[#allocation8 + $0x60] sm:$0xf]
      %v1536 = vld [vmem:[#allocation8 + $0x64] sm:$0xf]
      %v1537 = vld [vmem:[#allocation8 + $0x68] sm:$0xf]
      %v1538 = vld [vmem:[#allocation8 + $0x6c] sm:$0xf]
      %v1539 = vld [vmem:[#allocation8 + $0x70] sm:$0xf]
      %v1540 = vld [vmem:[#allocation8 + $0x74] sm:$0xf]
      %v1541 = vld [vmem:[#allocation8 + $0x78] sm:$0xf]
      %v1542 = vld [vmem:[#allocation8 + $0x7c] sm:$0xf]
      %v1543 = vld [vmem:[#allocation8 + $0x80] sm:$0xf]
      %v1544 = vld [vmem:[#allocation8 + $0x84] sm:$0xf]
      %v1545 = vld [vmem:[#allocation8 + $0x88] sm:$0xf]
      %v1546 = vld [vmem:[#allocation8 + $0x8c] sm:$0xf]
      %v1547 = vld [vmem:[#allocation8 + $0x90] sm:$0xf]
      %v1548 = vld [vmem:[#allocation8 + $0x94] sm:$0xf]
      %v1549 = vld [vmem:[#allocation8 + $0x98] sm:$0xf]
      %v1550 = vld [vmem:[#allocation8 + $0x9c] sm:$0xf]
      %v1551 = vld [vmem:[#allocation8 + $0xa0] sm:$0xf]
      %v1552 = vld [vmem:[#allocation8 + $0xa4] sm:$0xf]
      %v1553 = vld [vmem:[#allocation8 + $0xa8] sm:$0xf]
      %v1554 = vld [vmem:[#allocation8 + $0xac] sm:$0xf]
      %v1555 = vld [vmem:[#allocation8 + $0xb0] sm:$0xf]
      %v1556 = vld [vmem:[#allocation8 + $0xb4] sm:$0xf]
      %v1557 = vld [vmem:[#allocation8 + $0xb8] sm:$0xf]
      %v1558 = vld [vmem:[#allocation8 + $0xbc] sm:$0xf]
      %v1559 = vld [vmem:[#allocation8 + $0xc0] sm:$0xf]
      %v1560 = vld [vmem:[#allocation8 + $0xc4] sm:$0xf]
      %v1561 = vld [vmem:[#allocation8 + $0xc8] sm:$0xf]
      %v1562 = vld [vmem:[#allocation8 + $0xcc] sm:$0xf]
      %v1563 = vld [vmem:[#allocation8 + $0xd0] sm:$0xf]
      %v1564 = vld [vmem:[#allocation8 + $0xd4] sm:$0xf]
      %v1565 = vld [vmem:[#allocation8 + $0xd8] sm:$0xf]
      %v1566 = vld [vmem:[#allocation8 + $0xdc] sm:$0xf]
      %v1567 = vld [vmem:[#allocation8 + $0xe0] sm:$0xf]
      %v1568 = vld [vmem:[#allocation8 + $0xe4] sm:$0xf]
      %v1569 = vld [vmem:[#allocation8 + $0xe8] sm:$0xf]
      %v1570 = vld [vmem:[#allocation8 + $0xec] sm:$0xf]
      %v1571 = vld [vmem:[#allocation8 + $0xf0] sm:$0xf]
      %v1572 = vld [vmem:[#allocation8 + $0xf4] sm:$0xf]
      %v1573 = vld [vmem:[#allocation8 + $0xf8] sm:$0xf]
      %v1574 = vld [vmem:[#allocation8 + $0xfc] sm:$0xf]
      %v1575 = vld [vmem:[%s3] sm:$0x1]
      %v1577 = vlaneseq
      %v1578 = vshrl.u32 %v1577, 7
      %v1579 = vsub.s32 0, %v1578
      %v1580 = vrot.slane %v1575, %v1579
      %v1646 = vunpack.c.l.b16 %v1511
      %v1647 = vunpack.c.l.b16 %v1512
      %v1648 = vunpack.c.l.b16 %v1513
      %v1649 = vunpack.c.l.b16 %v1514
      %v1650 = vunpack.c.l.b16 %v1515
      %v1651 = vunpack.c.l.b16 %v1516
      %v1652 = vunpack.c.l.b16 %v1517
      %v1653 = vunpack.c.l.b16 %v1518
      %v1654 = vunpack.c.l.b16 %v1519
      %v1655 = vunpack.c.l.b16 %v1520
      %v1656 = vunpack.c.l.b16 %v1521
      %v1657 = vunpack.c.l.b16 %v1522
      %v1658 = vunpack.c.l.b16 %v1523
      %v1659 = vunpack.c.l.b16 %v1524
      %v1660 = vunpack.c.l.b16 %v1525
      %v1661 = vunpack.c.l.b16 %v1526
      %v1662 = vunpack.c.l.b16 %v1527
      %v1663 = vunpack.c.l.b16 %v1528
      %v1664 = vunpack.c.l.b16 %v1529
      %v1665 = vunpack.c.l.b16 %v1530
      %v1666 = vunpack.c.l.b16 %v1531
      %v1667 = vunpack.c.l.b16 %v1532
      %v1668 = vunpack.c.l.b16 %v1533
      %v1669 = vunpack.c.l.b16 %v1534
      %v1670 = vunpack.c.l.b16 %v1535
      %v1671 = vunpack.c.l.b16 %v1536
      %v1672 = vunpack.c.l.b16 %v1537
      %v1673 = vunpack.c.l.b16 %v1538
      %v1674 = vunpack.c.l.b16 %v1539
      %v1675 = vunpack.c.l.b16 %v1540
      %v1676 = vunpack.c.l.b16 %v1541
      %v1677 = vunpack.c.l.b16 %v1542
      %v1678 = vunpack.c.l.b16 %v1543
      %v1679 = vunpack.c.l.b16 %v1544
      %v1680 = vunpack.c.l.b16 %v1545
      %v1681 = vunpack.c.l.b16 %v1546
      %v1682 = vunpack.c.l.b16 %v1547
      %v1683 = vunpack.c.l.b16 %v1548
      %v1684 = vunpack.c.l.b16 %v1549
      %v1685 = vunpack.c.l.b16 %v1550
      %v1686 = vunpack.c.l.b16 %v1551
      %v1687 = vunpack.c.l.b16 %v1552
      %v1688 = vunpack.c.l.b16 %v1553
      %v1689 = vunpack.c.l.b16 %v1554
      %v1690 = vunpack.c.l.b16 %v1555
      %v1691 = vunpack.c.l.b16 %v1556
      %v1692 = vunpack.c.l.b16 %v1557
      %v1693 = vunpack.c.l.b16 %v1558
      %v1694 = vunpack.c.l.b16 %v1559
      %v1695 = vunpack.c.l.b16 %v1560
      %v1696 = vunpack.c.l.b16 %v1561
      %v1697 = vunpack.c.l.b16 %v1562
      %v1698 = vunpack.c.l.b16 %v1563
      %v1699 = vunpack.c.l.b16 %v1564
      %v1700 = vunpack.c.l.b16 %v1565
      %v1701 = vunpack.c.l.b16 %v1566
      %v1702 = vunpack.c.l.b16 %v1567
      %v1703 = vunpack.c.l.b16 %v1568
      %v1704 = vunpack.c.l.b16 %v1569
      %v1705 = vunpack.c.l.b16 %v1570
      %v1706 = vunpack.c.l.b16 %v1571
      %v1707 = vunpack.c.l.b16 %v1572
      %v1708 = vunpack.c.l.b16 %v1573
      %v1709 = vunpack.c.l.b16 %v1574
      %v1710 = vpack.c.b16 %v1647, %v1646
      %v1711 = vpack.c.b16 %v1649, %v1648
      %v1712 = vpack.c.b16 %v1651, %v1650
      %v1713 = vpack.c.b16 %v1653, %v1652
      %v1714 = vpack.c.b16 %v1655, %v1654
      %v1715 = vpack.c.b16 %v1657, %v1656
      %v1716 = vpack.c.b16 %v1659, %v1658
      %v1717 = vpack.c.b16 %v1661, %v1660
      %v1718 = vpack.c.b16 %v1663, %v1662
      %v1719 = vpack.c.b16 %v1665, %v1664
      %v1720 = vpack.c.b16 %v1667, %v1666
      %v1721 = vpack.c.b16 %v1669, %v1668
      %v1722 = vpack.c.b16 %v1671, %v1670
      %v1723 = vpack.c.b16 %v1673, %v1672
      %v1724 = vpack.c.b16 %v1675, %v1674
      %v1725 = vpack.c.b16 %v1677, %v1676
      %v1726 = vpack.c.b16 %v1679, %v1678
      %v1727 = vpack.c.b16 %v1681, %v1680
      %v1728 = vpack.c.b16 %v1683, %v1682
      %v1729 = vpack.c.b16 %v1685, %v1684
      %v1730 = vpack.c.b16 %v1687, %v1686
      %v1731 = vpack.c.b16 %v1689, %v1688
      %v1732 = vpack.c.b16 %v1691, %v1690
      %v1733 = vpack.c.b16 %v1693, %v1692
      %v1734 = vpack.c.b16 %v1695, %v1694
      %v1735 = vpack.c.b16 %v1697, %v1696
      %v1736 = vpack.c.b16 %v1699, %v1698
      %v1737 = vpack.c.b16 %v1701, %v1700
      %v1738 = vpack.c.b16 %v1703, %v1702
      %v1739 = vpack.c.b16 %v1705, %v1704
      %v1740 = vpack.c.b16 %v1707, %v1706
      %v1741 = vpack.c.b16 %v1709, %v1708
      %1774 = vmatprep.subr.bf16.mxu0 0
      %1775 = vmatpush1.bf16.msra.mxu0 %v1710
      %1776 = vmatprep.subr.bf16.mxu0 0
      %1777 = vmatpush1.bf16.msra.mxu0 %v1711
      %1778 = vmatprep.subr.bf16.mxu0 0
      %1779 = vmatpush1.bf16.msra.mxu0 %v1712
      %1780 = vmatprep.subr.bf16.mxu0 0
      %1781 = vmatpush1.bf16.msra.mxu0 %v1713
      %1782 = vmatprep.subr.bf16.mxu0 0
      %1783 = vmatpush1.bf16.msra.mxu0 %v1714
      %1784 = vmatprep.subr.bf16.mxu0 0
      %1785 = vmatpush1.bf16.msra.mxu0 %v1715
      %1786 = vmatprep.subr.bf16.mxu0 0
      %1787 = vmatpush1.bf16.msra.mxu0 %v1716
      %1788 = vmatprep.subr.bf16.mxu0 0
      %1789 = vmatpush1.bf16.msra.mxu0 %v1717
      %1790 = vmatprep.subr.bf16.mxu0 0
      %1791 = vmatpush1.bf16.msra.mxu0 %v1718
      %1792 = vmatprep.subr.bf16.mxu0 0
      %1793 = vmatpush1.bf16.msra.mxu0 %v1719
      %1794 = vmatprep.subr.bf16.mxu0 0
      %1795 = vmatpush1.bf16.msra.mxu0 %v1720
      %1796 = vmatprep.subr.bf16.mxu0 0
      %1797 = vmatpush1.bf16.msra.mxu0 %v1721
      %1798 = vmatprep.subr.bf16.mxu0 0
      %1799 = vmatpush1.bf16.msra.mxu0 %v1722
      %1800 = vmatprep.subr.bf16.mxu0 0
      %1801 = vmatpush1.bf16.msra.mxu0 %v1723
      %1802 = vmatprep.subr.bf16.mxu0 0
      %1803 = vmatpush1.bf16.msra.mxu0 %v1724
      %1804 = vmatprep.subr.bf16.mxu0 0
      %1805 = vmatpush1.bf16.msra.mxu0 %v1725
      %1806 = vmatprep.mubr.bf16.mxu0 %v1508
      %1807 = vmatmul.mubr.bf16.gmra.mrb[0].mxu0 %v1507
      %v1808 = vpop.f32.mrb[0].mxu0
      %v1809 = vadd.f32 %v1580, %v1808
      %v1810 = vpop.f32.mrb[0].mxu0
      %v1811 = vpop.f32.mrb[0].mxu0
      %v1812 = vpop.f32.mrb[0].mxu0
      %1813 = vdwg.mxu0
      %1814 = vmatprep.subr.bf16.mxu0 0
      %1815 = vmatpush1.bf16.msra.mxu0 %v1726
      %1816 = vmatprep.subr.bf16.mxu0 0
      %1817 = vmatpush1.bf16.msra.mxu0 %v1727
      %1818 = vmatprep.subr.bf16.mxu0 0
      %1819 = vmatpush1.bf16.msra.mxu0 %v1728
      %1820 = vmatprep.subr.bf16.mxu0 0
      %1821 = vmatpush1.bf16.msra.mxu0 %v1729
      %1822 = vmatprep.subr.bf16.mxu0 0
      %1823 = vmatpush1.bf16.msra.mxu0 %v1730
      %1824 = vmatprep.subr.bf16.mxu0 0
      %1825 = vmatpush1.bf16.msra.mxu0 %v1731
      %1826 = vmatprep.subr.bf16.mxu0 0
      %1827 = vmatpush1.bf16.msra.mxu0 %v1732
      %1828 = vmatprep.subr.bf16.mxu0 0
      %1829 = vmatpush1.bf16.msra.mxu0 %v1733
      %1830 = vmatprep.subr.bf16.mxu0 0
      %1831 = vmatpush1.bf16.msra.mxu0 %v1734
      %1832 = vmatprep.subr.bf16.mxu0 0
      %1833 = vmatpush1.bf16.msra.mxu0 %v1735
      %1834 = vmatprep.subr.bf16.mxu0 0
      %1835 = vmatpush1.bf16.msra.mxu0 %v1736
      %1836 = vmatprep.subr.bf16.mxu0 0
      %1837 = vmatpush1.bf16.msra.mxu0 %v1737
      %1838 = vmatprep.subr.bf16.mxu0 0
      %1839 = vmatpush1.bf16.msra.mxu0 %v1738
      %1840 = vmatprep.subr.bf16.mxu0 0
      %1841 = vmatpush1.bf16.msra.mxu0 %v1739
      %1842 = vmatprep.subr.bf16.mxu0 0
      %1843 = vmatpush1.bf16.msra.mxu0 %v1740
      %1844 = vmatprep.subr.bf16.mxu0 0
      %1845 = vmatpush1.bf16.msra.mxu0 %v1741
      %1846 = vmatprep.mubr.bf16.mxu0 %v1510
      %1847 = vmatmul.mubr.bf16.gmra.mrb[0].mxu0 %v1509
      %v1848 = vpop.f32.mrb[0].mxu0
      %v1849 = vadd.f32 %v1809, %v1848
      %v1850 = vpop.f32.mrb[0].mxu0
      %v1851 = vpop.f32.mrb[0].mxu0
      %v1852 = vpop.f32.mrb[0].mxu0
      %1853 = vdwg.mxu0
      %1854 = vst [vmem:[#allocation9] sm:$0xff] %v1849
    $region37: #{tpu_custom_call.1} parent=1 // pred_fallthru
      _
    // Predicated region
    $region38: #{tpu_custom_call.1} parent=1 // pred_check
      _
    $region39: #{tpu_custom_call.1} parent=1 // pred_check_branch
      %1856 = sbr.rel (0) target = $region41
    $region40: #{tpu_custom_call.1} parent=1 // pred_region
      %s1858 = ssub.s32 128, 128
      %1859 = vsyncadd [#allocation5], %s1858
      %s1861 = sshll.u32 [#allocation9], 4
      %s1862 = int_to_ptr.vmem [resolvable:$true] %s1861
      %1864 = dma.vmem_to_hbm [thread:$0]  %s1862, 128, %s4, [#allocation5]
    $region41: #{tpu_custom_call.1} parent=1 // pred_fallthru
      _
    // Predicated region
    $region42: #{tpu_custom_call.1} parent=1 // pred_check
      _
    $region43: #{tpu_custom_call.1} parent=1 // pred_check_branch
      %1866 = sbr.rel (0) target = $region45
    $region44: #{tpu_custom_call.1} parent=1 // pred_region
      %1867 = dma.done [#allocation5], 128
    $region45: #{tpu_custom_call.1} parent=1 // pred_fallthru
      _
    %1868 = vsyncpa [#allocation4], 1
    %1869 = vsyncpa [#allocation7], 1
    %1870 = vsyncpa [#allocation5], 1

// kernel: tpu_custom_call.1
$region0: #{tpu_custom_call.1}
  #allocation0 [shape = 'u32[]', space=smem, size = 0x4, offset = 0x4, fixed_abs, tag = 'smem constant byte address 0x4 - core index']
  #allocation1 [shape = 'u32[144,128]{1,0:T(1,128)}', space=vmem, size = 0x12000, scoped, tag = 'internal scratch']
  #allocation2 [shape = 'f32[8,512]{1,0:T(8,128)}', space=vmem, size = 0x4000, scoped, tag = 'scratch operand']
  %s0 = inlined_call_operand.hbm [shape: bf16[8,768], index: 0, kind: input, shape index: {}]
  %s1 = inlined_call_operand.hbm [shape: bf16[768,512], index: 1, kind: input, shape index: {}]
  %s2 = inlined_call_operand.hbm [shape: bf16[512,128], index: 2, kind: input, shape index: {}]
  %s3 = inlined_call_operand.vmem [shape: f32[1,128], index: 3, kind: input, shape index: {}]
  %s4 = inlined_call_operand.hbm [shape: f32[8,128], index: 4, kind: output, shape index: {}]
  %s5 = sld [smem:[#allocation0]]
  $region46: #{tpu_custom_call.1} parent=0
    _
  %s7 = ssub.s32 1, %s5
  %s8 = scalar_select 0, %s7, %s5
  $region1: #{tpu_custom_call.1} parent=0
    #allocation3 [shape = 'u8[12288]{0}', space=vmem, size = 0x3000, scoped, tag = 'input window, operand 0, single buffered']
    #allocation4 [shape = 's32[1]{0}', space=sflag, size = 0x4, scoped, tag = 'scoped memory for tpu_custom_call.1']
    #allocation5 [shape = 's32[1]{0}', space=sflag, size = 0x4, scoped, tag = 'scoped memory for tpu_custom_call.1']
    #allocation6 [shape = 'u8[786432]{0}', space=vmem, size = 0xc0000, scoped, tag = 'input window, operand 1, single buffered']
    #allocation7 [shape = 's32[1]{0}', space=sflag, size = 0x4, scoped, tag = 'scoped memory for tpu_custom_call.1']
    #allocation8 [shape = 'u8[131072]{0}', space=vmem, size = 0x20000, scoped, tag = 'input window, operand 2, single buffered']
    #allocation9 [shape = 'u8[4096]{0}', space=vmem, size = 0x1000, scoped, tag = 'output window, operand 0, single buffered']
    %9 = vsyncpa [#allocation4], 0
    %10 = vsyncpa [#allocation7], 0
    %11 = vsyncpa [#allocation5], 0
    // Predicated region
    $region2: #{tpu_custom_call.1} parent=1 // pred_check
      _
    $region3: #{tpu_custom_call.1} parent=1 // pred_check_branch
      %13 = sbr.rel (0) target = $region5
    $region4: #{tpu_custom_call.1} parent=1 // pred_region
      %s15 = ssub.s32 384, 384
      %16 = vsyncadd [#allocation4], %s15
      %s18 = sshll.u32 [#allocation3], 4
      %s19 = int_to_ptr.vmem [resolvable:$true] %s18
      %21 = dma.hbm_to_vmem [thread:$0]  %s0, 384, %s19, [#allocation4]
    $region5: #{tpu_custom_call.1} parent=1 // pred_fallthru
      _
    // Predicated region
    $region6: #{tpu_custom_call.1} parent=1 // pred_check
      _
    $region7: #{tpu_custom_call.1} parent=1 // pred_check_branch
      %23 = sbr.rel (0) target = $region9
    $region8: #{tpu_custom_call.1} parent=1 // pred_region
      %s25 = ssub.s32 24576, 24576
      %26 = vsyncadd [#allocation7], %s25
      %s27 = sshll.u32 [#allocation6], 4
      %s28 = int_to_ptr.vmem [resolvable:$true] %s27
      %33 = dma.hbm_to_vmem [thread:$0]  %s1, 24576, %s28, [#allocation7], 256, 256, 16
    $region9: #{tpu_custom_call.1} parent=1 // pred_fallthru
      _
    // Predicated region
    $region10: #{tpu_custom_call.1} parent=1 // pred_check
      _
    $region11: #{tpu_custom_call.1} parent=1 // pred_check_branch
      %35 = sbr.rel (0) target = $region13
    $region12: #{tpu_custom_call.1} parent=1 // pred_region
      %s37 = ssub.s32 4096, 4096
      %38 = vsyncadd [#allocation7], %s37
      %s39 = sshll.u32 [#allocation8], 4
      %s40 = int_to_ptr.vmem [resolvable:$true] %s39
      %45 = dma.hbm_to_vmem [thread:$0]  %s2, 4096, %s40, [#allocation7], 64, 64, 4
    $region13: #{tpu_custom_call.1} parent=1 // pred_fallthru
      _
    // Predicated region
    $region14: #{tpu_custom_call.1} parent=1 // pred_check
      _
    $region15: #{tpu_custom_call.1} parent=1 // pred_check_branch
      %47 = sbr.rel (0) target = $region17
    $region16: #{tpu_custom_call.1} parent=1 // pred_region
      _
    $region17: #{tpu_custom_call.1} parent=1 // pred_fallthru
      _
    // Predicated region
    $region18: #{tpu_custom_call.1} parent=1 // pred_check
      _
    $region19: #{tpu_custom_call.1} parent=1 // pred_check_branch
      %49 = sbr.rel (0) target = $region21
    $region20: #{tpu_custom_call.1} parent=1 // pred_region
      %50 = dma.done [#allocation4], 384
    $region21: #{tpu_custom_call.1} parent=1 // pred_fallthru
      _
    // Predicated region
    $region22: #{tpu_custom_call.1} parent=1 // pred_check
      _
    $region23: #{tpu_custom_call.1} parent=1 // pred_check_branch
      %52 = sbr.rel (0) target = $region25
    $region24: #{tpu_custom_call.1} parent=1 // pred_region
      %53 = dma.done [#allocation7], 24576
    $region25: #{tpu_custom_call.1} parent=1 // pred_fallthru
      _
    // Predicated region
    $region26: #{tpu_custom_call.1} parent=1 // pred_check
      _
    $region27: #{tpu_custom_call.1} parent=1 // pred_check_branch
      %55 = sbr.rel (0) target = $region29
    $region28: #{tpu_custom_call.1} parent=1 // pred_region
      %56 = dma.done [#allocation7], 4096
    $region29: #{tpu_custom_call.1} parent=1 // pred_fallthru
      _
    %p58 = scmp.eq.s32.totalorder 0, 0
    // Predicated region
    $region30: #{tpu_custom_call.1} parent=1 // pred_check
      %p59 = pneg %p58
    $region31: #{tpu_custom_call.1} parent=1 // pred_check_branch
      %61 = sbr.rel (%p59) target = $region33
    $region32: #{tpu_custom_call.1} parent=1 // pred_region
      %62 = vst [vmem:[#allocation2] sm:$0xff] 0.0
      %63 = vst [vmem:[#allocation2 + $0x8] sm:$0xff] 0.0
      %64 = vst [vmem:[#allocation2 + $0x10] sm:$0xff] 0.0
      %65 = vst [vmem:[#allocation2 + $0x18] sm:$0xff] 0.0
    $region33: #{tpu_custom_call.1} parent=1 // pred_fallthru
      _
    %v66 = vld [vmem:[#allocation2] sm:$0xff]
    %v67 = vld [vmem:[#allocation2 + $0x8] sm:$0xff]
    %v68 = vld [vmem:[#allocation2 + $0x10] sm:$0xff]
    %v69 = vld [vmem:[#allocation2 + $0x18] sm:$0xff]
    %v70 = vld [vmem:[#allocation3] sm:$0xff]
    %v71 = vld [vmem:[#allocation3 + $0x8] sm:$0xff]
    %v72 = vld [vmem:[#allocation3 + $0x10] sm:$0xff]
    %v73 = vld [vmem:[#allocation6] sm:$0xff]
    %v74 = vld [vmem:[#allocation6 + $0x8] sm:$0xff]
    %v75 = vld [vmem:[#allocation6 + $0x10] sm:$0xff]
    %v76 = vld [vmem:[#allocation6 + $0x18] sm:$0xff]
    %v77 = vld [vmem:[#allocation6 + $0x20] sm:$0xff]
    %v78 = vld [vmem:[#allocation6 + $0x28] sm:$0xff]
    %v79 = vld [vmem:[#allocation6 + $0x30] sm:$0xff]
    %v80 = vld [vmem:[#allocation6 + $0x38] sm:$0xff]
    %v81 = vld [vmem:[#allocation6 + $0x40] sm:$0xff]
    %v82 = vld [vmem:[#allocation6 + $0x48] sm:$0xff]
    %v83 = vld [vmem:[#allocation6 + $0x50] sm:$0xff]
    %v84 = vld [vmem:[#allocation6 + $0x58] sm:$0xff]
    %v85 = vld [vmem:[#allocation6 + $0x60] sm:$0xff]
    %v86 = vld [vmem:[#allocation6 + $0x68] sm:$0xff]
    %v87 = vld [vmem:[#allocation6 + $0x70] sm:$0xff]
    %v88 = vld [vmem:[#allocation6 + $0x78] sm:$0xff]
    %v89 = vld [vmem:[#allocation6 + $0x80] sm:$0xff]
    %v90 = vld [vmem:[#allocation6 + $0x88] sm:$0xff]
    %v91 = vld [vmem:[#allocation6 + $0x90] sm:$0xff]
    %v92 = vld [vmem:[#allocation6 + $0x98] sm:$0xff]
    %v93 = vld [vmem:[#allocation6 + $0xa0] sm:$0xff]
    %v94 = vld [vmem:[#allocation6 + $0xa8] sm:$0xff]
    %v95 = vld [vmem:[#allocation6 + $0xb0] sm:$0xff]
    %v96 = vld [vmem:[#allocation6 + $0xb8] sm:$0xff]
    %v97 = vld [vmem:[#allocation6 + $0xc0] sm:$0xff]
    %v98 = vld [vmem:[#allocation6 + $0xc8] sm:$0xff]
    %v99 = vld [vmem:[#allocation6 + $0xd0] sm:$0xff]
    %v100 = vld [vmem:[#allocation6 + $0xd8] sm:$0xff]
    %v101 = vld [vmem:[#allocation6 + $0xe0] sm:$0xff]
    %v102 = vld [vmem:[#allocation6 + $0xe8] sm:$0xff]
    %v103 = vld [vmem:[#allocation6 + $0xf0] sm:$0xff]
    %v104 = vld [vmem:[#allocation6 + $0xf8] sm:$0xff]
    %v105 = vld [vmem:[#allocation6 + $0x100] sm:$0xff]
    %v106 = vld [vmem:[#allocation6 + $0x108] sm:$0xff]
    %v107 = vld [vmem:[#allocation6 + $0x110] sm:$0xff]
    %v108 = vld [vmem:[#allocation6 + $0x118] sm:$0xff]
    %v109 = vld [vmem:[#allocation6 + $0x120] sm:$0xff]
    %v110 = vld [vmem:[#allocation6 + $0x128] sm:$0xff]
    %v111 = vld [vmem:[#allocation6 + $0x130] sm:$0xff]
    %v112 = vld [vmem:[#allocation6 + $0x138] sm:$0xff]
    %v113 = vld [vmem:[#allocation6 + $0x140] sm:$0xff]
    %v114 = vld [vmem:[#allocation6 + $0x148] sm:$0xff]
    %v115 = vld [vmem:[#allocation6 + $0x150] sm:$0xff]
    %v116 = vld [vmem:[#allocation6 + $0x158] sm:$0xff]
    %v117 = vld [vmem:[#allocation6 + $0x160] sm:$0xff]
    %v118 = vld [vmem:[#allocation6 + $0x168] sm:$0xff]
    %v119 = vld [vmem:[#allocation6 + $0x170] sm:$0xff]
    %v120 = vld [vmem:[#allocation6 + $0x178] sm:$0xff]
    %v121 = vld [vmem:[#allocation6 + $0x180] sm:$0xff]
    %v122 = vld [vmem:[#allocation6 + $0x188] sm:$0xff]
    %v123 = vld [vmem:[#allocation6 + $0x190] sm:$0xff]
    %v124 = vld [vmem:[#allocation6 + $0x198] sm:$0xff]
    %v125 = vld [vmem:[#allocation6 + $0x1a0] sm:$0xff]
    %v126 = vld [vmem:[#allocation6 + $0x1a8] sm:$0xff]
    %v127 = vld [vmem:[#allocation6 + $0x1b0] sm:$0xff]
    %v128 = vld [vmem:[#allocation6 + $0x1b8] sm:$0xff]
    %v129 = vld [vmem:[#allocation6 + $0x1c0] sm:$0xff]
    %v130 = vld [vmem:[#allocation6 + $0x1c8] sm:$0xff]
    %v131 = vld [vmem:[#allocation6 + $0x1d0] sm:$0xff]
    %v132 = vld [vmem:[#allocation6 + $0x1d8] sm:$0xff]
    %v133 = vld [vmem:[#allocation6 + $0x1e0] sm:$0xff]
    %v134 = vld [vmem:[#allocation6 + $0x1e8] sm:$0xff]
    %v135 = vld [vmem:[#allocation6 + $0x1f0] sm:$0xff]
    %v136 = vld [vmem:[#allocation6 + $0x1f8] sm:$0xff]
    %v137 = vld [vmem:[#allocation6 + $0x200] sm:$0xff]
    %v138 = vld [vmem:[#allocation6 + $0x208] sm:$0xff]
    %v139 = vld [vmem:[#allocation6 + $0x210] sm:$0xff]
    %v140 = vld [vmem:[#allocation6 + $0x218] sm:$0xff]
    %v141 = vld [vmem:[#allocation6 + $0x220] sm:$0xff]
    %v142 = vld [vmem:[#allocation6 + $0x228] sm:$0xff]
    %v143 = vld [vmem:[#allocation6 + $0x230] sm:$0xff]
    %v144 = vld [vmem:[#allocation6 + $0x238] sm:$0xff]
    %v145 = vld [vmem:[#allocation6 + $0x240] sm:$0xff]
    %v146 = vld [vmem:[#allocation6 + $0x248] sm:$0xff]
    %v147 = vld [vmem:[#allocation6 + $0x250] sm:$0xff]
    %v148 = vld [vmem:[#allocation6 + $0x258] sm:$0xff]
    %v149 = vld [vmem:[#allocation6 + $0x260] sm:$0xff]
    %v150 = vld [vmem:[#allocation6 + $0x268] sm:$0xff]
    %v151 = vld [vmem:[#allocation6 + $0x270] sm:$0xff]
    %v152 = vld [vmem:[#allocation6 + $0x278] sm:$0xff]
    %v153 = vld [vmem:[#allocation6 + $0x280] sm:$0xff]
    %v154 = vld [vmem:[#allocation6 + $0x288] sm:$0xff]
    %v155 = vld [vmem:[#allocation6 + $0x290] sm:$0xff]
    %v156 = vld [vmem:[#allocation6 + $0x298] sm:$0xff]
    %v157 = vld [vmem:[#allocation6 + $0x2a0] sm:$0xff]
    %v158 = vld [vmem:[#allocation6 + $0x2a8] sm:$0xff]
    %v159 = vld [vmem:[#allocation6 + $0x2b0] sm:$0xff]
    %v160 = vld [vmem:[#allocation6 + $0x2b8] sm:$0xff]
    %v161 = vld [vmem:[#allocation6 + $0x2c0] sm:$0xff]
    %v162 = vld [vmem:[#allocation6 + $0x2c8] sm:$0xff]
    %v163 = vld [vmem:[#allocation6 + $0x2d0] sm:$0xff]
    %v164 = vld [vmem:[#allocation6 + $0x2d8] sm:$0xff]
    %v165 = vld [vmem:[#allocation6 + $0x2e0] sm:$0xff]
    %v166 = vld [vmem:[#allocation6 + $0x2e8] sm:$0xff]
    %v167 = vld [vmem:[#allocation6 + $0x2f0] sm:$0xff]
    %v168 = vld [vmem:[#allocation6 + $0x2f8] sm:$0xff]
    %v169 = vld [vmem:[#allocation6 + $0x300] sm:$0xff]
    %v170 = vld [vmem:[#allocation6 + $0x308] sm:$0xff]
    %v171 = vld [vmem:[#allocation6 + $0x310] sm:$0xff]
    %v172 = vld [vmem:[#allocation6 + $0x318] sm:$0xff]
    %v173 = vld [vmem:[#allocation6 + $0x320] sm:$0xff]
    %v174 = vld [vmem:[#allocation6 + $0x328] sm:$0xff]
    %v175 = vld [vmem:[#allocation6 + $0x330] sm:$0xff]
    %v176 = vld [vmem:[#allocation6 + $0x338] sm:$0xff]
    %v177 = vld [vmem:[#allocation6 + $0x340] sm:$0xff]
    %v178 = vld [vmem:[#allocation6 + $0x348] sm:$0xff]
    %v179 = vld [vmem:[#allocation6 + $0x350] sm:$0xff]
    %v180 = vld [vmem:[#allocation6 + $0x358] sm:$0xff]
    %v181 = vld [vmem:[#allocation6 + $0x360] sm:$0xff]
    %v182 = vld [vmem:[#allocation6 + $0x368] sm:$0xff]
    %v183 = vld [vmem:[#allocation6 + $0x370] sm:$0xff]
    %v184 = vld [vmem:[#allocation6 + $0x378] sm:$0xff]
    %v185 = vld [vmem:[#allocation6 + $0x380] sm:$0xff]
    %v186 = vld [vmem:[#allocation6 + $0x388] sm:$0xff]
    %v187 = vld [vmem:[#allocation6 + $0x390] sm:$0xff]
    %v188 = vld [vmem:[#allocation6 + $0x398] sm:$0xff]
    %v189 = vld [vmem:[#allocation6 + $0x3a0] sm:$0xff]
    %v190 = vld [vmem:[#allocation6 + $0x3a8] sm:$0xff]
    %v191 = vld [vmem:[#allocation6 + $0x3b0] sm:$0xff]
    %v192 = vld [vmem:[#allocation6 + $0x3b8] sm:$0xff]
    %v193 = vld [vmem:[#allocation6 + $0x3c0] sm:$0xff]
    %v194 = vld [vmem:[#allocation6 + $0x3c8] sm:$0xff]
    %v195 = vld [vmem:[#allocation6 + $0x3d0] sm:$0xff]
    %v196 = vld [vmem:[#allocation6 + $0x3d8] sm:$0xff]
    %v197 = vld [vmem:[#allocation6 + $0x3e0] sm:$0xff]
    %v198 = vld [vmem:[#allocation6 + $0x3e8] sm:$0xff]
    %v199 = vld [vmem:[#allocation6 + $0x3f0] sm:$0xff]
    %v200 = vld [vmem:[#allocation6 + $0x3f8] sm:$0xff]
    %v201 = vld [vmem:[#allocation6 + $0x400] sm:$0xff]
    %v202 = vld [vmem:[#allocation6 + $0x408] sm:$0xff]
    %v203 = vld [vmem:[#allocation6 + $0x410] sm:$0xff]
    %v204 = vld [vmem:[#allocation6 + $0x418] sm:$0xff]
    %v205 = vld [vmem:[#allocation6 + $0x420] sm:$0xff]
    %v206 = vld [vmem:[#allocation6 + $0x428] sm:$0xff]
    %v207 = vld [vmem:[#allocation6 + $0x430] sm:$0xff]
    %v208 = vld [vmem:[#allocation6 + $0x438] sm:$0xff]
    %v209 = vld [vmem:[#allocation6 + $0x440] sm:$0xff]
    %v210 = vld [vmem:[#allocation6 + $0x448] sm:$0xff]
    %v211 = vld [vmem:[#allocation6 + $0x450] sm:$0xff]
    %v212 = vld [vmem:[#allocation6 + $0x458] sm:$0xff]
    %v213 = vld [vmem:[#allocation6 + $0x460] sm:$0xff]
    %v214 = vld [vmem:[#allocation6 + $0x468] sm:$0xff]
    %v215 = vld [vmem:[#allocation6 + $0x470] sm:$0xff]
    %v216 = vld [vmem:[#allocation6 + $0x478] sm:$0xff]
    %v217 = vld [vmem:[#allocation6 + $0x480] sm:$0xff]
    %v218 = vld [vmem:[#allocation6 + $0x488] sm:$0xff]
    %v219 = vld [vmem:[#allocation6 + $0x490] sm:$0xff]
    %v220 = vld [vmem:[#allocation6 + $0x498] sm:$0xff]
    %v221 = vld [vmem:[#allocation6 + $0x4a0] sm:$0xff]
    %v222 = vld [vmem:[#allocation6 + $0x4a8] sm:$0xff]
    %v223 = vld [vmem:[#allocation6 + $0x4b0] sm:$0xff]
    %v224 = vld [vmem:[#allocation6 + $0x4b8] sm:$0xff]
    %v225 = vld [vmem:[#allocation6 + $0x4c0] sm:$0xff]
    %v226 = vld [vmem:[#allocation6 + $0x4c8] sm:$0xff]
    %v227 = vld [vmem:[#allocation6 + $0x4d0] sm:$0xff]
    %v228 = vld [vmem:[#allocation6 + $0x4d8] sm:$0xff]
    %v229 = vld [vmem:[#allocation6 + $0x4e0] sm:$0xff]
    %v230 = vld [vmem:[#allocation6 + $0x4e8] sm:$0xff]
    %v231 = vld [vmem:[#allocation6 + $0x4f0] sm:$0xff]
    %v232 = vld [vmem:[#allocation6 + $0x4f8] sm:$0xff]
    %v233 = vld [vmem:[#allocation6 + $0x500] sm:$0xff]
    %v234 = vld [vmem:[#allocation6 + $0x508] sm:$0xff]
    %v235 = vld [vmem:[#allocation6 + $0x510] sm:$0xff]
    %v236 = vld [vmem:[#allocation6 + $0x518] sm:$0xff]
    %v237 = vld [vmem:[#allocation6 + $0x520] sm:$0xff]
    %v238 = vld [vmem:[#allocation6 + $0x528] sm:$0xff]
    %v239 = vld [vmem:[#allocation6 + $0x530] sm:$0xff]
    %v240 = vld [vmem:[#allocation6 + $0x538] sm:$0xff]
    %v241 = vld [vmem:[#allocation6 + $0x540] sm:$0xff]
    %v242 = vld [vmem:[#allocation6 + $0x548] sm:$0xff]
    %v243 = vld [vmem:[#allocation6 + $0x550] sm:$0xff]
    %v244 = vld [vmem:[#allocation6 + $0x558] sm:$0xff]
    %v245 = vld [vmem:[#allocation6 + $0x560] sm:$0xff]
    %v246 = vld [vmem:[#allocation6 + $0x568] sm:$0xff]
    %v247 = vld [vmem:[#allocation6 + $0x570] sm:$0xff]
    %v248 = vld [vmem:[#allocation6 + $0x578] sm:$0xff]
    %v249 = vld [vmem:[#allocation6 + $0x580] sm:$0xff]
    %v250 = vld [vmem:[#allocation6 + $0x588] sm:$0xff]
    %v251 = vld [vmem:[#allocation6 + $0x590] sm:$0xff]
    %v252 = vld [vmem:[#allocation6 + $0x598] sm:$0xff]
    %v253 = vld [vmem:[#allocation6 + $0x5a0] sm:$0xff]
    %v254 = vld [vmem:[#allocation6 + $0x5a8] sm:$0xff]
    %v255 = vld [vmem:[#allocation6 + $0x5b0] sm:$0xff]
    %v256 = vld [vmem:[#allocation6 + $0x5b8] sm:$0xff]
    %v257 = vld [vmem:[#allocation6 + $0x5c0] sm:$0xff]
    %v258 = vld [vmem:[#allocation6 + $0x5c8] sm:$0xff]
    %v259 = vld [vmem:[#allocation6 + $0x5d0] sm:$0xff]
    %v260 = vld [vmem:[#allocation6 + $0x5d8] sm:$0xff]
    %v261 = vld [vmem:[#allocation6 + $0x5e0] sm:$0xff]
    %v262 = vld [vmem:[#allocation6 + $0x5e8] sm:$0xff]
    %v263 = vld [vmem:[#allocation6 + $0x5f0] sm:$0xff]
    %v264 = vld [vmem:[#allocation6 + $0x5f8] sm:$0xff]
    %v268 = vunpack.c.l.b16 %v70
    %v269 = vunpack.c.h.b16 %v70
    %v270 = vunpack.c.l.b16 %v71
    %v271 = vunpack.c.h.b16 %v71
    %v272 = vunpack.c.l.b16 %v72
    %v273 = vunpack.c.h.b16 %v72
    %v274 = vpack.c.b16 %v268, %v268
    %v275 = vpack.c.b16 %v269, %v269
    %v276 = vpack.c.b16 %v270, %v270
    %v277 = vpack.c.b16 %v271, %v271
    %v278 = vpack.c.b16 %v272, %v272
    %v279 = vpack.c.b16 %v273, %v273
    %v478 = vunpack.c.l.b16 %v73
    %v479 = vunpack.c.h.b16 %v73
    %v480 = vunpack.c.l.b16 %v74
    %v481 = vunpack.c.h.b16 %v74
    %v482 = vunpack.c.l.b16 %v75
    %v483 = vunpack.c.h.b16 %v75
    %v484 = vunpack.c.l.b16 %v76
    %v485 = vunpack.c.h.b16 %v76
    %v486 = vunpack.c.l.b16 %v77
    %v487 = vunpack.c.h.b16 %v77
    %v488 = vunpack.c.l.b16 %v78
    %v489 = vunpack.c.h.b16 %v78
    %v490 = vunpack.c.l.b16 %v79
    %v491 = vunpack.c.h.b16 %v79
    %v492 = vunpack.c.l.b16 %v80
    %v493 = vunpack.c.h.b16 %v80
    %v494 = vunpack.c.l.b16 %v81
    %v495 = vunpack.c.h.b16 %v81
    %v496 = vunpack.c.l.b16 %v82
    %v497 = vunpack.c.h.b16 %v82
    %v498 = vunpack.c.l.b16 %v83
    %v499 = vunpack.c.h.b16 %v83
    %v500 = vunpack.c.l.b16 %v84
    %v501 = vunpack.c.h.b16 %v84
    %v502 = vunpack.c.l.b16 %v85
    %v503 = vunpack.c.h.b16 %v85
    %v504 = vunpack.c.l.b16 %v86
    %v505 = vunpack.c.h.b16 %v86
    %v506 = vunpack.c.l.b16 %v87
    %v507 = vunpack.c.h.b16 %v87
    %v508 = vunpack.c.l.b16 %v88
    %v509 = vunpack.c.h.b16 %v88
    %v510 = vunpack.c.l.b16 %v89
    %v511 = vunpack.c.h.b16 %v89
    %v512 = vunpack.c.l.b16 %v90
    %v513 = vunpack.c.h.b16 %v90
    %v514 = vunpack.c.l.b16 %v91
    %v515 = vunpack.c.h.b16 %v91
    %v516 = vunpack.c.l.b16 %v92
    %v517 = vunpack.c.h.b16 %v92
    %v518 = vunpack.c.l.b16 %v93
    %v519 = vunpack.c.h.b16 %v93
    %v520 = vunpack.c.l.b16 %v94
    %v521 = vunpack.c.h.b16 %v94
    %v522 = vunpack.c.l.b16 %v95
    %v523 = vunpack.c.h.b16 %v95
    %v524 = vunpack.c.l.b16 %v96
    %v525 = vunpack.c.h.b16 %v96
    %v526 = vunpack.c.l.b16 %v97
    %v527 = vunpack.c.h.b16 %v97
    %v528 = vunpack.c.l.b16 %v98
    %v529 = vunpack.c.h.b16 %v98
    %v530 = vunpack.c.l.b16 %v99
    %v531 = vunpack.c.h.b16 %v99
    %v532 = vunpack.c.l.b16 %v100
    %v533 = vunpack.c.h.b16 %v100
    %v534 = vunpack.c.l.b16 %v101
    %v535 = vunpack.c.h.b16 %v101
    %v536 = vunpack.c.l.b16 %v102
    %v537 = vunpack.c.h.b16 %v102
    %v538 = vunpack.c.l.b16 %v103
    %v539 = vunpack.c.h.b16 %v103
    %v540 = vunpack.c.l.b16 %v104
    %v541 = vunpack.c.h.b16 %v104
    %v542 = vunpack.c.l.b16 %v105
    %v543 = vunpack.c.h.b16 %v105
    %v544 = vunpack.c.l.b16 %v106
    %v545 = vunpack.c.h.b16 %v106
    %v546 = vunpack.c.l.b16 %v107
    %v547 = vunpack.c.h.b16 %v107
    %v548 = vunpack.c.l.b16 %v108
    %v549 = vunpack.c.h.b16 %v108
    %v550 = vunpack.c.l.b16 %v109
    %v551 = vunpack.c.h.b16 %v109
    %v552 = vunpack.c.l.b16 %v110
    %v553 = vunpack.c.h.b16 %v110
    %v554 = vunpack.c.l.b16 %v111
    %v555 = vunpack.c.h.b16 %v111
    %v556 = vunpack.c.l.b16 %v112
    %v557 = vunpack.c.h.b16 %v112
    %v558 = vunpack.c.l.b16 %v113
    %v559 = vunpack.c.h.b16 %v113
    %v560 = vunpack.c.l.b16 %v114
    %v561 = vunpack.c.h.b16 %v114
    %v562 = vunpack.c.l.b16 %v115
    %v563 = vunpack.c.h.b16 %v115
    %v564 = vunpack.c.l.b16 %v116
    %v565 = vunpack.c.h.b16 %v116
    %v566 = vunpack.c.l.b16 %v117
    %v567 = vunpack.c.h.b16 %v117
    %v568 = vunpack.c.l.b16 %v118
    %v569 = vunpack.c.h.b16 %v118
    %v570 = vunpack.c.l.b16 %v119
    %v571 = vunpack.c.h.b16 %v119
    %v572 = vunpack.c.l.b16 %v120
    %v573 = vunpack.c.h.b16 %v120
    %v574 = vunpack.c.l.b16 %v121
    %v575 = vunpack.c.h.b16 %v121
    %v576 = vunpack.c.l.b16 %v122
    %v577 = vunpack.c.h.b16 %v122
    %v578 = vunpack.c.l.b16 %v123
    %v579 = vunpack.c.h.b16 %v123
    %v580 = vunpack.c.l.b16 %v124
    %v581 = vunpack.c.h.b16 %v124
    %v582 = vunpack.c.l.b16 %v125
    %v583 = vunpack.c.h.b16 %v125
    %v584 = vunpack.c.l.b16 %v126
    %v585 = vunpack.c.h.b16 %v126
    %v586 = vunpack.c.l.b16 %v127
    %v587 = vunpack.c.h.b16 %v127
    %v588 = vunpack.c.l.b16 %v128
    %v589 = vunpack.c.h.b16 %v128
    %v590 = vunpack.c.l.b16 %v129
    %v591 = vunpack.c.h.b16 %v129
    %v592 = vunpack.c.l.b16 %v130
    %v593 = vunpack.c.h.b16 %v130
    %v594 = vunpack.c.l.b16 %v131
    %v595 = vunpack.c.h.b16 %v131
    %v596 = vunpack.c.l.b16 %v132
    %v597 = vunpack.c.h.b16 %v132
    %v598 = vunpack.c.l.b16 %v133
    %v599 = vunpack.c.h.b16 %v133
    %v600 = vunpack.c.l.b16 %v134
    %v601 = vunpack.c.h.b16 %v134
    %v602 = vunpack.c.l.b16 %v135
    %v603 = vunpack.c.h.b16 %v135
    %v604 = vunpack.c.l.b16 %v136
    %v605 = vunpack.c.h.b16 %v136
    %v606 = vunpack.c.l.b16 %v137
    %v607 = vunpack.c.h.b16 %v137
    %v608 = vunpack.c.l.b16 %v138
    %v609 = vunpack.c.h.b16 %v138
    %v610 = vunpack.c.l.b16 %v139
    %v611 = vunpack.c.h.b16 %v139
    %v612 = vunpack.c.l.b16 %v140
    %v613 = vunpack.c.h.b16 %v140
    %v614 = vunpack.c.l.b16 %v141
    %v615 = vunpack.c.h.b16 %v141
    %v616 = vunpack.c.l.b16 %v142
    %v617 = vunpack.c.h.b16 %v142
    %v618 = vunpack.c.l.b16 %v143
    %v619 = vunpack.c.h.b16 %v143
    %v620 = vunpack.c.l.b16 %v144
    %v621 = vunpack.c.h.b16 %v144
    %v622 = vunpack.c.l.b16 %v145
    %v623 = vunpack.c.h.b16 %v145
    %v624 = vunpack.c.l.b16 %v146
    %v625 = vunpack.c.h.b16 %v146
    %v626 = vunpack.c.l.b16 %v147
    %v627 = vunpack.c.h.b16 %v147
    %v628 = vunpack.c.l.b16 %v148
    %v629 = vunpack.c.h.b16 %v148
    %v630 = vunpack.c.l.b16 %v149
    %v631 = vunpack.c.h.b16 %v149
    %v632 = vunpack.c.l.b16 %v150
    %v633 = vunpack.c.h.b16 %v150
    %v634 = vunpack.c.l.b16 %v151
    %v635 = vunpack.c.h.b16 %v151
    %v636 = vunpack.c.l.b16 %v152
    %v637 = vunpack.c.h.b16 %v152
    %v638 = vunpack.c.l.b16 %v153
    %v639 = vunpack.c.h.b16 %v153
    %v640 = vunpack.c.l.b16 %v154
    %v641 = vunpack.c.h.b16 %v154
    %v642 = vunpack.c.l.b16 %v155
    %v643 = vunpack.c.h.b16 %v155
    %v644 = vunpack.c.l.b16 %v156
    %v645 = vunpack.c.h.b16 %v156
    %v646 = vunpack.c.l.b16 %v157
    %v647 = vunpack.c.h.b16 %v157
    %v648 = vunpack.c.l.b16 %v158
    %v649 = vunpack.c.h.b16 %v158
    %v650 = vunpack.c.l.b16 %v159
    %v651 = vunpack.c.h.b16 %v159
    %v652 = vunpack.c.l.b16 %v160
    %v653 = vunpack.c.h.b16 %v160
    %v654 = vunpack.c.l.b16 %v161
    %v655 = vunpack.c.h.b16 %v161
    %v656 = vunpack.c.l.b16 %v162
    %v657 = vunpack.c.h.b16 %v162
    %v658 = vunpack.c.l.b16 %v163
    %v659 = vunpack.c.h.b16 %v163
    %v660 = vunpack.c.l.b16 %v164
    %v661 = vunpack.c.h.b16 %v164
    %v662 = vunpack.c.l.b16 %v165
    %v663 = vunpack.c.h.b16 %v165
    %v664 = vunpack.c.l.b16 %v166
    %v665 = vunpack.c.h.b16 %v166
    %v666 = vunpack.c.l.b16 %v167
    %v667 = vunpack.c.h.b16 %v167
    %v668 = vunpack.c.l.b16 %v168
    %v669 = vunpack.c.h.b16 %v168
    %v670 = vunpack.c.l.b16 %v169
    %v671 = vunpack.c.h.b16 %v169
    %v672 = vunpack.c.l.b16 %v170
    %v673 = vunpack.c.h.b16 %v170
    %v674 = vunpack.c.l.b16 %v171
    %v675 = vunpack.c.h.b16 %v171
    %v676 = vunpack.c.l.b16 %v172
    %v677 = vunpack.c.h.b16 %v172
    %v678 = vunpack.c.l.b16 %v173
    %v679 = vunpack.c.h.b16 %v173
    %v680 = vunpack.c.l.b16 %v174
    %v681 = vunpack.c.h.b16 %v174
    %v682 = vunpack.c.l.b16 %v175
    %v683 = vunpack.c.h.b16 %v175
    %v684 = vunpack.c.l.b16 %v176
    %v685 = vunpack.c.h.b16 %v176
    %v686 = vunpack.c.l.b16 %v177
    %v687 = vunpack.c.h.b16 %v177
    %v688 = vunpack.c.l.b16 %v178
    %v689 = vunpack.c.h.b16 %v178
    %v690 = vunpack.c.l.b16 %v179
    %v691 = vunpack.c.h.b16 %v179
    %v692 = vunpack.c.l.b16 %v180
    %v693 = vunpack.c.h.b16 %v180
    %v694 = vunpack.c.l.b16 %v181
    %v695 = vunpack.c.h.b16 %v181
    %v696 = vunpack.c.l.b16 %v182
    %v697 = vunpack.c.h.b16 %v182
    %v698 = vunpack.c.l.b16 %v183
    %v699 = vunpack.c.h.b16 %v183
    %v700 = vunpack.c.l.b16 %v184
    %v701 = vunpack.c.h.b16 %v184
    %v702 = vunpack.c.l.b16 %v185
    %v703 = vunpack.c.h.b16 %v185
    %v704 = vunpack.c.l.b16 %v186
    %v705 = vunpack.c.h.b16 %v186
    %v706 = vunpack.c.l.b16 %v187
    %v707 = vunpack.c.h.b16 %v187
    %v708 = vunpack.c.l.b16 %v188
    %v709 = vunpack.c.h.b16 %v188
    %v710 = vunpack.c.l.b16 %v189
    %v711 = vunpack.c.h.b16 %v189
    %v712 = vunpack.c.l.b16 %v190
    %v713 = vunpack.c.h.b16 %v190
    %v714 = vunpack.c.l.b16 %v191
    %v715 = vunpack.c.h.b16 %v191
    %v716 = vunpack.c.l.b16 %v192
    %v717 = vunpack.c.h.b16 %v192
    %v718 = vunpack.c.l.b16 %v193
    %v719 = vunpack.c.h.b16 %v193
    %v720 = vunpack.c.l.b16 %v194
    %v721 = vunpack.c.h.b16 %v194
    %v722 = vunpack.c.l.b16 %v195
    %v723 = vunpack.c.h.b16 %v195
    %v724 = vunpack.c.l.b16 %v196
    %v725 = vunpack.c.h.b16 %v196
    %v726 = vunpack.c.l.b16 %v197
    %v727 = vunpack.c.h.b16 %v197
    %v728 = vunpack.c.l.b16 %v198
    %v729 = vunpack.c.h.b16 %v198
    %v730 = vunpack.c.l.b16 %v199
    %v731 = vunpack.c.h.b16 %v199
    %v732 = vunpack.c.l.b16 %v200
    %v733 = vunpack.c.h.b16 %v200
    %v734 = vunpack.c.l.b16 %v201
    %v735 = vunpack.c.h.b16 %v201
    %v736 = vunpack.c.l.b16 %v202
    %v737 = vunpack.c.h.b16 %v202
    %v738 = vunpack.c.l.b16 %v203
    %v739 = vunpack.c.h.b16 %v203
    %v740 = vunpack.c.l.b16 %v204
    %v741 = vunpack.c.h.b16 %v204
    %v742 = vunpack.c.l.b16 %v205
    %v743 = vunpack.c.h.b16 %v205
    %v744 = vunpack.c.l.b16 %v206
    %v745 = vunpack.c.h.b16 %v206
    %v746 = vunpack.c.l.b16 %v207
    %v747 = vunpack.c.h.b16 %v207
    %v748 = vunpack.c.l.b16 %v208
    %v749 = vunpack.c.h.b16 %v208
    %v750 = vunpack.c.l.b16 %v209
    %v751 = vunpack.c.h.b16 %v209
    %v752 = vunpack.c.l.b16 %v210
    %v753 = vunpack.c.h.b16 %v210
    %v754 = vunpack.c.l.b16 %v211
    %v755 = vunpack.c.h.b16 %v211
    %v756 = vunpack.c.l.b16 %v212
    %v757 = vunpack.c.h.b16 %v212
    %v758 = vunpack.c.l.b16 %v213
    %v759 = vunpack.c.h.b16 %v213
    %v760 = vunpack.c.l.b16 %v214
    %v761 = vunpack.c.h.b16 %v214
    %v762 = vunpack.c.l.b16 %v215
    %v763 = vunpack.c.h.b16 %v215
    %v764 = vunpack.c.l.b16 %v216
    %v765 = vunpack.c.h.b16 %v216
    %v766 = vunpack.c.l.b16 %v217
    %v767 = vunpack.c.h.b16 %v217
    %v768 = vunpack.c.l.b16 %v218
    %v769 = vunpack.c.h.b16 %v218
    %v770 = vunpack.c.l.b16 %v219
    %v771 = vunpack.c.h.b16 %v219
    %v772 = vunpack.c.l.b16 %v220
    %v773 = vunpack.c.h.b16 %v220
    %v774 = vunpack.c.l.b16 %v221
    %v775 = vunpack.c.h.b16 %v221
    %v776 = vunpack.c.l.b16 %v222
    %v777 = vunpack.c.h.b16 %v222
    %v778 = vunpack.c.l.b16 %v223
    %v779 = vunpack.c.h.b16 %v223
    %v780 = vunpack.c.l.b16 %v224
    %v781 = vunpack.c.h.b16 %v224
    %v782 = vunpack.c.l.b16 %v225
    %v783 = vunpack.c.h.b16 %v225
    %v784 = vunpack.c.l.b16 %v226
    %v785 = vunpack.c.h.b16 %v226
    %v786 = vunpack.c.l.b16 %v227
    %v787 = vunpack.c.h.b16 %v227
    %v788 = vunpack.c.l.b16 %v228
    %v789 = vunpack.c.h.b16 %v228
    %v790 = vunpack.c.l.b16 %v229
    %v791 = vunpack.c.h.b16 %v229
    %v792 = vunpack.c.l.b16 %v230
    %v793 = vunpack.c.h.b16 %v230
    %v794 = vunpack.c.l.b16 %v231
    %v795 = vunpack.c.h.b16 %v231
    %v796 = vunpack.c.l.b16 %v232
    %v797 = vunpack.c.h.b16 %v232
    %v798 = vunpack.c.l.b16 %v233
    %v799 = vunpack.c.h.b16 %v233
    %v800 = vunpack.c.l.b16 %v234
    %v801 = vunpack.c.h.b16 %v234
    %v802 = vunpack.c.l.b16 %v235
    %v803 = vunpack.c.h.b16 %v235
    %v804 = vunpack.c.l.b16 %v236
    %v805 = vunpack.c.h.b16 %v236
    %v806 = vunpack.c.l.b16 %v237
    %v807 = vunpack.c.h.b16 %v237
    %v808 = vunpack.c.l.b16 %v238
    %v809 = vunpack.c.h.b16 %v238
    %v810 = vunpack.c.l.b16 %v239
    %v811 = vunpack.c.h.b16 %v239
    %v812 = vunpack.c.l.b16 %v240
    %v813 = vunpack.c.h.b16 %v240
    %v814 = vunpack.c.l.b16 %v241
    %v815 = vunpack.c.h.b16 %v241
    %v816 = vunpack.c.l.b16 %v242
    %v817 = vunpack.c.h.b16 %v242
    %v818 = vunpack.c.l.b16 %v243
    %v819 = vunpack.c.h.b16 %v243
    %v820 = vunpack.c.l.b16 %v244
    %v821 = vunpack.c.h.b16 %v244
    %v822 = vunpack.c.l.b16 %v245
    %v823 = vunpack.c.h.b16 %v245
    %v824 = vunpack.c.l.b16 %v246
    %v825 = vunpack.c.h.b16 %v246
    %v826 = vunpack.c.l.b16 %v247
    %v827 = vunpack.c.h.b16 %v247
    %v828 = vunpack.c.l.b16 %v248
    %v829 = vunpack.c.h.b16 %v248
    %v830 = vunpack.c.l.b16 %v249
    %v831 = vunpack.c.h.b16 %v249
    %v832 = vunpack.c.l.b16 %v250
    %v833 = vunpack.c.h.b16 %v250
    %v834 = vunpack.c.l.b16 %v251
    %v835 = vunpack.c.h.b16 %v251
    %v836 = vunpack.c.l.b16 %v252
    %v837 = vunpack.c.h.b16 %v252
    %v838 = vunpack.c.l.b16 %v253
    %v839 = vunpack.c.h.b16 %v253
    %v840 = vunpack.c.l.b16 %v254
    %v841 = vunpack.c.h.b16 %v254
    %v842 = vunpack.c.l.b16 %v255
    %v843 = vunpack.c.h.b16 %v255
    %v844 = vunpack.c.l.b16 %v256
    %v845 = vunpack.c.h.b16 %v256
    %v846 = vunpack.c.l.b16 %v257
    %v847 = vunpack.c.h.b16 %v257
    %v848 = vunpack.c.l.b16 %v258
    %v849 = vunpack.c.h.b16 %v258
    %v850 = vunpack.c.l.b16 %v259
    %v851 = vunpack.c.h.b16 %v259
    %v852 = vunpack.c.l.b16 %v260
    %v853 = vunpack.c.h.b16 %v260
    %v854 = vunpack.c.l.b16 %v261
    %v855 = vunpack.c.h.b16 %v261
    %v856 = vunpack.c.l.b16 %v262
    %v857 = vunpack.c.h.b16 %v262
    %v858 = vunpack.c.l.b16 %v263
    %v859 = vunpack.c.h.b16 %v263
    %v860 = vunpack.c.l.b16 %v264
    %v861 = vunpack.c.h.b16 %v264
    %v862 = vpack.c.b16 %v482, %v478
    %v863 = vpack.c.b16 %v483, %v479
    %v864 = vpack.c.b16 %v484, %v480
    %v865 = vpack.c.b16 %v485, %v481
    %v866 = vpack.c.b16 %v490, %v486
    %v867 = vpack.c.b16 %v491, %v487
    %v868 = vpack.c.b16 %v492, %v488
    %v869 = vpack.c.b16 %v493, %v489
    %v870 = vpack.c.b16 %v498, %v494
    %v871 = vpack.c.b16 %v499, %v495
    %v872 = vpack.c.b16 %v500, %v496
    %v873 = vpack.c.b16 %v501, %v497
    %v874 = vpack.c.b16 %v506, %v502
    %v875 = vpack.c.b16 %v507, %v503
    %v876 = vpack.c.b16 %v508, %v504
    %v877 = vpack.c.b16 %v509, %v505
    %v878 = vpack.c.b16 %v514, %v510
    %v879 = vpack.c.b16 %v515, %v511
    %v880 = vpack.c.b16 %v516, %v512
    %v881 = vpack.c.b16 %v517, %v513
    %v882 = vpack.c.b16 %v522, %v518
    %v883 = vpack.c.b16 %v523, %v519
    %v884 = vpack.c.b16 %v524, %v520
    %v885 = vpack.c.b16 %v525, %v521
    %v886 = vpack.c.b16 %v530, %v526
    %v887 = vpack.c.b16 %v531, %v527
    %v888 = vpack.c.b16 %v532, %v528
    %v889 = vpack.c.b16 %v533, %v529
    %v890 = vpack.c.b16 %v538, %v534
    %v891 = vpack.c.b16 %v539, %v535
    %v892 = vpack.c.b16 %v540, %v536
    %v893 = vpack.c.b16 %v541, %v537
    %v894 = vpack.c.b16 %v546, %v542
    %v895 = vpack.c.b16 %v547, %v543
    %v896 = vpack.c.b16 %v548, %v544
    %v897 = vpack.c.b16 %v549, %v545
    %v898 = vpack.c.b16 %v554, %v550
    %v899 = vpack.c.b16 %v555, %v551
    %v900 = vpack.c.b16 %v556, %v552
    %v901 = vpack.c.b16 %v557, %v553
    %v902 = vpack.c.b16 %v562, %v558
    %v903 = vpack.c.b16 %v563, %v559
    %v904 = vpack.c.b16 %v564, %v560
    %v905 = vpack.c.b16 %v565, %v561
    %v906 = vpack.c.b16 %v570, %v566
    %v907 = vpack.c.b16 %v571, %v567
    %v908 = vpack.c.b16 %v572, %v568
    %v909 = vpack.c.b16 %v573, %v569
    %v910 = vpack.c.b16 %v578, %v574
    %v911 = vpack.c.b16 %v579, %v575
    %v912 = vpack.c.b16 %v580, %v576
    %v913 = vpack.c.b16 %v581, %v577
    %v914 = vpack.c.b16 %v586, %v582
    %v915 = vpack.c.b16 %v587, %v583
    %v916 = vpack.c.b16 %v588, %v584
    %v917 = vpack.c.b16 %v589, %v585
    %v918 = vpack.c.b16 %v594, %v590
    %v919 = vpack.c.b16 %v595, %v591
    %v920 = vpack.c.b16 %v596, %v592
    %v921 = vpack.c.b16 %v597, %v593
    %v922 = vpack.c.b16 %v602, %v598
    %v923 = vpack.c.b16 %v603, %v599
    %v924 = vpack.c.b16 %v604, %v600
    %v925 = vpack.c.b16 %v605, %v601
    %v926 = vpack.c.b16 %v610, %v606
    %v927 = vpack.c.b16 %v611, %v607
    %v928 = vpack.c.b16 %v612, %v608
    %v929 = vpack.c.b16 %v613, %v609
    %v930 = vpack.c.b16 %v618, %v614
    %v931 = vpack.c.b16 %v619, %v615
    %v932 = vpack.c.b16 %v620, %v616
    %v933 = vpack.c.b16 %v621, %v617
    %v934 = vpack.c.b16 %v626, %v622
    %v935 = vpack.c.b16 %v627, %v623
    %v936 = vpack.c.b16 %v628, %v624
    %v937 = vpack.c.b16 %v629, %v625
    %v938 = vpack.c.b16 %v634, %v630
    %v939 = vpack.c.b16 %v635, %v631
    %v940 = vpack.c.b16 %v636, %v632
    %v941 = vpack.c.b16 %v637, %v633
    %v942 = vpack.c.b16 %v642, %v638
    %v943 = vpack.c.b16 %v643, %v639
    %v944 = vpack.c.b16 %v644, %v640
    %v945 = vpack.c.b16 %v645, %v641
    %v946 = vpack.c.b16 %v650, %v646
    %v947 = vpack.c.b16 %v651, %v647
    %v948 = vpack.c.b16 %v652, %v648
    %v949 = vpack.c.b16 %v653, %v649
    %v950 = vpack.c.b16 %v658, %v654
    %v951 = vpack.c.b16 %v659, %v655
    %v952 = vpack.c.b16 %v660, %v656
    %v953 = vpack.c.b16 %v661, %v657
    %v954 = vpack.c.b16 %v666, %v662
    %v955 = vpack.c.b16 %v667, %v663
    %v956 = vpack.c.b16 %v668, %v664
    %v957 = vpack.c.b16 %v669, %v665
    %v958 = vpack.c.b16 %v674, %v670
    %v959 = vpack.c.b16 %v675, %v671
    %v960 = vpack.c.b16 %v676, %v672
    %v961 = vpack.c.b16 %v677, %v673
    %v962 = vpack.c.b16 %v682, %v678
    %v963 = vpack.c.b16 %v683, %v679
    %v964 = vpack.c.b16 %v684, %v680
    %v965 = vpack.c.b16 %v685, %v681
    %v966 = vpack.c.b16 %v690, %v686
    %v967 = vpack.c.b16 %v691, %v687
    %v968 = vpack.c.b16 %v692, %v688
    %v969 = vpack.c.b16 %v693, %v689
    %v970 = vpack.c.b16 %v698, %v694
    %v971 = vpack.c.b16 %v699, %v695
    %v972 = vpack.c.b16 %v700, %v696
    %v973 = vpack.c.b16 %v701, %v697
    %v974 = vpack.c.b16 %v706, %v702
    %v975 = vpack.c.b16 %v707, %v703
    %v976 = vpack.c.b16 %v708, %v704
    %v977 = vpack.c.b16 %v709, %v705
    %v978 = vpack.c.b16 %v714, %v710
    %v979 = vpack.c.b16 %v715, %v711
    %v980 = vpack.c.b16 %v716, %v712
    %v981 = vpack.c.b16 %v717, %v713
    %v982 = vpack.c.b16 %v722, %v718
    %v983 = vpack.c.b16 %v723, %v719
    %v984 = vpack.c.b16 %v724, %v720
    %v985 = vpack.c.b16 %v725, %v721
    %v986 = vpack.c.b16 %v730, %v726
    %v987 = vpack.c.b16 %v731, %v727
    %v988 = vpack.c.b16 %v732, %v728
    %v989 = vpack.c.b16 %v733, %v729
    %v990 = vpack.c.b16 %v738, %v734
    %v991 = vpack.c.b16 %v739, %v735
    %v992 = vpack.c.b16 %v740, %v736
    %v993 = vpack.c.b16 %v741, %v737
    %v994 = vpack.c.b16 %v746, %v742
    %v995 = vpack.c.b16 %v747, %v743
    %v996 = vpack.c.b16 %v748, %v744
    %v997 = vpack.c.b16 %v749, %v745
    %v998 = vpack.c.b16 %v754, %v750
    %v999 = vpack.c.b16 %v755, %v751
    %v1000 = vpack.c.b16 %v756, %v752
    %v1001 = vpack.c.b16 %v757, %v753
    %v1002 = vpack.c.b16 %v762, %v758
    %v1003 = vpack.c.b16 %v763, %v759
    %v1004 = vpack.c.b16 %v764, %v760
    %v1005 = vpack.c.b16 %v765, %v761
    %v1006 = vpack.c.b16 %v770, %v766
    %v1007 = vpack.c.b16 %v771, %v767
    %v1008 = vpack.c.b16 %v772, %v768
    %v1009 = vpack.c.b16 %v773, %v769
    %v1010 = vpack.c.b16 %v778, %v774
    %v1011 = vpack.c.b16 %v779, %v775
    %v1012 = vpack.c.b16 %v780, %v776
    %v1013 = vpack.c.b16 %v781, %v777
    %v1014 = vpack.c.b16 %v786, %v782
    %v1015 = vpack.c.b16 %v787, %v783
    %v1016 = vpack.c.b16 %v788, %v784
    %v1017 = vpack.c.b16 %v789, %v785
    %v1018 = vpack.c.b16 %v794, %v790
    %v1019 = vpack.c.b16 %v795, %v791
    %v1020 = vpack.c.b16 %v796, %v792
    %v1021 = vpack.c.b16 %v797, %v793
    %v1022 = vpack.c.b16 %v802, %v798
    %v1023 = vpack.c.b16 %v803, %v799
    %v1024 = vpack.c.b16 %v804, %v800
    %v1025 = vpack.c.b16 %v805, %v801
    %v1026 = vpack.c.b16 %v810, %v806
    %v1027 = vpack.c.b16 %v811, %v807
    %v1028 = vpack.c.b16 %v812, %v808
    %v1029 = vpack.c.b16 %v813, %v809
    %v1030 = vpack.c.b16 %v818, %v814
    %v1031 = vpack.c.b16 %v819, %v815
    %v1032 = vpack.c.b16 %v820, %v816
    %v1033 = vpack.c.b16 %v821, %v817
    %v1034 = vpack.c.b16 %v826, %v822
    %v1035 = vpack.c.b16 %v827, %v823
    %v1036 = vpack.c.b16 %v828, %v824
    %v1037 = vpack.c.b16 %v829, %v825
    %v1038 = vpack.c.b16 %v834, %v830
    %v1039 = vpack.c.b16 %v835, %v831
    %v1040 = vpack.c.b16 %v836, %v832
    %v1041 = vpack.c.b16 %v837, %v833
    %v1042 = vpack.c.b16 %v842, %v838
    %v1043 = vpack.c.b16 %v843, %v839
    %v1044 = vpack.c.b16 %v844, %v840
    %v1045 = vpack.c.b16 %v845, %v841
    %v1046 = vpack.c.b16 %v850, %v846
    %v1047 = vpack.c.b16 %v851, %v847
    %v1048 = vpack.c.b16 %v852, %v848
    %v1049 = vpack.c.b16 %v853, %v849
    %v1050 = vpack.c.b16 %v858, %v854
    %v1051 = vpack.c.b16 %v859, %v855
    %v1052 = vpack.c.b16 %v860, %v856
    %v1053 = vpack.c.b16 %v861, %v857
    %1246 = vmatprep.subr.bf16.mxu0 %v863
    %1247 = vmatpush1.bf16.msra.mxu0 %v862
    %1248 = vmatprep.subr.bf16.mxu0 %v867
    %1249 = vmatpush1.bf16.msra.mxu0 %v866
    %1250 = vmatprep.subr.bf16.mxu0 %v871
    %1251 = vmatpush1.bf16.msra.mxu0 %v870
    %1252 = vmatprep.subr.bf16.mxu0 %v875
    %1253 = vmatpush1.bf16.msra.mxu0 %v874
    %1254 = vmatprep.subr.bf16.mxu0 %v879
    %1255 = vmatpush1.bf16.msra.mxu0 %v878
    %1256 = vmatprep.subr.bf16.mxu0 %v883
    %1257 = vmatpush1.bf16.msra.mxu0 %v882
    %1258 = vmatprep.subr.bf16.mxu0 %v887
    %1259 = vmatpush1.bf16.msra.mxu0 %v886
    %1260 = vmatprep.subr.bf16.mxu0 %v891
    %1261 = vmatpush1.bf16.msra.mxu0 %v890
    %1262 = vmatprep.subr.bf16.mxu0 %v895
    %1263 = vmatpush1.bf16.msra.mxu0 %v894
    %1264 = vmatprep.subr.bf16.mxu0 %v899
    %1265 = vmatpush1.bf16.msra.mxu0 %v898
    %1266 = vmatprep.subr.bf16.mxu0 %v903
    %1267 = vmatpush1.bf16.msra.mxu0 %v902
    %1268 = vmatprep.subr.bf16.mxu0 %v907
    %1269 = vmatpush1.bf16.msra.mxu0 %v906
    %1270 = vmatprep.subr.bf16.mxu0 %v911
    %1271 = vmatpush1.bf16.msra.mxu0 %v910
    %1272 = vmatprep.subr.bf16.mxu0 %v915
    %1273 = vmatpush1.bf16.msra.mxu0 %v914
    %1274 = vmatprep.subr.bf16.mxu0 %v919
    %1275 = vmatpush1.bf16.msra.mxu0 %v918
    %1276 = vmatprep.subr.bf16.mxu0 %v923
    %1277 = vmatpush1.bf16.msra.mxu0 %v922
    %1278 = vmatprep.mubr.bf16.mxu0 %v275
    %1279 = vmatmul.mubr.bf16.gmra.mrb[0].mxu0 %v274
    %v1280 = vpop.f32.mrb[0].mxu0
    %v1281 = vadd.f32 0.0, %v1280
    %v1282 = vpop.f32.mrb[0].mxu0
    %v1283 = vadd.f32 0.0, %v1282
    %v1284 = vpop.f32.mrb[0].mxu0
    %v1285 = vpop.f32.mrb[0].mxu0
    %1286 = vdwg.mxu0
    %1287 = vmatprep.subr.bf16.mxu0 %v927
    %1288 = vmatpush1.bf16.msra.mxu0 %v926
    %1289 = vmatprep.subr.bf16.mxu0 %v931
    %1290 = vmatpush1.bf16.msra.mxu0 %v930
    %1291 = vmatprep.subr.bf16.mxu0 %v935
    %1292 = vmatpush1.bf16.msra.mxu0 %v934
    %1293 = vmatprep.subr.bf16.mxu0 %v939
    %1294 = vmatpush1.bf16.msra.mxu0 %v938
    %1295 = vmatprep.subr.bf16.mxu0 %v943
    %1296 = vmatpush1.bf16.msra.mxu0 %v942
    %1297 = vmatprep.subr.bf16.mxu0 %v947
    %1298 = vmatpush1.bf16.msra.mxu0 %v946
    %1299 = vmatprep.subr.bf16.mxu0 %v951
    %1300 = vmatpush1.bf16.msra.mxu0 %v950
    %1301 = vmatprep.subr.bf16.mxu0 %v955
    %1302 = vmatpush1.bf16.msra.mxu0 %v954
    %1303 = vmatprep.subr.bf16.mxu0 %v959
    %1304 = vmatpush1.bf16.msra.mxu0 %v958
    %1305 = vmatprep.subr.bf16.mxu0 %v963
    %1306 = vmatpush1.bf16.msra.mxu0 %v962
    %1307 = vmatprep.subr.bf16.mxu0 %v967
    %1308 = vmatpush1.bf16.msra.mxu0 %v966
    %1309 = vmatprep.subr.bf16.mxu0 %v971
    %1310 = vmatpush1.bf16.msra.mxu0 %v970
    %1311 = vmatprep.subr.bf16.mxu0 %v975
    %1312 = vmatpush1.bf16.msra.mxu0 %v974
    %1313 = vmatprep.subr.bf16.mxu0 %v979
    %1314 = vmatpush1.bf16.msra.mxu0 %v978
    %1315 = vmatprep.subr.bf16.mxu0 %v983
    %1316 = vmatpush1.bf16.msra.mxu0 %v982
    %1317 = vmatprep.subr.bf16.mxu0 %v987
    %1318 = vmatpush1.bf16.msra.mxu0 %v986
    %1319 = vmatprep.mubr.bf16.mxu0 %v277
    %1320 = vmatmul.mubr.bf16.gmra.mrb[0].mxu0 %v276
    %v1321 = vpop.f32.mrb[0].mxu0
    %v1322 = vadd.f32 %v1281, %v1321
    %v1323 = vpop.f32.mrb[0].mxu0
    %v1324 = vadd.f32 %v1283, %v1323
    %v1325 = vpop.f32.mrb[0].mxu0
    %v1326 = vpop.f32.mrb[0].mxu0
    %1327 = vdwg.mxu0
    %1328 = vmatprep.subr.bf16.mxu0 %v991
    %1329 = vmatpush1.bf16.msra.mxu0 %v990
    %1330 = vmatprep.subr.bf16.mxu0 %v995
    %1331 = vmatpush1.bf16.msra.mxu0 %v994
    %1332 = vmatprep.subr.bf16.mxu0 %v999
    %1333 = vmatpush1.bf16.msra.mxu0 %v998
    %1334 = vmatprep.subr.bf16.mxu0 %v1003
    %1335 = vmatpush1.bf16.msra.mxu0 %v1002
    %1336 = vmatprep.subr.bf16.mxu0 %v1007
    %1337 = vmatpush1.bf16.msra.mxu0 %v1006
    %1338 = vmatprep.subr.bf16.mxu0 %v1011
    %1339 = vmatpush1.bf16.msra.mxu0 %v1010
    %1340 = vmatprep.subr.bf16.mxu0 %v1015
    %1341 = vmatpush1.bf16.msra.mxu0 %v1014
    %1342 = vmatprep.subr.bf16.mxu0 %v1019
    %1343 = vmatpush1.bf16.msra.mxu0 %v1018
    %1344 = vmatprep.subr.bf16.mxu0 %v1023
    %1345 = vmatpush1.bf16.msra.mxu0 %v1022
    %1346 = vmatprep.subr.bf16.mxu0 %v1027
    %1347 = vmatpush1.bf16.msra.mxu0 %v1026
    %1348 = vmatprep.subr.bf16.mxu0 %v1031
    %1349 = vmatpush1.bf16.msra.mxu0 %v1030
    %1350 = vmatprep.subr.bf16.mxu0 %v1035
    %1351 = vmatpush1.bf16.msra.mxu0 %v1034
    %1352 = vmatprep.subr.bf16.mxu0 %v1039
    %1353 = vmatpush1.bf16.msra.mxu0 %v1038
    %1354 = vmatprep.subr.bf16.mxu0 %v1043
    %1355 = vmatpush1.bf16.msra.mxu0 %v1042
    %1356 = vmatprep.subr.bf16.mxu0 %v1047
    %1357 = vmatpush1.bf16.msra.mxu0 %v1046
    %1358 = vmatprep.subr.bf16.mxu0 %v1051
    %1359 = vmatpush1.bf16.msra.mxu0 %v1050
    %1360 = vmatprep.mubr.bf16.mxu0 %v279
    %1361 = vmatmul.mubr.bf16.gmra.mrb[0].mxu0 %v278
    %v1362 = vpop.f32.mrb[0].mxu0
    %v1363 = vadd.f32 %v1322, %v1362
    %v1364 = vpop.f32.mrb[0].mxu0
    %v1365 = vadd.f32 %v1324, %v1364
    %v1366 = vpop.f32.mrb[0].mxu0
    %v1367 = vpop.f32.mrb[0].mxu0
    %1368 = vdwg.mxu0
    %1369 = vmatprep.subr.bf16.mxu0 %v865
    %1370 = vmatpush1.bf16.msra.mxu0 %v864
    %1371 = vmatprep.subr.bf16.mxu0 %v869
    %1372 = vmatpush1.bf16.msra.mxu0 %v868
    %1373 = vmatprep.subr.bf16.mxu0 %v873
    %1374 = vmatpush1.bf16.msra.mxu0 %v872
    %1375 = vmatprep.subr.bf16.mxu0 %v877
    %1376 = vmatpush1.bf16.msra.mxu0 %v876
    %1377 = vmatprep.subr.bf16.mxu0 %v881
    %1378 = vmatpush1.bf16.msra.mxu0 %v880
    %1379 = vmatprep.subr.bf16.mxu0 %v885
    %1380 = vmatpush1.bf16.msra.mxu0 %v884
    %1381 = vmatprep.subr.bf16.mxu0 %v889
    %1382 = vmatpush1.bf16.msra.mxu0 %v888
    %1383 = vmatprep.subr.bf16.mxu0 %v893
    %1384 = vmatpush1.bf16.msra.mxu0 %v892
    %1385 = vmatprep.subr.bf16.mxu0 %v897
    %1386 = vmatpush1.bf16.msra.mxu0 %v896
    %1387 = vmatprep.subr.bf16.mxu0 %v901
    %1388 = vmatpush1.bf16.msra.mxu0 %v900
    %1389 = vmatprep.subr.bf16.mxu0 %v905
    %1390 = vmatpush1.bf16.msra.mxu0 %v904
    %1391 = vmatprep.subr.bf16.mxu0 %v909
    %1392 = vmatpush1.bf16.msra.mxu0 %v908
    %1393 = vmatprep.subr.bf16.mxu0 %v913
    %1394 = vmatpush1.bf16.msra.mxu0 %v912
    %1395 = vmatprep.subr.bf16.mxu0 %v917
    %1396 = vmatpush1.bf16.msra.mxu0 %v916
    %1397 = vmatprep.subr.bf16.mxu0 %v921
    %1398 = vmatpush1.bf16.msra.mxu0 %v920
    %1399 = vmatprep.subr.bf16.mxu0 %v925
    %1400 = vmatpush1.bf16.msra.mxu0 %v924
    %1401 = vmatprep.mubr.bf16.mxu0 %v275
    %1402 = vmatmul.mubr.bf16.gmra.mrb[0].mxu0 %v274
    %v1403 = vpop.f32.mrb[0].mxu0
    %v1404 = vadd.f32 0.0, %v1403
    %v1405 = vpop.f32.mrb[0].mxu0
    %v1406 = vadd.f32 0.0, %v1405
    %v1407 = vpop.f32.mrb[0].mxu0
    %v1408 = vpop.f32.mrb[0].mxu0
    %1409 = vdwg.mxu0
    %1410 = vmatprep.subr.bf16.mxu0 %v929
    %1411 = vmatpush1.bf16.msra.mxu0 %v928
    %1412 = vmatprep.subr.bf16.mxu0 %v933
    %1413 = vmatpush1.bf16.msra.mxu0 %v932
    %1414 = vmatprep.subr.bf16.mxu0 %v937
    %1415 = vmatpush1.bf16.msra.mxu0 %v936
    %1416 = vmatprep.subr.bf16.mxu0 %v941
    %1417 = vmatpush1.bf16.msra.mxu0 %v940
    %1418 = vmatprep.subr.bf16.mxu0 %v945
    %1419 = vmatpush1.bf16.msra.mxu0 %v944
    %1420 = vmatprep.subr.bf16.mxu0 %v949
    %1421 = vmatpush1.bf16.msra.mxu0 %v948
    %1422 = vmatprep.subr.bf16.mxu0 %v953
    %1423 = vmatpush1.bf16.msra.mxu0 %v952
    %1424 = vmatprep.subr.bf16.mxu0 %v957
    %1425 = vmatpush1.bf16.msra.mxu0 %v956
    %1426 = vmatprep.subr.bf16.mxu0 %v961
    %1427 = vmatpush1.bf16.msra.mxu0 %v960
    %1428 = vmatprep.subr.bf16.mxu0 %v965
    %1429 = vmatpush1.bf16.msra.mxu0 %v964
    %1430 = vmatprep.subr.bf16.mxu0 %v969
    %1431 = vmatpush1.bf16.msra.mxu0 %v968
    %1432 = vmatprep.subr.bf16.mxu0 %v973
    %1433 = vmatpush1.bf16.msra.mxu0 %v972
    %1434 = vmatprep.subr.bf16.mxu0 %v977
    %1435 = vmatpush1.bf16.msra.mxu0 %v976
    %1436 = vmatprep.subr.bf16.mxu0 %v981
    %1437 = vmatpush1.bf16.msra.mxu0 %v980
    %1438 = vmatprep.subr.bf16.mxu0 %v985
    %1439 = vmatpush1.bf16.msra.mxu0 %v984
    %1440 = vmatprep.subr.bf16.mxu0 %v989
    %1441 = vmatpush1.bf16.msra.mxu0 %v988
    %1442 = vmatprep.mubr.bf16.mxu0 %v277
    %1443 = vmatmul.mubr.bf16.gmra.mrb[0].mxu0 %v276
    %v1444 = vpop.f32.mrb[0].mxu0
    %v1445 = vadd.f32 %v1404, %v1444
    %v1446 = vpop.f32.mrb[0].mxu0
    %v1447 = vadd.f32 %v1406, %v1446
    %v1448 = vpop.f32.mrb[0].mxu0
    %v1449 = vpop.f32.mrb[0].mxu0
    %1450 = vdwg.mxu0
    %1451 = vmatprep.subr.bf16.mxu0 %v993
    %1452 = vmatpush1.bf16.msra.mxu0 %v992
    %1453 = vmatprep.subr.bf16.mxu0 %v997
    %1454 = vmatpush1.bf16.msra.mxu0 %v996
    %1455 = vmatprep.subr.bf16.mxu0 %v1001
    %1456 = vmatpush1.bf16.msra.mxu0 %v1000
    %1457 = vmatprep.subr.bf16.mxu0 %v1005
    %1458 = vmatpush1.bf16.msra.mxu0 %v1004
    %1459 = vmatprep.subr.bf16.mxu0 %v1009
    %1460 = vmatpush1.bf16.msra.mxu0 %v1008
    %1461 = vmatprep.subr.bf16.mxu0 %v1013
    %1462 = vmatpush1.bf16.msra.mxu0 %v1012
    %1463 = vmatprep.subr.bf16.mxu0 %v1017
    %1464 = vmatpush1.bf16.msra.mxu0 %v1016
    %1465 = vmatprep.subr.bf16.mxu0 %v1021
    %1466 = vmatpush1.bf16.msra.mxu0 %v1020
    %1467 = vmatprep.subr.bf16.mxu0 %v1025
    %1468 = vmatpush1.bf16.msra.mxu0 %v1024
    %1469 = vmatprep.subr.bf16.mxu0 %v1029
    %1470 = vmatpush1.bf16.msra.mxu0 %v1028
    %1471 = vmatprep.subr.bf16.mxu0 %v1033
    %1472 = vmatpush1.bf16.msra.mxu0 %v1032
    %1473 = vmatprep.subr.bf16.mxu0 %v1037
    %1474 = vmatpush1.bf16.msra.mxu0 %v1036
    %1475 = vmatprep.subr.bf16.mxu0 %v1041
    %1476 = vmatpush1.bf16.msra.mxu0 %v1040
    %1477 = vmatprep.subr.bf16.mxu0 %v1045
    %1478 = vmatpush1.bf16.msra.mxu0 %v1044
    %1479 = vmatprep.subr.bf16.mxu0 %v1049
    %1480 = vmatpush1.bf16.msra.mxu0 %v1048
    %1481 = vmatprep.subr.bf16.mxu0 %v1053
    %1482 = vmatpush1.bf16.msra.mxu0 %v1052
    %1483 = vmatprep.mubr.bf16.mxu0 %v279
    %1484 = vmatmul.mubr.bf16.gmra.mrb[0].mxu0 %v278
    %v1485 = vpop.f32.mrb[0].mxu0
    %v1486 = vadd.f32 %v1445, %v1485
    %v1487 = vpop.f32.mrb[0].mxu0
    %v1488 = vadd.f32 %v1447, %v1487
    %v1489 = vpop.f32.mrb[0].mxu0
    %v1490 = vpop.f32.mrb[0].mxu0
    %1491 = vdwg.mxu0
    %v1492 = vadd.f32 %v66, %v1363
    %v1493 = vadd.f32 %v67, %v1365
    %v1494 = vadd.f32 %v68, %v1486
    %v1495 = vadd.f32 %v69, %v1488
    %1496 = vst [vmem:[#allocation2] sm:$0xff] %v1492
    %1497 = vst [vmem:[#allocation2 + $0x8] sm:$0xff] %v1493
    %1498 = vst [vmem:[#allocation2 + $0x10] sm:$0xff] %v1494
    %1499 = vst [vmem:[#allocation2 + $0x18] sm:$0xff] %v1495
    // Predicated region
    $region34: #{tpu_custom_call.1} parent=1 // pred_check
      %p1500 = pneg %p58
    $region35: #{tpu_custom_call.1} parent=1 // pred_check_branch
      %1502 = sbr.rel (%p1500) target = $region37
    $region36: #{tpu_custom_call.1} parent=1 // pred_region
      %v1503 = vld [vmem:[#allocation2] sm:$0xff]
      %v1504 = vld [vmem:[#allocation2 + $0x8] sm:$0xff]
      %v1505 = vld [vmem:[#allocation2 + $0x10] sm:$0xff]
      %v1506 = vld [vmem:[#allocation2 + $0x18] sm:$0xff]
      %v1507 = vpack.c.bf16 %v1503, %v1503
      %v1508 = vpack.c.bf16 %v1504, %v1504
      %v1509 = vpack.c.bf16 %v1505, %v1505
      %v1510 = vpack.c.bf16 %v1506, %v1506
      %v1511 = vld [vmem:[#allocation8] sm:$0xf]
      %v1512 = vld [vmem:[#allocation8 + $0x4] sm:$0xf]
      %v1513 = vld [vmem:[#allocation8 + $0x8] sm:$0xf]
      %v1514 = vld [vmem:[#allocation8 + $0xc] sm:$0xf]
      %v1515 = vld [vmem:[#allocation8 + $0x10] sm:$0xf]
      %v1516 = vld [vmem:[#allocation8 + $0x14] sm:$0xf]
      %v1517 = vld [vmem:[#allocation8 + $0x18] sm:$0xf]
      %v1518 = vld [vmem:[#allocation8 + $0x1c] sm:$0xf]
      %v1519 = vld [vmem:[#allocation8 + $0x20] sm:$0xf]
      %v1520 = vld [vmem:[#allocation8 + $0x24] sm:$0xf]
      %v1521 = vld [vmem:[#allocation8 + $0x28] sm:$0xf]
      %v1522 = vld [vmem:[#allocation8 + $0x2c] sm:$0xf]
      %v1523 = vld [vmem:[#allocation8 + $0x30] sm:$0xf]
      %v1524 = vld [vmem:[#allocation8 + $0x34] sm:$0xf]
      %v1525 = vld [vmem:[#allocation8 + $0x38] sm:$0xf]
      %v1526 = vld [vmem:[#allocation8 + $0x3c] sm:$0xf]
      %v1527 = vld [vmem:[#allocation8 + $0x40] sm:$0xf]
      %v1528 = vld [vmem:[#allocation8 + $0x44] sm:$0xf]
      %v1529 = vld [vmem:[#allocation8 + $0x48] sm:$0xf]
      %v1530 = vld [vmem:[#allocation8 + $0x4c] sm:$0xf]
      %v1531 = vld [vmem:[#allocation8 + $0x50] sm:$0xf]
      %v1532 = vld [vmem:[#allocation8 + $0x54] sm:$0xf]
      %v1533 = vld [vmem:[#allocation8 + $0x58] sm:$0xf]
      %v1534 = vld [vmem:[#allocation8 + $0x5c] sm:$0xf]
      %v1535 = vld [vmem:[#allocation8 + $0x60] sm:$0xf]
      %v1536 = vld [vmem:[#allocation8 + $0x64] sm:$0xf]
      %v1537 = vld [vmem:[#allocation8 + $0x68] sm:$0xf]
      %v1538 = vld [vmem:[#allocation8 + $0x6c] sm:$0xf]
      %v1539 = vld [vmem:[#allocation8 + $0x70] sm:$0xf]
      %v1540 = vld [vmem:[#allocation8 + $0x74] sm:$0xf]
      %v1541 = vld [vmem:[#allocation8 + $0x78] sm:$0xf]
      %v1542 = vld [vmem:[#allocation8 + $0x7c] sm:$0xf]
      %v1543 = vld [vmem:[#allocation8 + $0x80] sm:$0xf]
      %v1544 = vld [vmem:[#allocation8 + $0x84] sm:$0xf]
      %v1545 = vld [vmem:[#allocation8 + $0x88] sm:$0xf]
      %v1546 = vld [vmem:[#allocation8 + $0x8c] sm:$0xf]
      %v1547 = vld [vmem:[#allocation8 + $0x90] sm:$0xf]
      %v1548 = vld [vmem:[#allocation8 + $0x94] sm:$0xf]
      %v1549 = vld [vmem:[#allocation8 + $0x98] sm:$0xf]
      %v1550 = vld [vmem:[#allocation8 + $0x9c] sm:$0xf]
      %v1551 = vld [vmem:[#allocation8 + $0xa0] sm:$0xf]
      %v1552 = vld [vmem:[#allocation8 + $0xa4] sm:$0xf]
      %v1553 = vld [vmem:[#allocation8 + $0xa8] sm:$0xf]
      %v1554 = vld [vmem:[#allocation8 + $0xac] sm:$0xf]
      %v1555 = vld [vmem:[#allocation8 + $0xb0] sm:$0xf]
      %v1556 = vld [vmem:[#allocation8 + $0xb4] sm:$0xf]
      %v1557 = vld [vmem:[#allocation8 + $0xb8] sm:$0xf]
      %v1558 = vld [vmem:[#allocation8 + $0xbc] sm:$0xf]
      %v1559 = vld [vmem:[#allocation8 + $0xc0] sm:$0xf]
      %v1560 = vld [vmem:[#allocation8 + $0xc4] sm:$0xf]
      %v1561 = vld [vmem:[#allocation8 + $0xc8] sm:$0xf]
      %v1562 = vld [vmem:[#allocation8 + $0xcc] sm:$0xf]
      %v1563 = vld [vmem:[#allocation8 + $0xd0] sm:$0xf]
      %v1564 = vld [vmem:[#allocation8 + $0xd4] sm:$0xf]
      %v1565 = vld [vmem:[#allocation8 + $0xd8] sm:$0xf]
      %v1566 = vld [vmem:[#allocation8 + $0xdc] sm:$0xf]
      %v1567 = vld [vmem:[#allocation8 + $0xe0] sm:$0xf]
      %v1568 = vld [vmem:[#allocation8 + $0xe4] sm:$0xf]
      %v1569 = vld [vmem:[#allocation8 + $0xe8] sm:$0xf]
      %v1570 = vld [vmem:[#allocation8 + $0xec] sm:$0xf]
      %v1571 = vld [vmem:[#allocation8 + $0xf0] sm:$0xf]
      %v1572 = vld [vmem:[#allocation8 + $0xf4] sm:$0xf]
      %v1573 = vld [vmem:[#allocation8 + $0xf8] sm:$0xf]
      %v1574 = vld [vmem:[#allocation8 + $0xfc] sm:$0xf]
      %v1575 = vld [vmem:[%s3] sm:$0x1]
      %v1577 = vlaneseq
      %v1578 = vshrl.u32 %v1577, 7
      %v1579 = vsub.s32 0, %v1578
      %v1580 = vrot.slane %v1575, %v1579
      %v1646 = vunpack.c.l.b16 %v1511
      %v1647 = vunpack.c.l.b16 %v1512
      %v1648 = vunpack.c.l.b16 %v1513
      %v1649 = vunpack.c.l.b16 %v1514
      %v1650 = vunpack.c.l.b16 %v1515
      %v1651 = vunpack.c.l.b16 %v1516
      %v1652 = vunpack.c.l.b16 %v1517
      %v1653 = vunpack.c.l.b16 %v1518
      %v1654 = vunpack.c.l.b16 %v1519
      %v1655 = vunpack.c.l.b16 %v1520
      %v1656 = vunpack.c.l.b16 %v1521
      %v1657 = vunpack.c.l.b16 %v1522
      %v1658 = vunpack.c.l.b16 %v1523
      %v1659 = vunpack.c.l.b16 %v1524
      %v1660 = vunpack.c.l.b16 %v1525
      %v1661 = vunpack.c.l.b16 %v1526
      %v1662 = vunpack.c.l.b16 %v1527
      %v1663 = vunpack.c.l.b16 %v1528
      %v1664 = vunpack.c.l.b16 %v1529
      %v1665 = vunpack.c.l.b16 %v1530
      %v1666 = vunpack.c.l.b16 %v1531
      %v1667 = vunpack.c.l.b16 %v1532
      %v1668 = vunpack.c.l.b16 %v1533
      %v1669 = vunpack.c.l.b16 %v1534
      %v1670 = vunpack.c.l.b16 %v1535
      %v1671 = vunpack.c.l.b16 %v1536
      %v1672 = vunpack.c.l.b16 %v1537
      %v1673 = vunpack.c.l.b16 %v1538
      %v1674 = vunpack.c.l.b16 %v1539
      %v1675 = vunpack.c.l.b16 %v1540
      %v1676 = vunpack.c.l.b16 %v1541
      %v1677 = vunpack.c.l.b16 %v1542
      %v1678 = vunpack.c.l.b16 %v1543
      %v1679 = vunpack.c.l.b16 %v1544
      %v1680 = vunpack.c.l.b16 %v1545
      %v1681 = vunpack.c.l.b16 %v1546
      %v1682 = vunpack.c.l.b16 %v1547
      %v1683 = vunpack.c.l.b16 %v1548
      %v1684 = vunpack.c.l.b16 %v1549
      %v1685 = vunpack.c.l.b16 %v1550
      %v1686 = vunpack.c.l.b16 %v1551
      %v1687 = vunpack.c.l.b16 %v1552
      %v1688 = vunpack.c.l.b16 %v1553
      %v1689 = vunpack.c.l.b16 %v1554
      %v1690 = vunpack.c.l.b16 %v1555
      %v1691 = vunpack.c.l.b16 %v1556
      %v1692 = vunpack.c.l.b16 %v1557
      %v1693 = vunpack.c.l.b16 %v1558
      %v1694 = vunpack.c.l.b16 %v1559
      %v1695 = vunpack.c.l.b16 %v1560
      %v1696 = vunpack.c.l.b16 %v1561
      %v1697 = vunpack.c.l.b16 %v1562
      %v1698 = vunpack.c.l.b16 %v1563
      %v1699 = vunpack.c.l.b16 %v1564
      %v1700 = vunpack.c.l.b16 %v1565
      %v1701 = vunpack.c.l.b16 %v1566
      %v1702 = vunpack.c.l.b16 %v1567
      %v1703 = vunpack.c.l.b16 %v1568
      %v1704 = vunpack.c.l.b16 %v1569
      %v1705 = vunpack.c.l.b16 %v1570
      %v1706 = vunpack.c.l.b16 %v1571
      %v1707 = vunpack.c.l.b16 %v1572
      %v1708 = vunpack.c.l.b16 %v1573
      %v1709 = vunpack.c.l.b16 %v1574
      %v1710 = vpack.c.b16 %v1647, %v1646
      %v1711 = vpack.c.b16 %v1649, %v1648
      %v1712 = vpack.c.b16 %v1651, %v1650
      %v1713 = vpack.c.b16 %v1653, %v1652
      %v1714 = vpack.c.b16 %v1655, %v1654
      %v1715 = vpack.c.b16 %v1657, %v1656
      %v1716 = vpack.c.b16 %v1659, %v1658
      %v1717 = vpack.c.b16 %v1661, %v1660
      %v1718 = vpack.c.b16 %v1663, %v1662
      %v1719 = vpack.c.b16 %v1665, %v1664
      %v1720 = vpack.c.b16 %v1667, %v1666
      %v1721 = vpack.c.b16 %v1669, %v1668
      %v1722 = vpack.c.b16 %v1671, %v1670
      %v1723 = vpack.c.b16 %v1673, %v1672
      %v1724 = vpack.c.b16 %v1675, %v1674
      %v1725 = vpack.c.b16 %v1677, %v1676
      %v1726 = vpack.c.b16 %v1679, %v1678
      %v1727 = vpack.c.b16 %v1681, %v1680
      %v1728 = vpack.c.b16 %v1683, %v1682
      %v1729 = vpack.c.b16 %v1685, %v1684
      %v1730 = vpack.c.b16 %v1687, %v1686
      %v1731 = vpack.c.b16 %v1689, %v1688
      %v1732 = vpack.c.b16 %v1691, %v1690
      %v1733 = vpack.c.b16 %v1693, %v1692
      %v1734 = vpack.c.b16 %v1695, %v1694
      %v1735 = vpack.c.b16 %v1697, %v1696
      %v1736 = vpack.c.b16 %v1699, %v1698
      %v1737 = vpack.c.b16 %v1701, %v1700
      %v1738 = vpack.c.b16 %v1703, %v1702
      %v1739 = vpack.c.b16 %v1705, %v1704
      %v1740 = vpack.c.b16 %v1707, %v1706
      %v1741 = vpack.c.b16 %v1709, %v1708
      %1774 = vmatprep.subr.bf16.mxu0 0
      %1775 = vmatpush1.bf16.msra.mxu0 %v1710
      %1776 = vmatprep.subr.bf16.mxu0 0
      %1777 = vmatpush1.bf16.msra.mxu0 %v1711
      %1778 = vmatprep.subr.bf16.mxu0 0
      %1779 = vmatpush1.bf16.msra.mxu0 %v1712
      %1780 = vmatprep.subr.bf16.mxu0 0
      %1781 = vmatpush1.bf16.msra.mxu0 %v1713
      %1782 = vmatprep.subr.bf16.mxu0 0
      %1783 = vmatpush1.bf16.msra.mxu0 %v1714
      %1784 = vmatprep.subr.bf16.mxu0 0
      %1785 = vmatpush1.bf16.msra.mxu0 %v1715
      %1786 = vmatprep.subr.bf16.mxu0 0
      %1787 = vmatpush1.bf16.msra.mxu0 %v1716
      %1788 = vmatprep.subr.bf16.mxu0 0
      %1789 = vmatpush1.bf16.msra.mxu0 %v1717
      %1790 = vmatprep.subr.bf16.mxu0 0
      %1791 = vmatpush1.bf16.msra.mxu0 %v1718
      %1792 = vmatprep.subr.bf16.mxu0 0
      %1793 = vmatpush1.bf16.msra.mxu0 %v1719
      %1794 = vmatprep.subr.bf16.mxu0 0
      %1795 = vmatpush1.bf16.msra.mxu0 %v1720
      %1796 = vmatprep.subr.bf16.mxu0 0
      %1797 = vmatpush1.bf16.msra.mxu0 %v1721
      %1798 = vmatprep.subr.bf16.mxu0 0
      %1799 = vmatpush1.bf16.msra.mxu0 %v1722
      %1800 = vmatprep.subr.bf16.mxu0 0
      %1801 = vmatpush1.bf16.msra.mxu0 %v1723
      %1802 = vmatprep.subr.bf16.mxu0 0
      %1803 = vmatpush1.bf16.msra.mxu0 %v1724
      %1804 = vmatprep.subr.bf16.mxu0 0
      %1805 = vmatpush1.bf16.msra.mxu0 %v1725
      %1806 = vmatprep.mubr.bf16.mxu0 %v1508
      %1807 = vmatmul.mubr.bf16.gmra.mrb[0].mxu0 %v1507
      %v1808 = vpop.f32.mrb[0].mxu0
      %v1809 = vadd.f32 %v1580, %v1808
      %v1810 = vpop.f32.mrb[0].mxu0
      %v1811 = vpop.f32.mrb[0].mxu0
      %v1812 = vpop.f32.mrb[0].mxu0
      %1813 = vdwg.mxu0
      %1814 = vmatprep.subr.bf16.mxu0 0
      %1815 = vmatpush1.bf16.msra.mxu0 %v1726
      %1816 = vmatprep.subr.bf16.mxu0 0
      %1817 = vmatpush1.bf16.msra.mxu0 %v1727
      %1818 = vmatprep.subr.bf16.mxu0 0
      %1819 = vmatpush1.bf16.msra.mxu0 %v1728
      %1820 = vmatprep.subr.bf16.mxu0 0
      %1821 = vmatpush1.bf16.msra.mxu0 %v1729
      %1822 = vmatprep.subr.bf16.mxu0 0
      %1823 = vmatpush1.bf16.msra.mxu0 %v1730
      %1824 = vmatprep.subr.bf16.mxu0 0
      %1825 = vmatpush1.bf16.msra.mxu0 %v1731
      %1826 = vmatprep.subr.bf16.mxu0 0
      %1827 = vmatpush1.bf16.msra.mxu0 %v1732
      %1828 = vmatprep.subr.bf16.mxu0 0
      %1829 = vmatpush1.bf16.msra.mxu0 %v1733
      %1830 = vmatprep.subr.bf16.mxu0 0
      %1831 = vmatpush1.bf16.msra.mxu0 %v1734
      %1832 = vmatprep.subr.bf16.mxu0 0
      %1833 = vmatpush1.bf16.msra.mxu0 %v1735
      %1834 = vmatprep.subr.bf16.mxu0 0
      %1835 = vmatpush1.bf16.msra.mxu0 %v1736
      %1836 = vmatprep.subr.bf16.mxu0 0
      %1837 = vmatpush1.bf16.msra.mxu0 %v1737
      %1838 = vmatprep.subr.bf16.mxu0 0
      %1839 = vmatpush1.bf16.msra.mxu0 %v1738
      %1840 = vmatprep.subr.bf16.mxu0 0
      %1841 = vmatpush1.bf16.msra.mxu0 %v1739
      %1842 = vmatprep.subr.bf16.mxu0 0
      %1843 = vmatpush1.bf16.msra.mxu0 %v1740
      %1844 = vmatprep.subr.bf16.mxu0 0
      %1845 = vmatpush1.bf16.msra.mxu0 %v1741
      %1846 = vmatprep.mubr.bf16.mxu0 %v1510
      %1847 = vmatmul.mubr.bf16.gmra.mrb[0].mxu0 %v1509
      %v1848 = vpop.f32.mrb[0].mxu0
      %v1849 = vadd.f32 %v1809, %v1848
      %v1850 = vpop.f32.mrb[0].mxu0
      %v1851 = vpop.f32.mrb[0].mxu0
      %v1852 = vpop.f32.mrb[0].mxu0
      %1853 = vdwg.mxu0
      %1854 = vst [vmem:[#allocation9] sm:$0xff] %v1849
    $region37: #{tpu_custom_call.1} parent=1 // pred_fallthru
      _
    // Predicated region
    $region38: #{tpu_custom_call.1} parent=1 // pred_check
      _
    $region39: #{tpu_custom_call.1} parent=1 // pred_check_branch
      %1856 = sbr.rel (0) target = $region41
    $region40: #{tpu_custom_call.1} parent=1 // pred_region
      %s1858 = ssub.s32 128, 128
      %1859 = vsyncadd [#allocation5], %s1858
      %s1861 = sshll.u32 [#allocation9], 4
      %s1862 = int_to_ptr.vmem [resolvable:$true] %s1861
      %1864 = dma.vmem_to_hbm [thread:$0]  %s1862, 128, %s4, [#allocation5]
    $region41: #{tpu_custom_call.1} parent=1 // pred_fallthru
      _
    // Predicated region
    $region42: #{tpu_custom_call.1} parent=1 // pred_check
      _
    $region43: #{tpu_custom_call.1} parent=1 // pred_check_branch
      %1866 = sbr.rel (0) target = $region45
    $region44: #{tpu_custom_call.1} parent=1 // pred_region
      %1867 = dma.done [#allocation5], 128
    $region45: #{tpu_custom_call.1} parent=1 // pred_fallthru
      _
    %1868 = vsyncpa [#allocation4], 1
    %1869 = vsyncpa [#allocation7], 1
    %1870 = vsyncpa [#allocation5], 1

</llo_original>
